<compile_context>
chip_gen: v5e
topology: v5e:2x2
jax: 0.10.0
libtpu: 0.0.40
codegen_flags: <defaults>
</compile_context>

<pallas_src>
import jax
import jax.numpy as jnp
from jax.experimental import pallas as pl
from jax.experimental.pallas import tpu as pltpu


def _round_up(x, m):
    return ((x + m - 1) // m) * m


def _vmem_limit_bytes():
    # v7x has only 64 MiB VMEM per TensorCore; derive the scoped limit from the
    # actual capacity with headroom for double-buffering.
    try:
        cap = pltpu.get_tpu_info().vmem_capacity_bytes
    except Exception:
        cap = 64 * 1024 * 1024  # conservative (v7x per-TC)
    return max(32 * 1024 * 1024, min(cap - 16 * 1024 * 1024, 100 * 1024 * 1024))


def _choose_tile_n(out_dim):
    """Pick the output-column tile first, then pad out_dim to whole tiles."""
    if out_dim <= 2048:
        tn = _round_up(out_dim, 128)      # single lane-dense tile
        return tn, tn
    best_tn, best_pad = None, None
    for tn in (2048, 1024):               # large lane-dense streams
        pad = _round_up(out_dim, tn)
        if best_pad is None or pad < best_pad:
            best_tn, best_pad = tn, pad
    return best_tn, best_pad


def _choose_tile_b(batch):
    """Bound batch-padding waste: smallest padded size, ties -> larger tile."""
    best_tb, best_pad = None, None
    for tb in (256, 128, 64, 32, 16):     # 16 = bf16 sublane pack
        pad = _round_up(batch, tb)
        if best_pad is None or pad < best_pad:
            best_tb, best_pad = tb, pad
    return best_tb, best_pad


def _mlp_layers(x_bf16, w1_ref, b1_ref, w2_ref, b2_ref, w3_ref, b3_ref):
    def layer(h_bf16, w_ref, b_ref):
        acc = jnp.dot(h_bf16, w_ref[...], preferred_element_type=jnp.float32)
        acc = acc + b_ref[...]                      # bias in f32
        return jnp.where(acc > 0, acc, 0.2 * acc)   # LeakyReLU(0.2) on VPU

    h1 = layer(x_bf16, w1_ref, b1_ref)
    h2 = layer(h1.astype(jnp.bfloat16), w2_ref, b2_ref)
    h3 = layer(h2.astype(jnp.bfloat16), w3_ref, b3_ref)
    return h3.astype(jnp.bfloat16)


# -----------------------------------------------------------------------------
# Kernel A (split path, step 1): trunk MLP  x(B,128) -> h3 (B,1024) bf16.
# Weights stay VMEM-resident (constant index_map); the batch dim is pipelined.
# -----------------------------------------------------------------------------
def _trunk_kernel(x_ref, w1_ref, b1_ref, w2_ref, b2_ref, w3_ref, b3_ref,
                  h3_ref):
    h3_ref[...] = _mlp_layers(x_ref[...], w1_ref, b1_ref, w2_ref, b2_ref,
                              w3_ref, b3_ref)


# -----------------------------------------------------------------------------
# Kernel B (split path, step 2): h3(B,1024) @ W4(1024,N) + b4 -> tanh, tiled
# over (output columns, batch).  W4 (dominant HBM stream) is the slow-changing
# resident block; h3 / output tiles stream in the inner loop.
# -----------------------------------------------------------------------------
def _head_kernel(h3_ref, w4_ref, b4_ref, o_ref):
    acc = jnp.dot(h3_ref[...], w4_ref[...], preferred_element_type=jnp.float32)
    acc = acc + b4_ref[...]
    o_ref[...] = jnp.tanh(acc).astype(o_ref.dtype)   # bf16 store (tanh range)


# -----------------------------------------------------------------------------
# Kernel C (fused path, small problems): single pallas_call.  h3 is computed
# once at the first column step into a VMEM scratch, then reused for every W4
# column tile.  Removes one launch and the h3 HBM round-trip.
# -----------------------------------------------------------------------------
def _fused_kernel(x_ref, w1_ref, b1_ref, w2_ref, b2_ref, w3_ref, b3_ref,
                  w4_ref, b4_ref, o_ref, h3_scratch):
    @pl.when(pl.program_id(0) == 0)
    def _():
        h3_scratch[...] = _mlp_layers(x_ref[...], w1_ref, b1_ref, w2_ref,
                                      b2_ref, w3_ref, b3_ref)

    acc = jnp.dot(h3_scratch[...], w4_ref[...],
                  preferred_element_type=jnp.float32)
    acc = acc + b4_ref[...]
    o_ref[...] = jnp.tanh(acc).astype(o_ref.dtype)


def generator_forward(z, labels, params, *, image_size, num_classes):
    """Mirrors Generator.forward. z: (B, 100) float32, labels: (B,) int."""
    (w1, b1), (w2, b2), (w3, b3), (w4, b4) = params

    B = z.shape[0]
    z = z.reshape(B, -1).astype(jnp.float32)
    # NOTE: jax.nn.one_hot yields an all-zero row for out-of-range labels where
    # torch.nn.functional.one_hot would raise (semantic, not numeric, delta).
    labels_one_hot = jax.nn.one_hot(labels.astype(jnp.int32), num_classes,
                                    dtype=jnp.float32)
    x = jnp.concatenate([z, labels_one_hot], axis=1)  # (B, 100 + num_classes)

    in_dim = x.shape[1]
    out_dim = image_size * image_size * 3

    # --- pad to MXU / lane-friendly shapes (zero-padding: math is exact) -----
    k_pad = _round_up(in_dim, 128)
    tile_b, b_pad = _choose_tile_b(B)
    tile_n, n_pad = _choose_tile_n(out_dim)
    num_b = b_pad // tile_b
    num_n = n_pad // tile_n

    x_p = jnp.pad(x, ((0, b_pad - B), (0, k_pad - in_dim))).astype(jnp.bfloat16)
    w1_p = jnp.pad(w1, ((0, k_pad - in_dim), (0, 0))).astype(jnp.bfloat16)
    w2_p = w2.astype(jnp.bfloat16)
    w3_p = w3.astype(jnp.bfloat16)
    w4_p = jnp.pad(w4, ((0, 0), (0, n_pad - out_dim))).astype(jnp.bfloat16)
    b1_p = b1.astype(jnp.float32)
    b2_p = b2.astype(jnp.float32)
    b3_p = b3.astype(jnp.float32)
    b4_p = jnp.pad(b4, ((0, 0), (0, n_pad - out_dim))).astype(jnp.float32)

    vmem_limit = _vmem_limit_bytes()

    trunk_flops = 2 * b_pad * (k_pad * 256 + 256 * 512 + 512 * 1024)
    head_flops = 2 * b_pad * 1024 * n_pad
    trunk_w_bytes = (2 * (k_pad * 256 + 256 * 512 + 512 * 1024)
                     + 4 * (256 + 512 + 1024))

    # Fuse only when there is a single batch tile and W4 is small enough that
    # launch overhead / h3 round-trip dominate (keeps megacore split otherwise).
    fuse = (num_b == 1) and (n_pad <= 2048)

    if fuse:
        flat = pl.pallas_call(
            _fused_kernel,
            out_shape=jax.ShapeDtypeStruct((b_pad, n_pad), jnp.bfloat16),
            grid=(num_n,),
            in_specs=[
                pl.BlockSpec((b_pad, k_pad), lambda j: (0, 0)),
                pl.BlockSpec((k_pad, 256), lambda j: (0, 0)),
                pl.BlockSpec((1, 256), lambda j: (0, 0)),
                pl.BlockSpec((256, 512), lambda j: (0, 0)),
                pl.BlockSpec((1, 512), lambda j: (0, 0)),
                pl.BlockSpec((512, 1024), lambda j: (0, 0)),
                pl.BlockSpec((1, 1024), lambda j: (0, 0)),
                pl.BlockSpec((1024, tile_n), lambda j: (0, j)),
                pl.BlockSpec((1, tile_n), lambda j: (0, j)),
            ],
            out_specs=pl.BlockSpec((b_pad, tile_n), lambda j: (0, j)),
            scratch_shapes=[pltpu.VMEM((b_pad, 1024), jnp.bfloat16)],
            compiler_params=pltpu.CompilerParams(
                dimension_semantics=("arbitrary",),
                vmem_limit_bytes=vmem_limit),
            cost_estimate=pl.CostEstimate(
                flops=trunk_flops + head_flops,
                transcendentals=b_pad * n_pad,
                bytes_accessed=(x_p.size * 2 + trunk_w_bytes + w4_p.size * 2
                                + b4_p.size * 4 + b_pad * n_pad * 2)),
        )(x_p, w1_p, b1_p, w2_p, b2_p, w3_p, b3_p, w4_p, b4_p)
    else:
        # ---- trunk: (B,128) -> (B,1024), weights VMEM-resident --------------
        h3 = pl.pallas_call(
            _trunk_kernel,
            out_shape=jax.ShapeDtypeStruct((b_pad, 1024), jnp.bfloat16),
            grid=(num_b,),
            in_specs=[
                pl.BlockSpec((tile_b, k_pad), lambda i: (i, 0)),
                pl.BlockSpec((k_pad, 256), lambda i: (0, 0)),
                pl.BlockSpec((1, 256), lambda i: (0, 0)),
                pl.BlockSpec((256, 512), lambda i: (0, 0)),
                pl.BlockSpec((1, 512), lambda i: (0, 0)),
                pl.BlockSpec((512, 1024), lambda i: (0, 0)),
                pl.BlockSpec((1, 1024), lambda i: (0, 0)),
            ],
            out_specs=pl.BlockSpec((tile_b, 1024), lambda i: (i, 0)),
            compiler_params=pltpu.CompilerParams(
                dimension_semantics=("parallel",),
                vmem_limit_bytes=vmem_limit),
            cost_estimate=pl.CostEstimate(
                flops=trunk_flops, transcendentals=0,
                bytes_accessed=(x_p.size * 2 + trunk_w_bytes
                                + b_pad * 1024 * 2)),
        )(x_p, w1_p, b1_p, w2_p, b2_p, w3_p, b3_p)

        # ---- head: grid (num_n, num_b); W4 column tile resident on the outer
        # (leading, parallel -> megacore-split) axis, so W4 is read from HBM
        # exactly once and the small h3/output tiles stream in the inner loop.
        flat = pl.pallas_call(
            _head_kernel,
            out_shape=jax.ShapeDtypeStruct((b_pad, n_pad), jnp.bfloat16),
            grid=(num_n, num_b),
            in_specs=[
                pl.BlockSpec((tile_b, 1024), lambda j, i: (i, 0)),
                pl.BlockSpec((1024, tile_n), lambda j, i: (0, j)),
                pl.BlockSpec((1, tile_n), lambda j, i: (0, j)),
            ],
            out_specs=pl.BlockSpec((tile_b, tile_n), lambda j, i: (i, j)),
            compiler_params=pltpu.CompilerParams(
                dimension_semantics=("parallel", "parallel"),
                vmem_limit_bytes=vmem_limit),
            cost_estimate=pl.CostEstimate(
                flops=head_flops, transcendentals=b_pad * n_pad,
                bytes_accessed=(num_n * b_pad * 1024 * 2 + w4_p.size * 2
                                + b4_p.size * 4 + b_pad * n_pad * 2)),
        )(h3, w4_p, b4_p)

    # TODO(synk): optional W4 compression (int8 on v5e/v6e, fp8 on v7x) would
    # further halve the dominant HBM stream; omitted to keep numerics simple.
    if b_pad != B or n_pad != out_dim:
        flat = flat[:B, :out_dim]          # skip the copy when no padding
    # Reference module returns float32; upcast once outside the kernel.
    return flat.astype(jnp.float32).reshape(B, 3, image_size, image_size)


def init_generator_params(key, *, image_size, num_classes):
    """Deterministic init. Weights stored as (in, out); bias as (1, out)."""
    dims = [100 + num_classes, 256, 512, 1024, image_size * image_size * 3]
    params = []
    for i in range(4):
        key, kw, kb = jax.random.split(key, 3)
        fan_in = dims[i]
        bound = 1.0 / jnp.sqrt(fan_in)  # torch.nn.Linear default init range
        w = jax.random.uniform(kw, (dims[i], dims[i + 1]),
                               minval=-bound, maxval=bound, dtype=jnp.float32)
        b = jax.random.uniform(kb, (1, dims[i + 1]),
                               minval=-bound, maxval=bound, dtype=jnp.float32)
        params.append((w, b))
    return params


def _reference_forward(z, labels, params, *, image_size, num_classes):
    """Pure-JAX f32 reference mirroring the PyTorch module."""
    (w1, b1), (w2, b2), (w3, b3), (w4, b4) = params
    B = z.shape[0]
    z = z.reshape(B, -1).astype(jnp.float32)
    oh = jax.nn.one_hot(labels.astype(jnp.int32), num_classes,
                        dtype=jnp.float32)
    x = jnp.concatenate([z, oh], axis=1)

    def lrelu(v):
        return jnp.where(v > 0, v, 0.2 * v)

    h = lrelu(x @ w1 + b1)
    h = lrelu(h @ w2 + b2)
    h = lrelu(h @ w3 + b3)
    out = jnp.tanh(h @ w4 + b4)
    return out.reshape(B, 3, image_size, image_size)


def _run_case(seed, batch, image_size, num_classes):
    key = jax.random.PRNGKey(seed)
    k_params, k_z, k_lab = jax.random.split(key, 3)
    params = init_generator_params(k_params, image_size=image_size,
                                   num_classes=num_classes)
    z = jax.random.normal(k_z, (batch, 100), dtype=jnp.float32)
    labels = jax.random.randint(k_lab, (batch,), 0, num_classes,
                                dtype=jnp.int32)

    out = generator_forward(z, labels, params, image_size=image_size,
                            num_classes=num_classes)
    out = jax.block_until_ready(out)

    assert out.shape == (batch, 3, image_size, image_size)
    assert bool(jnp.all(jnp.isfinite(out)))
    assert bool(jnp.all(jnp.abs(out) <= 1.0))  # tanh range

    ref = _reference_forward(z, labels, params, image_size=image_size,
                             num_classes=num_classes)
    max_err = float(jnp.max(jnp.abs(out - ref)))
    assert max_err < 2e-2, f"max abs err {max_err} too large"


if __name__ == "__main__":
    # Case 1: small config -> fused single-call path (num_b==1, small W4).
    _run_case(seed=0, batch=2, image_size=16, num_classes=2)
    # Case 2: exercises the split trunk+head path (num_b>1, num_n>1).
    _run_case(seed=0, batch=34, image_size=32, num_classes=3)
    print("KERNEL_OK")
</pallas_src>

<mosaic_0001>
module attributes {stable_mosaic.version = 11 : i64} {
  func.func @_fused_kernel(%arg0: i32, %arg1: memref<16x128xbf16, #tpu.memory_space<vmem>>, %arg2: memref<128x256xbf16, #tpu.memory_space<vmem>>, %arg3: memref<1x256xf32, #tpu.memory_space<vmem>>, %arg4: memref<256x512xbf16, #tpu.memory_space<vmem>>, %arg5: memref<1x512xf32, #tpu.memory_space<vmem>>, %arg6: memref<512x1024xbf16, #tpu.memory_space<vmem>>, %arg7: memref<1x1024xf32, #tpu.memory_space<vmem>>, %arg8: memref<1024x768xbf16, #tpu.memory_space<vmem>>, %arg9: memref<1x768xf32, #tpu.memory_space<vmem>>, %arg10: memref<16x768xbf16, #tpu.memory_space<vmem>>, %arg11: memref<16x1024xbf16, #tpu.memory_space<vmem>>) attributes {dimension_semantics = [#tpu.dimension_semantics<arbitrary>], iteration_bounds = array<i64: 1>, scalar_prefetch = 0 : i64, scratch_operands = 1 : i64, tpu.core_type = #tpu.core_type<tc>, window_params = [{pipeline_mode = #tpu.pipeline_mode<synchronous>, transform_indices = @transform_0, window_bounds = array<i64: 16, 128>}, {pipeline_mode = #tpu.pipeline_mode<synchronous>, transform_indices = @transform_1, window_bounds = array<i64: 128, 256>}, {pipeline_mode = #tpu.pipeline_mode<synchronous>, transform_indices = @transform_2, window_bounds = array<i64: 1, 256>}, {pipeline_mode = #tpu.pipeline_mode<synchronous>, transform_indices = @transform_3, window_bounds = array<i64: 256, 512>}, {pipeline_mode = #tpu.pipeline_mode<synchronous>, transform_indices = @transform_4, window_bounds = array<i64: 1, 512>}, {pipeline_mode = #tpu.pipeline_mode<synchronous>, transform_indices = @transform_5, window_bounds = array<i64: 512, 1024>}, {pipeline_mode = #tpu.pipeline_mode<synchronous>, transform_indices = @transform_6, window_bounds = array<i64: 1, 1024>}, {transform_indices = @transform_7, window_bounds = array<i64: 1024, 768>}, {transform_indices = @transform_8, window_bounds = array<i64: 1, 768>}, {transform_indices = @transform_9, window_bounds = array<i64: 16, 768>}]} {
    %c0_i32 = arith.constant 0 : i32
    %0 = arith.cmpi eq, %arg0, %c0_i32 : i32
    %1 = arith.extui %0 : i1 to i32
    %c0_i32_0 = arith.constant 0 : i32
    %2 = arith.cmpi ne, %1, %c0_i32_0 : i32
    scf.if %2 {
      %c0_8 = arith.constant 0 : index
      %c0_9 = arith.constant 0 : index
      %12 = vector.load %arg1[%c0_8, %c0_9] : memref<16x128xbf16, #tpu.memory_space<vmem>>, vector<16x128xbf16>
      %c0_10 = arith.constant 0 : index
      %c0_11 = arith.constant 0 : index
      %13 = vector.load %arg2[%c0_10, %c0_11] : memref<128x256xbf16, #tpu.memory_space<vmem>>, vector<128x256xbf16>
      %cst_12 = arith.constant dense<0.000000e+00> : vector<16x256xf32>
      %14 = tpu.matmul %12, %13, %cst_12 {dimension_numbers = #tpu.dot_dimension_numbers<[1], [0], [0], [1], [0, 0, 1, 1], [], []>} : vector<16x128xbf16>, vector<128x256xbf16>, vector<16x256xf32> -> vector<16x256xf32>
      %c0_13 = arith.constant 0 : index
      %c0_14 = arith.constant 0 : index
      %15 = vector.load %arg3[%c0_13, %c0_14] : memref<1x256xf32, #tpu.memory_space<vmem>>, vector<1x256xf32>
      %16 = vector.broadcast %15 : vector<1x256xf32> to vector<16x256xf32>
      %17 = arith.addf %14, %16 : vector<16x256xf32>
      %cst_15 = arith.constant 0.000000e+00 : f32
      %18 = vector.broadcast %cst_15 : f32 to vector<16x256xf32>
      %19 = arith.cmpf ogt, %17, %18 : vector<16x256xf32>
      %cst_16 = arith.constant 2.000000e-01 : f32
      %20 = vector.broadcast %cst_16 : f32 to vector<16x256xf32>
      %21 = arith.mulf %20, %17 : vector<16x256xf32>
      %22 = arith.select %19, %17, %21 : vector<16x256xi1>, vector<16x256xf32>
      %23 = arith.truncf %22 : vector<16x256xf32> to vector<16x256xbf16>
      %c0_17 = arith.constant 0 : index
      %c0_18 = arith.constant 0 : index
      %24 = vector.load %arg4[%c0_17, %c0_18] : memref<256x512xbf16, #tpu.memory_space<vmem>>, vector<256x512xbf16>
      %cst_19 = arith.constant dense<0.000000e+00> : vector<16x512xf32>
      %25 = tpu.matmul %23, %24, %cst_19 {dimension_numbers = #tpu.dot_dimension_numbers<[1], [0], [0], [1], [0, 0, 1, 1], [], []>} : vector<16x256xbf16>, vector<256x512xbf16>, vector<16x512xf32> -> vector<16x512xf32>
      %c0_20 = arith.constant 0 : index
      %c0_21 = arith.constant 0 : index
      %26 = vector.load %arg5[%c0_20, %c0_21] : memref<1x512xf32, #tpu.memory_space<vmem>>, vector<1x512xf32>
      %27 = vector.broadcast %26 : vector<1x512xf32> to vector<16x512xf32>
      %28 = arith.addf %25, %27 : vector<16x512xf32>
      %cst_22 = arith.constant 0.000000e+00 : f32
      %29 = vector.broadcast %cst_22 : f32 to vector<16x512xf32>
      %30 = arith.cmpf ogt, %28, %29 : vector<16x512xf32>
      %cst_23 = arith.constant 2.000000e-01 : f32
      %31 = vector.broadcast %cst_23 : f32 to vector<16x512xf32>
      %32 = arith.mulf %31, %28 : vector<16x512xf32>
      %33 = arith.select %30, %28, %32 : vector<16x512xi1>, vector<16x512xf32>
      %34 = arith.truncf %33 : vector<16x512xf32> to vector<16x512xbf16>
      %c0_24 = arith.constant 0 : index
      %c0_25 = arith.constant 0 : index
      %35 = vector.load %arg6[%c0_24, %c0_25] : memref<512x1024xbf16, #tpu.memory_space<vmem>>, vector<512x1024xbf16>
      %cst_26 = arith.constant dense<0.000000e+00> : vector<16x1024xf32>
      %36 = tpu.matmul %34, %35, %cst_26 {dimension_numbers = #tpu.dot_dimension_numbers<[1], [0], [0], [1], [0, 0, 1, 1], [], []>} : vector<16x512xbf16>, vector<512x1024xbf16>, vector<16x1024xf32> -> vector<16x1024xf32>
      %c0_27 = arith.constant 0 : index
      %c0_28 = arith.constant 0 : index
      %37 = vector.load %arg7[%c0_27, %c0_28] : memref<1x1024xf32, #tpu.memory_space<vmem>>, vector<1x1024xf32>
      %38 = vector.broadcast %37 : vector<1x1024xf32> to vector<16x1024xf32>
      %39 = arith.addf %36, %38 : vector<16x1024xf32>
      %cst_29 = arith.constant 0.000000e+00 : f32
      %40 = vector.broadcast %cst_29 : f32 to vector<16x1024xf32>
      %41 = arith.cmpf ogt, %39, %40 : vector<16x1024xf32>
      %cst_30 = arith.constant 2.000000e-01 : f32
      %42 = vector.broadcast %cst_30 : f32 to vector<16x1024xf32>
      %43 = arith.mulf %42, %39 : vector<16x1024xf32>
      %44 = arith.select %41, %39, %43 : vector<16x1024xi1>, vector<16x1024xf32>
      %45 = arith.truncf %44 : vector<16x1024xf32> to vector<16x1024xbf16>
      %c0_31 = arith.constant 0 : index
      %c0_32 = arith.constant 0 : index
      %46 = vector.load %arg11[%c0_31, %c0_32] : memref<16x1024xbf16, #tpu.memory_space<vmem>>, vector<16x1024xbf16>
      tpu.vector_store %arg11[%c0_31, %c0_32], %45 {strides = array<i32>} : memref<16x1024xbf16, #tpu.memory_space<vmem>>, vector<16x1024xbf16>,
    } else {
    }
    %c0 = arith.constant 0 : index
    %c0_1 = arith.constant 0 : index
    %3 = vector.load %arg11[%c0, %c0_1] : memref<16x1024xbf16, #tpu.memory_space<vmem>>, vector<16x1024xbf16>
    %c0_2 = arith.constant 0 : index
    %c0_3 = arith.constant 0 : index
    %4 = vector.load %arg8[%c0_2, %c0_3] : memref<1024x768xbf16, #tpu.memory_space<vmem>>, vector<1024x768xbf16>
    %cst = arith.constant dense<0.000000e+00> : vector<16x768xf32>
    %5 = tpu.matmul %3, %4, %cst {dimension_numbers = #tpu.dot_dimension_numbers<[1], [0], [0], [1], [0, 0, 1, 1], [], []>} : vector<16x1024xbf16>, vector<1024x768xbf16>, vector<16x768xf32> -> vector<16x768xf32>
    %c0_4 = arith.constant 0 : index
    %c0_5 = arith.constant 0 : index
    %6 = vector.load %arg9[%c0_4, %c0_5] : memref<1x768xf32, #tpu.memory_space<vmem>>, vector<1x768xf32>
    %7 = vector.broadcast %6 : vector<1x768xf32> to vector<16x768xf32>
    %8 = arith.addf %5, %7 : vector<16x768xf32>
    %9 = math.tanh %8 : vector<16x768xf32>
    %10 = arith.truncf %9 : vector<16x768xf32> to vector<16x768xbf16>
    %c0_6 = arith.constant 0 : index
    %c0_7 = arith.constant 0 : index
    %11 = vector.load %arg10[%c0_6, %c0_7] : memref<16x768xbf16, #tpu.memory_space<vmem>>, vector<16x768xbf16>
    tpu.vector_store %arg10[%c0_6, %c0_7], %10 {strides = array<i32>} : memref<16x768xbf16, #tpu.memory_space<vmem>>, vector<16x768xbf16>,
    return
  }
  func.func @transform_0(%arg0: i32) -> (i32, i32) {
    %c0_i32 = arith.constant 0 : i32
    %c0_i32_0 = arith.constant 0 : i32
    %c0_i32_1 = arith.constant 0 : i32
    return %c0_i32, %c0_i32_0 : i32, i32
  }
  func.func @transform_1(%arg0: i32) -> (i32, i32) {
    %c0_i32 = arith.constant 0 : i32
    %c0_i32_0 = arith.constant 0 : i32
    %c0_i32_1 = arith.constant 0 : i32
    return %c0_i32, %c0_i32_0 : i32, i32
  }
  func.func @transform_2(%arg0: i32) -> (i32, i32) {
    %c0_i32 = arith.constant 0 : i32
    %c0_i32_0 = arith.constant 0 : i32
    %c0_i32_1 = arith.constant 0 : i32
    return %c0_i32, %c0_i32_0 : i32, i32
  }
  func.func @transform_3(%arg0: i32) -> (i32, i32) {
    %c0_i32 = arith.constant 0 : i32
    %c0_i32_0 = arith.constant 0 : i32
    %c0_i32_1 = arith.constant 0 : i32
    return %c0_i32, %c0_i32_0 : i32, i32
  }
  func.func @transform_4(%arg0: i32) -> (i32, i32) {
    %c0_i32 = arith.constant 0 : i32
    %c0_i32_0 = arith.constant 0 : i32
    %c0_i32_1 = arith.constant 0 : i32
    return %c0_i32, %c0_i32_0 : i32, i32
  }
  func.func @transform_5(%arg0: i32) -> (i32, i32) {
    %c0_i32 = arith.constant 0 : i32
    %c0_i32_0 = arith.constant 0 : i32
    %c0_i32_1 = arith.constant 0 : i32
    return %c0_i32, %c0_i32_0 : i32, i32
  }
  func.func @transform_6(%arg0: i32) -> (i32, i32) {
    %c0_i32 = arith.constant 0 : i32
    %c0_i32_0 = arith.constant 0 : i32
    %c0_i32_1 = arith.constant 0 : i32
    return %c0_i32, %c0_i32_0 : i32, i32
  }
  func.func @transform_7(%arg0: i32) -> (i32, i32) {
    %c0_i32 = arith.constant 0 : i32
    %c0_i32_0 = arith.constant 0 : i32
    return %c0_i32, %arg0 : i32, i32
  }
  func.func @transform_8(%arg0: i32) -> (i32, i32) {
    %c0_i32 = arith.constant 0 : i32
    %c0_i32_0 = arith.constant 0 : i32
    return %c0_i32, %arg0 : i32, i32
  }
  func.func @transform_9(%arg0: i32) -> (i32, i32) {
    %c0_i32 = arith.constant 0 : i32
    %c0_i32_0 = arith.constant 0 : i32
    return %c0_i32, %arg0 : i32, i32
  }
}

</mosaic_0001>

<llo_original>
// kernel: tpu_custom_call.1
$region0: #{tpu_custom_call.1}
  #allocation0 [shape = 'u32[]', space=smem, size = 0x4, offset = 0x4, fixed_abs, tag = 'smem constant byte address 0x4 - core index']
  #allocation1 [shape = 'u32[72,128]{1,0:T(1,128)}', space=vmem, size = 0x9000, scoped, tag = 'internal scratch']
  #allocation2 [shape = 'bf16[16,1024]{1,0:T(8,128)(2,1)}', space=vmem, size = 0x8000, scoped, tag = 'scratch operand']
  %s0 = inlined_call_operand.hbm [shape: bf16[16,128], index: 0, kind: input, shape index: {}]
  %s1 = inlined_call_operand.hbm [shape: bf16[128,256], index: 1, kind: input, shape index: {}]
  %s2 = inlined_call_operand.hbm [shape: f32[1,256], index: 2, kind: input, shape index: {}]
  %s3 = inlined_call_operand.hbm [shape: bf16[256,512], index: 3, kind: input, shape index: {}]
  %s4 = inlined_call_operand.hbm [shape: f32[1,512], index: 4, kind: input, shape index: {}]
  %s5 = inlined_call_operand.hbm [shape: bf16[512,1024], index: 5, kind: input, shape index: {}]
  %s6 = inlined_call_operand.hbm [shape: f32[1,1024], index: 6, kind: input, shape index: {}]
  %s7 = inlined_call_operand.hbm [shape: bf16[1024,768], index: 7, kind: input, shape index: {}]
  %s8 = inlined_call_operand.hbm [shape: f32[1,768], index: 8, kind: input, shape index: {}]
  %s9 = inlined_call_operand.hbm [shape: bf16[16,768], index: 9, kind: output, shape index: {}]
  %s10 = sld [smem:[#allocation0]]
  $region86: #{tpu_custom_call.1} parent=0
    _
  %s12 = ssub.s32 1, %s10
  %s13 = scalar_select 0, %s12, %s10
  $region1: #{tpu_custom_call.1} parent=0
    #allocation3 [shape = 'u8[4096]{0}', space=vmem, size = 0x1000, scoped, tag = 'input window, operand 0, single buffered']
    #allocation4 [shape = 's32[1]{0}', space=sflag, size = 0x4, scoped, tag = 'scoped memory for tpu_custom_call.1']
    #allocation5 [shape = 's32[1]{0}', space=sflag, size = 0x4, scoped, tag = 'scoped memory for tpu_custom_call.1']
    #allocation6 [shape = 'u8[65536]{0}', space=vmem, size = 0x10000, scoped, tag = 'input window, operand 1, single buffered']
    #allocation7 [shape = 's32[1]{0}', space=sflag, size = 0x4, scoped, tag = 'scoped memory for tpu_custom_call.1']
    #allocation8 [shape = 'u8[1024]{0}', space=vmem, size = 0x400, scoped, tag = 'input window, operand 2, single buffered']
    #allocation9 [shape = 'u8[262144]{0}', space=vmem, size = 0x40000, scoped, tag = 'input window, operand 3, single buffered']
    #allocation10 [shape = 's32[1]{0}', space=sflag, size = 0x4, scoped, tag = 'scoped memory for tpu_custom_call.1']
    #allocation11 [shape = 'u8[2048]{0}', space=vmem, size = 0x800, scoped, tag = 'input window, operand 4, single buffered']
    #allocation12 [shape = 'u8[1048576]{0}', space=vmem, size = 0x100000, scoped, tag = 'input window, operand 5, single buffered']
    #allocation13 [shape = 's32[1]{0}', space=sflag, size = 0x4, scoped, tag = 'scoped memory for tpu_custom_call.1']
    #allocation14 [shape = 'u8[4096]{0}', space=vmem, size = 0x1000, scoped, tag = 'input window, operand 6, single buffered']
    #allocation15 [shape = 'u8[1572864]{0}', space=vmem, size = 0x180000, scoped, tag = 'input window, operand 7, single buffered']
    #allocation16 [shape = 's32[1]{0}', space=sflag, size = 0x4, scoped, tag = 'scoped memory for tpu_custom_call.1']
    #allocation17 [shape = 'u8[3072]{0}', space=vmem, size = 0xc00, scoped, tag = 'input window, operand 8, single buffered']
    #allocation18 [shape = 'u8[24576]{0}', space=vmem, size = 0x6000, scoped, tag = 'output window, operand 0, single buffered']
    %14 = vsyncpa [#allocation4], 0
    %15 = vsyncpa [#allocation7], 0
    %16 = vsyncpa [#allocation10], 0
    %17 = vsyncpa [#allocation13], 0
    %18 = vsyncpa [#allocation16], 0
    %19 = vsyncpa [#allocation5], 0
    // Predicated region
    $region2: #{tpu_custom_call.1} parent=1 // pred_check
      _
    $region3: #{tpu_custom_call.1} parent=1 // pred_check_branch
      %21 = sbr.rel (0) target = $region5
    $region4: #{tpu_custom_call.1} parent=1 // pred_region
      %23 = vsyncadd [#allocation4], 0
      %s24 = sshll.u32 %s0, 4
      %s25 = int_to_ptr.hbm [resolvable:$true] %s24
      %s26 = sshll.u32 [#allocation3], 4
      %s27 = int_to_ptr.vmem [resolvable:$true] %s26
      %32 = dma.hbm_to_vmem [thread:$0]  %s25, 128, %s27, [#allocation4], 64, 64, 4
    $region5: #{tpu_custom_call.1} parent=1 // pred_fallthru
      _
    // Predicated region
    $region6: #{tpu_custom_call.1} parent=1 // pred_check
      _
    $region7: #{tpu_custom_call.1} parent=1 // pred_check_branch
      %34 = sbr.rel (0) target = $region9
    $region8: #{tpu_custom_call.1} parent=1 // pred_region
      %36 = vsyncadd [#allocation7], 0
      %s37 = sshll.u32 %s1, 4
      %s38 = int_to_ptr.hbm [resolvable:$true] %s37
      %s39 = sshll.u32 [#allocation6], 4
      %s40 = int_to_ptr.vmem [resolvable:$true] %s39
      %45 = dma.hbm_to_vmem [thread:$0]  %s38, 2048, %s40, [#allocation7], 128, 128, 8
    $region9: #{tpu_custom_call.1} parent=1 // pred_fallthru
      _
    // Predicated region
    $region10: #{tpu_custom_call.1} parent=1 // pred_check
      _
    $region11: #{tpu_custom_call.1} parent=1 // pred_check_branch
      %47 = sbr.rel (0) target = $region13
    $region12: #{tpu_custom_call.1} parent=1 // pred_region
      %49 = vsyncadd [#allocation7], 0
      %s51 = sshll.u32 %s2, 4
      %s52 = int_to_ptr.hbm [resolvable:$true] %s51
      %s53 = sshll.u32 [#allocation8], 4
      %s54 = int_to_ptr.vmem [resolvable:$true] %s53
      %56 = dma.hbm_to_vmem [thread:$0]  %s52, 32, %s54, [#allocation7]
    $region13: #{tpu_custom_call.1} parent=1 // pred_fallthru
      _
    // Predicated region
    $region14: #{tpu_custom_call.1} parent=1 // pred_check
      _
    $region15: #{tpu_custom_call.1} parent=1 // pred_check_branch
      %58 = sbr.rel (0) target = $region17
    $region16: #{tpu_custom_call.1} parent=1 // pred_region
      %60 = vsyncadd [#allocation10], 0
      %s61 = sshll.u32 %s3, 4
      %s62 = int_to_ptr.hbm [resolvable:$true] %s61
      %s63 = sshll.u32 [#allocation9], 4
      %s64 = int_to_ptr.vmem [resolvable:$true] %s63
      %69 = dma.hbm_to_vmem [thread:$0]  %s62, 8192, %s64, [#allocation10], 256, 256, 16
    $region17: #{tpu_custom_call.1} parent=1 // pred_fallthru
      _
    // Predicated region
    $region18: #{tpu_custom_call.1} parent=1 // pred_check
      _
    $region19: #{tpu_custom_call.1} parent=1 // pred_check_branch
      %71 = sbr.rel (0) target = $region21
    $region20: #{tpu_custom_call.1} parent=1 // pred_region
      %73 = vsyncadd [#allocation10], 0
      %s75 = sshll.u32 %s4, 4
      %s76 = int_to_ptr.hbm [resolvable:$true] %s75
      %s77 = sshll.u32 [#allocation11], 4
      %s78 = int_to_ptr.vmem [resolvable:$true] %s77
      %80 = dma.hbm_to_vmem [thread:$0]  %s76, 64, %s78, [#allocation10]
    $region21: #{tpu_custom_call.1} parent=1 // pred_fallthru
      _
    // Predicated region
    $region22: #{tpu_custom_call.1} parent=1 // pred_check
      _
    $region23: #{tpu_custom_call.1} parent=1 // pred_check_branch
      %82 = sbr.rel (0) target = $region25
    $region24: #{tpu_custom_call.1} parent=1 // pred_region
      %84 = vsyncadd [#allocation13], 0
      %s85 = sshll.u32 %s5, 4
      %s86 = int_to_ptr.hbm [resolvable:$true] %s85
      %s87 = sshll.u32 [#allocation12], 4
      %s88 = int_to_ptr.vmem [resolvable:$true] %s87
      %93 = dma.hbm_to_vmem [thread:$0]  %s86, 32768, %s88, [#allocation13], 512, 512, 32
    $region25: #{tpu_custom_call.1} parent=1 // pred_fallthru
      _
    // Predicated region
    $region26: #{tpu_custom_call.1} parent=1 // pred_check
      _
    $region27: #{tpu_custom_call.1} parent=1 // pred_check_branch
      %95 = sbr.rel (0) target = $region29
    $region28: #{tpu_custom_call.1} parent=1 // pred_region
      %97 = vsyncadd [#allocation13], 0
      %s99 = sshll.u32 %s6, 4
      %s100 = int_to_ptr.hbm [resolvable:$true] %s99
      %s101 = sshll.u32 [#allocation14], 4
      %s102 = int_to_ptr.vmem [resolvable:$true] %s101
      %104 = dma.hbm_to_vmem [thread:$0]  %s100, 128, %s102, [#allocation13]
    $region29: #{tpu_custom_call.1} parent=1 // pred_fallthru
      _
    // Predicated region
    $region30: #{tpu_custom_call.1} parent=1 // pred_check
      _
    $region31: #{tpu_custom_call.1} parent=1 // pred_check_branch
      %106 = sbr.rel (0) target = $region33
    $region32: #{tpu_custom_call.1} parent=1 // pred_region
      %108 = vsyncadd [#allocation16], 0
      %s109 = sshll.u32 %s7, 4
      %s110 = int_to_ptr.hbm [resolvable:$true] %s109
      %s111 = sshll.u32 [#allocation15], 4
      %s112 = int_to_ptr.vmem [resolvable:$true] %s111
      %117 = dma.hbm_to_vmem [thread:$0]  %s110, 49152, %s112, [#allocation16], 384, 384, 24
    $region33: #{tpu_custom_call.1} parent=1 // pred_fallthru
      _
    // Predicated region
    $region34: #{tpu_custom_call.1} parent=1 // pred_check
      _
    $region35: #{tpu_custom_call.1} parent=1 // pred_check_branch
      %119 = sbr.rel (0) target = $region37
    $region36: #{tpu_custom_call.1} parent=1 // pred_region
      %121 = vsyncadd [#allocation16], 0
      %s123 = sshll.u32 %s8, 4
      %s124 = int_to_ptr.hbm [resolvable:$true] %s123
      %s125 = sshll.u32 [#allocation17], 4
      %s126 = int_to_ptr.vmem [resolvable:$true] %s125
      %128 = dma.hbm_to_vmem [thread:$0]  %s124, 96, %s126, [#allocation16]
    $region37: #{tpu_custom_call.1} parent=1 // pred_fallthru
      _
    // Predicated region
    $region38: #{tpu_custom_call.1} parent=1 // pred_check
      _
    $region39: #{tpu_custom_call.1} parent=1 // pred_check_branch
      %130 = sbr.rel (0) target = $region41
    $region40: #{tpu_custom_call.1} parent=1 // pred_region
      %132 = dma.done [#allocation4], 128
    $region41: #{tpu_custom_call.1} parent=1 // pred_fallthru
      _
    // Predicated region
    $region42: #{tpu_custom_call.1} parent=1 // pred_check
      _
    $region43: #{tpu_custom_call.1} parent=1 // pred_check_branch
      %134 = sbr.rel (0) target = $region45
    $region44: #{tpu_custom_call.1} parent=1 // pred_region
      %136 = dma.done [#allocation7], 2048
    $region45: #{tpu_custom_call.1} parent=1 // pred_fallthru
      _
    // Predicated region
    $region46: #{tpu_custom_call.1} parent=1 // pred_check
      _
    $region47: #{tpu_custom_call.1} parent=1 // pred_check_branch
      %138 = sbr.rel (0) target = $region49
    $region48: #{tpu_custom_call.1} parent=1 // pred_region
      %140 = dma.done [#allocation7], 32
    $region49: #{tpu_custom_call.1} parent=1 // pred_fallthru
      _
    // Predicated region
    $region50: #{tpu_custom_call.1} parent=1 // pred_check
      _
    $region51: #{tpu_custom_call.1} parent=1 // pred_check_branch
      %142 = sbr.rel (0) target = $region53
    $region52: #{tpu_custom_call.1} parent=1 // pred_region
      %144 = dma.done [#allocation10], 8192
    $region53: #{tpu_custom_call.1} parent=1 // pred_fallthru
      _
    // Predicated region
    $region54: #{tpu_custom_call.1} parent=1 // pred_check
      _
    $region55: #{tpu_custom_call.1} parent=1 // pred_check_branch
      %146 = sbr.rel (0) target = $region57
    $region56: #{tpu_custom_call.1} parent=1 // pred_region
      %148 = dma.done [#allocation10], 64
    $region57: #{tpu_custom_call.1} parent=1 // pred_fallthru
      _
    // Predicated region
    $region58: #{tpu_custom_call.1} parent=1 // pred_check
      _
    $region59: #{tpu_custom_call.1} parent=1 // pred_check_branch
      %150 = sbr.rel (0) target = $region61
    $region60: #{tpu_custom_call.1} parent=1 // pred_region
      %152 = dma.done [#allocation13], 32768
    $region61: #{tpu_custom_call.1} parent=1 // pred_fallthru
      _
    // Predicated region
    $region62: #{tpu_custom_call.1} parent=1 // pred_check
      _
    $region63: #{tpu_custom_call.1} parent=1 // pred_check_branch
      %154 = sbr.rel (0) target = $region65
    $region64: #{tpu_custom_call.1} parent=1 // pred_region
      %156 = dma.done [#allocation13], 128
    $region65: #{tpu_custom_call.1} parent=1 // pred_fallthru
      _
    // Predicated region
    $region66: #{tpu_custom_call.1} parent=1 // pred_check
      _
    $region67: #{tpu_custom_call.1} parent=1 // pred_check_branch
      %158 = sbr.rel (0) target = $region69
    $region68: #{tpu_custom_call.1} parent=1 // pred_region
      %160 = dma.done [#allocation16], 49152
    $region69: #{tpu_custom_call.1} parent=1 // pred_fallthru
      _
    // Predicated region
    $region70: #{tpu_custom_call.1} parent=1 // pred_check
      _
    $region71: #{tpu_custom_call.1} parent=1 // pred_check_branch
      %162 = sbr.rel (0) target = $region73
    $region72: #{tpu_custom_call.1} parent=1 // pred_region
      %164 = dma.done [#allocation16], 96
    $region73: #{tpu_custom_call.1} parent=1 // pred_fallthru
      _
    %p165 = scmp.eq.s32.totalorder 0, 0
    // Predicated region
    $region74: #{tpu_custom_call.1} parent=1 // pred_check
      %p166 = pneg %p165
    $region75: #{tpu_custom_call.1} parent=1 // pred_check_branch
      %168 = sbr.rel (%p166) target = $region77
    $region76: #{tpu_custom_call.1} parent=1 // pred_region
      %v169 = vld [vmem:[#allocation3] sm:$0xf]
      %v170 = vld [vmem:[#allocation3 + $0x4] sm:$0xf]
      %v171 = vld [vmem:[#allocation6] sm:$0xff]
      %v172 = vld [vmem:[#allocation6 + $0x8] sm:$0xff]
      %v173 = vld [vmem:[#allocation6 + $0x10] sm:$0xff]
      %v174 = vld [vmem:[#allocation6 + $0x18] sm:$0xff]
      %v175 = vld [vmem:[#allocation6 + $0x20] sm:$0xff]
      %v176 = vld [vmem:[#allocation6 + $0x28] sm:$0xff]
      %v177 = vld [vmem:[#allocation6 + $0x30] sm:$0xff]
      %v178 = vld [vmem:[#allocation6 + $0x38] sm:$0xff]
      %v179 = vld [vmem:[#allocation6 + $0x40] sm:$0xff]
      %v180 = vld [vmem:[#allocation6 + $0x48] sm:$0xff]
      %v181 = vld [vmem:[#allocation6 + $0x50] sm:$0xff]
      %v182 = vld [vmem:[#allocation6 + $0x58] sm:$0xff]
      %v183 = vld [vmem:[#allocation6 + $0x60] sm:$0xff]
      %v184 = vld [vmem:[#allocation6 + $0x68] sm:$0xff]
      %v185 = vld [vmem:[#allocation6 + $0x70] sm:$0xff]
      %v186 = vld [vmem:[#allocation6 + $0x78] sm:$0xff]
      %v187 = vld [vmem:[#allocation8] sm:$0x3]
      %v189 = vperm.slane %v187, 0
      %v190 = vperm.slane %v187, 1
      %v195 = vunpack.c.l.b16 %v169
      %v196 = vunpack.c.l.b16 %v170
      %v197 = vpack.c.b16 %v196, %v195
      %v215 = vunpack.c.l.b16 %v171
      %v216 = vunpack.c.h.b16 %v171
      %v217 = vunpack.c.l.b16 %v172
      %v218 = vunpack.c.h.b16 %v172
      %v219 = vunpack.c.l.b16 %v173
      %v220 = vunpack.c.h.b16 %v173
      %v221 = vunpack.c.l.b16 %v174
      %v222 = vunpack.c.h.b16 %v174
      %v223 = vunpack.c.l.b16 %v175
      %v224 = vunpack.c.h.b16 %v175
      %v225 = vunpack.c.l.b16 %v176
      %v226 = vunpack.c.h.b16 %v176
      %v227 = vunpack.c.l.b16 %v177
      %v228 = vunpack.c.h.b16 %v177
      %v229 = vunpack.c.l.b16 %v178
      %v230 = vunpack.c.h.b16 %v178
      %v231 = vunpack.c.l.b16 %v179
      %v232 = vunpack.c.h.b16 %v179
      %v233 = vunpack.c.l.b16 %v180
      %v234 = vunpack.c.h.b16 %v180
      %v235 = vunpack.c.l.b16 %v181
      %v236 = vunpack.c.h.b16 %v181
      %v237 = vunpack.c.l.b16 %v182
      %v238 = vunpack.c.h.b16 %v182
      %v239 = vunpack.c.l.b16 %v183
      %v240 = vunpack.c.h.b16 %v183
      %v241 = vunpack.c.l.b16 %v184
      %v242 = vunpack.c.h.b16 %v184
      %v243 = vunpack.c.l.b16 %v185
      %v244 = vunpack.c.h.b16 %v185
      %v245 = vunpack.c.l.b16 %v186
      %v246 = vunpack.c.h.b16 %v186
      %v247 = vpack.c.b16 %v217, %v215
      %v248 = vpack.c.b16 %v218, %v216
      %v249 = vpack.c.b16 %v221, %v219
      %v250 = vpack.c.b16 %v222, %v220
      %v251 = vpack.c.b16 %v225, %v223
      %v252 = vpack.c.b16 %v226, %v224
      %v253 = vpack.c.b16 %v229, %v227
      %v254 = vpack.c.b16 %v230, %v228
      %v255 = vpack.c.b16 %v233, %v231
      %v256 = vpack.c.b16 %v234, %v232
      %v257 = vpack.c.b16 %v237, %v235
      %v258 = vpack.c.b16 %v238, %v236
      %v259 = vpack.c.b16 %v241, %v239
      %v260 = vpack.c.b16 %v242, %v240
      %v261 = vpack.c.b16 %v245, %v243
      %v262 = vpack.c.b16 %v246, %v244
      %279 = vmatpush.bf16.msra.mxu0 %v261
      %280 = vmatpush.bf16.msra.mxu0 %v259
      %281 = vmatpush.bf16.msra.mxu0 %v257
      %282 = vmatpush.bf16.msra.mxu0 %v255
      %283 = vmatpush.bf16.msra.mxu0 %v253
      %284 = vmatpush.bf16.msra.mxu0 %v251
      %285 = vmatpush.bf16.msra.mxu0 %v249
      %286 = vmatpush.bf16.msra.mxu0 %v247
      %287 = vmatmul.bf16.gmra.mxu0 %v197
      %v288 = vpop.f32.mrf.mxu0
      %v289 = vadd.f32 %v189, %v288
      %v290 = vpop.f32.mrf.mxu0
      %v291 = vadd.f32 %v189, %v290
      %292 = vdwg.mxu0
      %293 = vmatpush.bf16.msra.mxu0 %v262
      %294 = vmatpush.bf16.msra.mxu0 %v260
      %295 = vmatpush.bf16.msra.mxu0 %v258
      %296 = vmatpush.bf16.msra.mxu0 %v256
      %297 = vmatpush.bf16.msra.mxu0 %v254
      %298 = vmatpush.bf16.msra.mxu0 %v252
      %299 = vmatpush.bf16.msra.mxu0 %v250
      %300 = vmatpush.bf16.msra.mxu0 %v248
      %301 = vmatmul.bf16.gmra.mxu0 %v197
      %v302 = vpop.f32.mrf.mxu0
      %v303 = vadd.f32 %v190, %v302
      %v304 = vpop.f32.mrf.mxu0
      %v305 = vadd.f32 %v190, %v304
      %306 = vdwg.mxu0
      %vm307 = vcmp.gt.f32.partialorder %v289, 0.0
      %vm308 = vcmp.gt.f32.partialorder %v303, 0.0
      %vm309 = vcmp.gt.f32.partialorder %v291, 0.0
      %vm310 = vcmp.gt.f32.partialorder %v305, 0.0
      %v311 = vmul.f32 %v289, 0.2
      %v312 = vmul.f32 %v303, 0.2
      %v313 = vmul.f32 %v291, 0.2
      %v314 = vmul.f32 %v305, 0.2
      %v315 = vsel %vm307, %v289, %v311
      %v316 = vsel %vm308, %v303, %v312
      %v317 = vsel %vm309, %v291, %v313
      %v318 = vsel %vm310, %v305, %v314
      %v319 = vpack.c.bf16 %v317, %v315
      %v320 = vpack.c.bf16 %v318, %v316
      %v321 = vld [vmem:[#allocation9] sm:$0xff]
      %v322 = vld [vmem:[#allocation9 + $0x8] sm:$0xff]
      %v323 = vld [vmem:[#allocation9 + $0x10] sm:$0xff]
      %v324 = vld [vmem:[#allocation9 + $0x18] sm:$0xff]
      %v325 = vld [vmem:[#allocation9 + $0x20] sm:$0xff]
      %v326 = vld [vmem:[#allocation9 + $0x28] sm:$0xff]
      %v327 = vld [vmem:[#allocation9 + $0x30] sm:$0xff]
      %v328 = vld [vmem:[#allocation9 + $0x38] sm:$0xff]
      %v329 = vld [vmem:[#allocation9 + $0x40] sm:$0xff]
      %v330 = vld [vmem:[#allocation9 + $0x48] sm:$0xff]
      %v331 = vld [vmem:[#allocation9 + $0x50] sm:$0xff]
      %v332 = vld [vmem:[#allocation9 + $0x58] sm:$0xff]
      %v333 = vld [vmem:[#allocation9 + $0x60] sm:$0xff]
      %v334 = vld [vmem:[#allocation9 + $0x68] sm:$0xff]
      %v335 = vld [vmem:[#allocation9 + $0x70] sm:$0xff]
      %v336 = vld [vmem:[#allocation9 + $0x78] sm:$0xff]
      %v337 = vld [vmem:[#allocation9 + $0x80] sm:$0xff]
      %v338 = vld [vmem:[#allocation9 + $0x88] sm:$0xff]
      %v339 = vld [vmem:[#allocation9 + $0x90] sm:$0xff]
      %v340 = vld [vmem:[#allocation9 + $0x98] sm:$0xff]
      %v341 = vld [vmem:[#allocation9 + $0xa0] sm:$0xff]
      %v342 = vld [vmem:[#allocation9 + $0xa8] sm:$0xff]
      %v343 = vld [vmem:[#allocation9 + $0xb0] sm:$0xff]
      %v344 = vld [vmem:[#allocation9 + $0xb8] sm:$0xff]
      %v345 = vld [vmem:[#allocation9 + $0xc0] sm:$0xff]
      %v346 = vld [vmem:[#allocation9 + $0xc8] sm:$0xff]
      %v347 = vld [vmem:[#allocation9 + $0xd0] sm:$0xff]
      %v348 = vld [vmem:[#allocation9 + $0xd8] sm:$0xff]
      %v349 = vld [vmem:[#allocation9 + $0xe0] sm:$0xff]
      %v350 = vld [vmem:[#allocation9 + $0xe8] sm:$0xff]
      %v351 = vld [vmem:[#allocation9 + $0xf0] sm:$0xff]
      %v352 = vld [vmem:[#allocation9 + $0xf8] sm:$0xff]
      %v353 = vld [vmem:[#allocation9 + $0x100] sm:$0xff]
      %v354 = vld [vmem:[#allocation9 + $0x108] sm:$0xff]
      %v355 = vld [vmem:[#allocation9 + $0x110] sm:$0xff]
      %v356 = vld [vmem:[#allocation9 + $0x118] sm:$0xff]
      %v357 = vld [vmem:[#allocation9 + $0x120] sm:$0xff]
      %v358 = vld [vmem:[#allocation9 + $0x128] sm:$0xff]
      %v359 = vld [vmem:[#allocation9 + $0x130] sm:$0xff]
      %v360 = vld [vmem:[#allocation9 + $0x138] sm:$0xff]
      %v361 = vld [vmem:[#allocation9 + $0x140] sm:$0xff]
      %v362 = vld [vmem:[#allocation9 + $0x148] sm:$0xff]
      %v363 = vld [vmem:[#allocation9 + $0x150] sm:$0xff]
      %v364 = vld [vmem:[#allocation9 + $0x158] sm:$0xff]
      %v365 = vld [vmem:[#allocation9 + $0x160] sm:$0xff]
      %v366 = vld [vmem:[#allocation9 + $0x168] sm:$0xff]
      %v367 = vld [vmem:[#allocation9 + $0x170] sm:$0xff]
      %v368 = vld [vmem:[#allocation9 + $0x178] sm:$0xff]
      %v369 = vld [vmem:[#allocation9 + $0x180] sm:$0xff]
      %v370 = vld [vmem:[#allocation9 + $0x188] sm:$0xff]
      %v371 = vld [vmem:[#allocation9 + $0x190] sm:$0xff]
      %v372 = vld [vmem:[#allocation9 + $0x198] sm:$0xff]
      %v373 = vld [vmem:[#allocation9 + $0x1a0] sm:$0xff]
      %v374 = vld [vmem:[#allocation9 + $0x1a8] sm:$0xff]
      %v375 = vld [vmem:[#allocation9 + $0x1b0] sm:$0xff]
      %v376 = vld [vmem:[#allocation9 + $0x1b8] sm:$0xff]
      %v377 = vld [vmem:[#allocation9 + $0x1c0] sm:$0xff]
      %v378 = vld [vmem:[#allocation9 + $0x1c8] sm:$0xff]
      %v379 = vld [vmem:[#allocation9 + $0x1d0] sm:$0xff]
      %v380 = vld [vmem:[#allocation9 + $0x1d8] sm:$0xff]
      %v381 = vld [vmem:[#allocation9 + $0x1e0] sm:$0xff]
      %v382 = vld [vmem:[#allocation9 + $0x1e8] sm:$0xff]
      %v383 = vld [vmem:[#allocation9 + $0x1f0] sm:$0xff]
      %v384 = vld [vmem:[#allocation9 + $0x1f8] sm:$0xff]
      %v385 = vld [vmem:[#allocation11] sm:$0xf]
      %v387 = vperm.slane %v385, 0
      %v388 = vperm.slane %v385, 1
      %v389 = vperm.slane %v385, 2
      %v390 = vperm.slane %v385, 3
      %v459 = vunpack.c.l.b16 %v321
      %v460 = vunpack.c.h.b16 %v321
      %v461 = vunpack.c.l.b16 %v322
      %v462 = vunpack.c.h.b16 %v322
      %v463 = vunpack.c.l.b16 %v323
      %v464 = vunpack.c.h.b16 %v323
      %v465 = vunpack.c.l.b16 %v324
      %v466 = vunpack.c.h.b16 %v324
      %v467 = vunpack.c.l.b16 %v325
      %v468 = vunpack.c.h.b16 %v325
      %v469 = vunpack.c.l.b16 %v326
      %v470 = vunpack.c.h.b16 %v326
      %v471 = vunpack.c.l.b16 %v327
      %v472 = vunpack.c.h.b16 %v327
      %v473 = vunpack.c.l.b16 %v328
      %v474 = vunpack.c.h.b16 %v328
      %v475 = vunpack.c.l.b16 %v329
      %v476 = vunpack.c.h.b16 %v329
      %v477 = vunpack.c.l.b16 %v330
      %v478 = vunpack.c.h.b16 %v330
      %v479 = vunpack.c.l.b16 %v331
      %v480 = vunpack.c.h.b16 %v331
      %v481 = vunpack.c.l.b16 %v332
      %v482 = vunpack.c.h.b16 %v332
      %v483 = vunpack.c.l.b16 %v333
      %v484 = vunpack.c.h.b16 %v333
      %v485 = vunpack.c.l.b16 %v334
      %v486 = vunpack.c.h.b16 %v334
      %v487 = vunpack.c.l.b16 %v335
      %v488 = vunpack.c.h.b16 %v335
      %v489 = vunpack.c.l.b16 %v336
      %v490 = vunpack.c.h.b16 %v336
      %v491 = vunpack.c.l.b16 %v337
      %v492 = vunpack.c.h.b16 %v337
      %v493 = vunpack.c.l.b16 %v338
      %v494 = vunpack.c.h.b16 %v338
      %v495 = vunpack.c.l.b16 %v339
      %v496 = vunpack.c.h.b16 %v339
      %v497 = vunpack.c.l.b16 %v340
      %v498 = vunpack.c.h.b16 %v340
      %v499 = vunpack.c.l.b16 %v341
      %v500 = vunpack.c.h.b16 %v341
      %v501 = vunpack.c.l.b16 %v342
      %v502 = vunpack.c.h.b16 %v342
      %v503 = vunpack.c.l.b16 %v343
      %v504 = vunpack.c.h.b16 %v343
      %v505 = vunpack.c.l.b16 %v344
      %v506 = vunpack.c.h.b16 %v344
      %v507 = vunpack.c.l.b16 %v345
      %v508 = vunpack.c.h.b16 %v345
      %v509 = vunpack.c.l.b16 %v346
      %v510 = vunpack.c.h.b16 %v346
      %v511 = vunpack.c.l.b16 %v347
      %v512 = vunpack.c.h.b16 %v347
      %v513 = vunpack.c.l.b16 %v348
      %v514 = vunpack.c.h.b16 %v348
      %v515 = vunpack.c.l.b16 %v349
      %v516 = vunpack.c.h.b16 %v349
      %v517 = vunpack.c.l.b16 %v350
      %v518 = vunpack.c.h.b16 %v350
      %v519 = vunpack.c.l.b16 %v351
      %v520 = vunpack.c.h.b16 %v351
      %v521 = vunpack.c.l.b16 %v352
      %v522 = vunpack.c.h.b16 %v352
      %v523 = vunpack.c.l.b16 %v353
      %v524 = vunpack.c.h.b16 %v353
      %v525 = vunpack.c.l.b16 %v354
      %v526 = vunpack.c.h.b16 %v354
      %v527 = vunpack.c.l.b16 %v355
      %v528 = vunpack.c.h.b16 %v355
      %v529 = vunpack.c.l.b16 %v356
      %v530 = vunpack.c.h.b16 %v356
      %v531 = vunpack.c.l.b16 %v357
      %v532 = vunpack.c.h.b16 %v357
      %v533 = vunpack.c.l.b16 %v358
      %v534 = vunpack.c.h.b16 %v358
      %v535 = vunpack.c.l.b16 %v359
      %v536 = vunpack.c.h.b16 %v359
      %v537 = vunpack.c.l.b16 %v360
      %v538 = vunpack.c.h.b16 %v360
      %v539 = vunpack.c.l.b16 %v361
      %v540 = vunpack.c.h.b16 %v361
      %v541 = vunpack.c.l.b16 %v362
      %v542 = vunpack.c.h.b16 %v362
      %v543 = vunpack.c.l.b16 %v363
      %v544 = vunpack.c.h.b16 %v363
      %v545 = vunpack.c.l.b16 %v364
      %v546 = vunpack.c.h.b16 %v364
      %v547 = vunpack.c.l.b16 %v365
      %v548 = vunpack.c.h.b16 %v365
      %v549 = vunpack.c.l.b16 %v366
      %v550 = vunpack.c.h.b16 %v366
      %v551 = vunpack.c.l.b16 %v367
      %v552 = vunpack.c.h.b16 %v367
      %v553 = vunpack.c.l.b16 %v368
      %v554 = vunpack.c.h.b16 %v368
      %v555 = vunpack.c.l.b16 %v369
      %v556 = vunpack.c.h.b16 %v369
      %v557 = vunpack.c.l.b16 %v370
      %v558 = vunpack.c.h.b16 %v370
      %v559 = vunpack.c.l.b16 %v371
      %v560 = vunpack.c.h.b16 %v371
      %v561 = vunpack.c.l.b16 %v372
      %v562 = vunpack.c.h.b16 %v372
      %v563 = vunpack.c.l.b16 %v373
      %v564 = vunpack.c.h.b16 %v373
      %v565 = vunpack.c.l.b16 %v374
      %v566 = vunpack.c.h.b16 %v374
      %v567 = vunpack.c.l.b16 %v375
      %v568 = vunpack.c.h.b16 %v375
      %v569 = vunpack.c.l.b16 %v376
      %v570 = vunpack.c.h.b16 %v376
      %v571 = vunpack.c.l.b16 %v377
      %v572 = vunpack.c.h.b16 %v377
      %v573 = vunpack.c.l.b16 %v378
      %v574 = vunpack.c.h.b16 %v378
      %v575 = vunpack.c.l.b16 %v379
      %v576 = vunpack.c.h.b16 %v379
      %v577 = vunpack.c.l.b16 %v380
      %v578 = vunpack.c.h.b16 %v380
      %v579 = vunpack.c.l.b16 %v381
      %v580 = vunpack.c.h.b16 %v381
      %v581 = vunpack.c.l.b16 %v382
      %v582 = vunpack.c.h.b16 %v382
      %v583 = vunpack.c.l.b16 %v383
      %v584 = vunpack.c.h.b16 %v383
      %v585 = vunpack.c.l.b16 %v384
      %v586 = vunpack.c.h.b16 %v384
      %v587 = vpack.c.b16 %v463, %v459
      %v588 = vpack.c.b16 %v464, %v460
      %v589 = vpack.c.b16 %v465, %v461
      %v590 = vpack.c.b16 %v466, %v462
      %v591 = vpack.c.b16 %v471, %v467
      %v592 = vpack.c.b16 %v472, %v468
      %v593 = vpack.c.b16 %v473, %v469
      %v594 = vpack.c.b16 %v474, %v470
      %v595 = vpack.c.b16 %v479, %v475
      %v596 = vpack.c.b16 %v480, %v476
      %v597 = vpack.c.b16 %v481, %v477
      %v598 = vpack.c.b16 %v482, %v478
      %v599 = vpack.c.b16 %v487, %v483
      %v600 = vpack.c.b16 %v488, %v484
      %v601 = vpack.c.b16 %v489, %v485
      %v602 = vpack.c.b16 %v490, %v486
      %v603 = vpack.c.b16 %v495, %v491
      %v604 = vpack.c.b16 %v496, %v492
      %v605 = vpack.c.b16 %v497, %v493
      %v606 = vpack.c.b16 %v498, %v494
      %v607 = vpack.c.b16 %v503, %v499
      %v608 = vpack.c.b16 %v504, %v500
      %v609 = vpack.c.b16 %v505, %v501
      %v610 = vpack.c.b16 %v506, %v502
      %v611 = vpack.c.b16 %v511, %v507
      %v612 = vpack.c.b16 %v512, %v508
      %v613 = vpack.c.b16 %v513, %v509
      %v614 = vpack.c.b16 %v514, %v510
      %v615 = vpack.c.b16 %v519, %v515
      %v616 = vpack.c.b16 %v520, %v516
      %v617 = vpack.c.b16 %v521, %v517
      %v618 = vpack.c.b16 %v522, %v518
      %v619 = vpack.c.b16 %v527, %v523
      %v620 = vpack.c.b16 %v528, %v524
      %v621 = vpack.c.b16 %v529, %v525
      %v622 = vpack.c.b16 %v530, %v526
      %v623 = vpack.c.b16 %v535, %v531
      %v624 = vpack.c.b16 %v536, %v532
      %v625 = vpack.c.b16 %v537, %v533
      %v626 = vpack.c.b16 %v538, %v534
      %v627 = vpack.c.b16 %v543, %v539
      %v628 = vpack.c.b16 %v544, %v540
      %v629 = vpack.c.b16 %v545, %v541
      %v630 = vpack.c.b16 %v546, %v542
      %v631 = vpack.c.b16 %v551, %v547
      %v632 = vpack.c.b16 %v552, %v548
      %v633 = vpack.c.b16 %v553, %v549
      %v634 = vpack.c.b16 %v554, %v550
      %v635 = vpack.c.b16 %v559, %v555
      %v636 = vpack.c.b16 %v560, %v556
      %v637 = vpack.c.b16 %v561, %v557
      %v638 = vpack.c.b16 %v562, %v558
      %v639 = vpack.c.b16 %v567, %v563
      %v640 = vpack.c.b16 %v568, %v564
      %v641 = vpack.c.b16 %v569, %v565
      %v642 = vpack.c.b16 %v570, %v566
      %v643 = vpack.c.b16 %v575, %v571
      %v644 = vpack.c.b16 %v576, %v572
      %v645 = vpack.c.b16 %v577, %v573
      %v646 = vpack.c.b16 %v578, %v574
      %v647 = vpack.c.b16 %v583, %v579
      %v648 = vpack.c.b16 %v584, %v580
      %v649 = vpack.c.b16 %v585, %v581
      %v650 = vpack.c.b16 %v586, %v582
      %715 = vmatpush.bf16.msra.mxu0 %v615
      %716 = vmatpush.bf16.msra.mxu0 %v611
      %717 = vmatpush.bf16.msra.mxu0 %v607
      %718 = vmatpush.bf16.msra.mxu0 %v603
      %719 = vmatpush.bf16.msra.mxu0 %v599
      %720 = vmatpush.bf16.msra.mxu0 %v595
      %721 = vmatpush.bf16.msra.mxu0 %v591
      %722 = vmatpush.bf16.msra.mxu0 %v587
      %723 = vmatmul.bf16.gmra.mxu0 %v319
      %v724 = vpop.f32.mrf.mxu0
      %v725 = vadd.f32 %v387, %v724
      %v726 = vpop.f32.mrf.mxu0
      %v727 = vadd.f32 %v387, %v726
      %728 = vdwg.mxu0
      %729 = vmatpush.bf16.msra.mxu0 %v647
      %730 = vmatpush.bf16.msra.mxu0 %v643
      %731 = vmatpush.bf16.msra.mxu0 %v639
      %732 = vmatpush.bf16.msra.mxu0 %v635
      %733 = vmatpush.bf16.msra.mxu0 %v631
      %734 = vmatpush.bf16.msra.mxu0 %v627
      %735 = vmatpush.bf16.msra.mxu0 %v623
      %736 = vmatpush.bf16.msra.mxu0 %v619
      %737 = vmatmul.bf16.gmra.mxu0 %v320
      %v738 = vpop.f32.mrf.mxu0
      %v739 = vadd.f32 %v725, %v738
      %v740 = vpop.f32.mrf.mxu0
      %v741 = vadd.f32 %v727, %v740
      %742 = vdwg.mxu0
      %743 = vmatpush.bf16.msra.mxu0 %v616
      %744 = vmatpush.bf16.msra.mxu0 %v612
      %745 = vmatpush.bf16.msra.mxu0 %v608
      %746 = vmatpush.bf16.msra.mxu0 %v604
      %747 = vmatpush.bf16.msra.mxu0 %v600
      %748 = vmatpush.bf16.msra.mxu0 %v596
      %749 = vmatpush.bf16.msra.mxu0 %v592
      %750 = vmatpush.bf16.msra.mxu0 %v588
      %751 = vmatmul.bf16.gmra.mxu0 %v319
      %v752 = vpop.f32.mrf.mxu0
      %v753 = vadd.f32 %v388, %v752
      %v754 = vpop.f32.mrf.mxu0
      %v755 = vadd.f32 %v388, %v754
      %756 = vdwg.mxu0
      %757 = vmatpush.bf16.msra.mxu0 %v648
      %758 = vmatpush.bf16.msra.mxu0 %v644
      %759 = vmatpush.bf16.msra.mxu0 %v640
      %760 = vmatpush.bf16.msra.mxu0 %v636
      %761 = vmatpush.bf16.msra.mxu0 %v632
      %762 = vmatpush.bf16.msra.mxu0 %v628
      %763 = vmatpush.bf16.msra.mxu0 %v624
      %764 = vmatpush.bf16.msra.mxu0 %v620
      %765 = vmatmul.bf16.gmra.mxu0 %v320
      %v766 = vpop.f32.mrf.mxu0
      %v767 = vadd.f32 %v753, %v766
      %v768 = vpop.f32.mrf.mxu0
      %v769 = vadd.f32 %v755, %v768
      %770 = vdwg.mxu0
      %771 = vmatpush.bf16.msra.mxu0 %v617
      %772 = vmatpush.bf16.msra.mxu0 %v613
      %773 = vmatpush.bf16.msra.mxu0 %v609
      %774 = vmatpush.bf16.msra.mxu0 %v605
      %775 = vmatpush.bf16.msra.mxu0 %v601
      %776 = vmatpush.bf16.msra.mxu0 %v597
      %777 = vmatpush.bf16.msra.mxu0 %v593
      %778 = vmatpush.bf16.msra.mxu0 %v589
      %779 = vmatmul.bf16.gmra.mxu0 %v319
      %v780 = vpop.f32.mrf.mxu0
      %v781 = vadd.f32 %v389, %v780
      %v782 = vpop.f32.mrf.mxu0
      %v783 = vadd.f32 %v389, %v782
      %784 = vdwg.mxu0
      %785 = vmatpush.bf16.msra.mxu0 %v649
      %786 = vmatpush.bf16.msra.mxu0 %v645
      %787 = vmatpush.bf16.msra.mxu0 %v641
      %788 = vmatpush.bf16.msra.mxu0 %v637
      %789 = vmatpush.bf16.msra.mxu0 %v633
      %790 = vmatpush.bf16.msra.mxu0 %v629
      %791 = vmatpush.bf16.msra.mxu0 %v625
      %792 = vmatpush.bf16.msra.mxu0 %v621
      %793 = vmatmul.bf16.gmra.mxu0 %v320
      %v794 = vpop.f32.mrf.mxu0
      %v795 = vadd.f32 %v781, %v794
      %v796 = vpop.f32.mrf.mxu0
      %v797 = vadd.f32 %v783, %v796
      %798 = vdwg.mxu0
      %799 = vmatpush.bf16.msra.mxu0 %v618
      %800 = vmatpush.bf16.msra.mxu0 %v614
      %801 = vmatpush.bf16.msra.mxu0 %v610
      %802 = vmatpush.bf16.msra.mxu0 %v606
      %803 = vmatpush.bf16.msra.mxu0 %v602
      %804 = vmatpush.bf16.msra.mxu0 %v598
      %805 = vmatpush.bf16.msra.mxu0 %v594
      %806 = vmatpush.bf16.msra.mxu0 %v590
      %807 = vmatmul.bf16.gmra.mxu0 %v319
      %v808 = vpop.f32.mrf.mxu0
      %v809 = vadd.f32 %v390, %v808
      %v810 = vpop.f32.mrf.mxu0
      %v811 = vadd.f32 %v390, %v810
      %812 = vdwg.mxu0
      %813 = vmatpush.bf16.msra.mxu0 %v650
      %814 = vmatpush.bf16.msra.mxu0 %v646
      %815 = vmatpush.bf16.msra.mxu0 %v642
      %816 = vmatpush.bf16.msra.mxu0 %v638
      %817 = vmatpush.bf16.msra.mxu0 %v634
      %818 = vmatpush.bf16.msra.mxu0 %v630
      %819 = vmatpush.bf16.msra.mxu0 %v626
      %820 = vmatpush.bf16.msra.mxu0 %v622
      %821 = vmatmul.bf16.gmra.mxu0 %v320
      %v822 = vpop.f32.mrf.mxu0
      %v823 = vadd.f32 %v809, %v822
      %v824 = vpop.f32.mrf.mxu0
      %v825 = vadd.f32 %v811, %v824
      %826 = vdwg.mxu0
      %vm827 = vcmp.gt.f32.partialorder %v739, 0.0
      %vm828 = vcmp.gt.f32.partialorder %v767, 0.0
      %vm829 = vcmp.gt.f32.partialorder %v795, 0.0
      %vm830 = vcmp.gt.f32.partialorder %v823, 0.0
      %vm831 = vcmp.gt.f32.partialorder %v741, 0.0
      %vm832 = vcmp.gt.f32.partialorder %v769, 0.0
      %vm833 = vcmp.gt.f32.partialorder %v797, 0.0
      %vm834 = vcmp.gt.f32.partialorder %v825, 0.0
      %v835 = vmul.f32 %v739, 0.2
      %v836 = vmul.f32 %v767, 0.2
      %v837 = vmul.f32 %v795, 0.2
      %v838 = vmul.f32 %v823, 0.2
      %v839 = vmul.f32 %v741, 0.2
      %v840 = vmul.f32 %v769, 0.2
      %v841 = vmul.f32 %v797, 0.2
      %v842 = vmul.f32 %v825, 0.2
      %v843 = vsel %vm827, %v739, %v835
      %v844 = vsel %vm828, %v767, %v836
      %v845 = vsel %vm829, %v795, %v837
      %v846 = vsel %vm830, %v823, %v838
      %v847 = vsel %vm831, %v741, %v839
      %v848 = vsel %vm832, %v769, %v840
      %v849 = vsel %vm833, %v797, %v841
      %v850 = vsel %vm834, %v825, %v842
      %v851 = vpack.c.bf16 %v847, %v843
      %v852 = vpack.c.bf16 %v848, %v844
      %v853 = vpack.c.bf16 %v849, %v845
      %v854 = vpack.c.bf16 %v850, %v846
      %v855 = vld [vmem:[#allocation12] sm:$0xff]
      %v856 = vld [vmem:[#allocation12 + $0x8] sm:$0xff]
      %v857 = vld [vmem:[#allocation12 + $0x10] sm:$0xff]
      %v858 = vld [vmem:[#allocation12 + $0x18] sm:$0xff]
      %v859 = vld [vmem:[#allocation12 + $0x20] sm:$0xff]
      %v860 = vld [vmem:[#allocation12 + $0x28] sm:$0xff]
      %v861 = vld [vmem:[#allocation12 + $0x30] sm:$0xff]
      %v862 = vld [vmem:[#allocation12 + $0x38] sm:$0xff]
      %v863 = vld [vmem:[#allocation12 + $0x40] sm:$0xff]
      %v864 = vld [vmem:[#allocation12 + $0x48] sm:$0xff]
      %v865 = vld [vmem:[#allocation12 + $0x50] sm:$0xff]
      %v866 = vld [vmem:[#allocation12 + $0x58] sm:$0xff]
      %v867 = vld [vmem:[#allocation12 + $0x60] sm:$0xff]
      %v868 = vld [vmem:[#allocation12 + $0x68] sm:$0xff]
      %v869 = vld [vmem:[#allocation12 + $0x70] sm:$0xff]
      %v870 = vld [vmem:[#allocation12 + $0x78] sm:$0xff]
      %v871 = vld [vmem:[#allocation12 + $0x80] sm:$0xff]
      %v872 = vld [vmem:[#allocation12 + $0x88] sm:$0xff]
      %v873 = vld [vmem:[#allocation12 + $0x90] sm:$0xff]
      %v874 = vld [vmem:[#allocation12 + $0x98] sm:$0xff]
      %v875 = vld [vmem:[#allocation12 + $0xa0] sm:$0xff]
      %v876 = vld [vmem:[#allocation12 + $0xa8] sm:$0xff]
      %v877 = vld [vmem:[#allocation12 + $0xb0] sm:$0xff]
      %v878 = vld [vmem:[#allocation12 + $0xb8] sm:$0xff]
      %v879 = vld [vmem:[#allocation12 + $0xc0] sm:$0xff]
      %v880 = vld [vmem:[#allocation12 + $0xc8] sm:$0xff]
      %v881 = vld [vmem:[#allocation12 + $0xd0] sm:$0xff]
      %v882 = vld [vmem:[#allocation12 + $0xd8] sm:$0xff]
      %v883 = vld [vmem:[#allocation12 + $0xe0] sm:$0xff]
      %v884 = vld [vmem:[#allocation12 + $0xe8] sm:$0xff]
      %v885 = vld [vmem:[#allocation12 + $0xf0] sm:$0xff]
      %v886 = vld [vmem:[#allocation12 + $0xf8] sm:$0xff]
      %v887 = vld [vmem:[#allocation12 + $0x100] sm:$0xff]
      %v888 = vld [vmem:[#allocation12 + $0x108] sm:$0xff]
      %v889 = vld [vmem:[#allocation12 + $0x110] sm:$0xff]
      %v890 = vld [vmem:[#allocation12 + $0x118] sm:$0xff]
      %v891 = vld [vmem:[#allocation12 + $0x120] sm:$0xff]
      %v892 = vld [vmem:[#allocation12 + $0x128] sm:$0xff]
      %v893 = vld [vmem:[#allocation12 + $0x130] sm:$0xff]
      %v894 = vld [vmem:[#allocation12 + $0x138] sm:$0xff]
      %v895 = vld [vmem:[#allocation12 + $0x140] sm:$0xff]
      %v896 = vld [vmem:[#allocation12 + $0x148] sm:$0xff]
      %v897 = vld [vmem:[#allocation12 + $0x150] sm:$0xff]
      %v898 = vld [vmem:[#allocation12 + $0x158] sm:$0xff]
      %v899 = vld [vmem:[#allocation12 + $0x160] sm:$0xff]
      %v900 = vld [vmem:[#allocation12 + $0x168] sm:$0xff]
      %v901 = vld [vmem:[#allocation12 + $0x170] sm:$0xff]
      %v902 = vld [vmem:[#allocation12 + $0x178] sm:$0xff]
      %v903 = vld [vmem:[#allocation12 + $0x180] sm:$0xff]
      %v904 = vld [vmem:[#allocation12 + $0x188] sm:$0xff]
      %v905 = vld [vmem:[#allocation12 + $0x190] sm:$0xff]
      %v906 = vld [vmem:[#allocation12 + $0x198] sm:$0xff]
      %v907 = vld [vmem:[#allocation12 + $0x1a0] sm:$0xff]
      %v908 = vld [vmem:[#allocation12 + $0x1a8] sm:$0xff]
      %v909 = vld [vmem:[#allocation12 + $0x1b0] sm:$0xff]
      %v910 = vld [vmem:[#allocation12 + $0x1b8] sm:$0xff]
      %v911 = vld [vmem:[#allocation12 + $0x1c0] sm:$0xff]
      %v912 = vld [vmem:[#allocation12 + $0x1c8] sm:$0xff]
      %v913 = vld [vmem:[#allocation12 + $0x1d0] sm:$0xff]
      %v914 = vld [vmem:[#allocation12 + $0x1d8] sm:$0xff]
      %v915 = vld [vmem:[#allocation12 + $0x1e0] sm:$0xff]
      %v916 = vld [vmem:[#allocation12 + $0x1e8] sm:$0xff]
      %v917 = vld [vmem:[#allocation12 + $0x1f0] sm:$0xff]
      %v918 = vld [vmem:[#allocation12 + $0x1f8] sm:$0xff]
      %v919 = vld [vmem:[#allocation12 + $0x200] sm:$0xff]
      %v920 = vld [vmem:[#allocation12 + $0x208] sm:$0xff]
      %v921 = vld [vmem:[#allocation12 + $0x210] sm:$0xff]
      %v922 = vld [vmem:[#allocation12 + $0x218] sm:$0xff]
      %v923 = vld [vmem:[#allocation12 + $0x220] sm:$0xff]
      %v924 = vld [vmem:[#allocation12 + $0x228] sm:$0xff]
      %v925 = vld [vmem:[#allocation12 + $0x230] sm:$0xff]
      %v926 = vld [vmem:[#allocation12 + $0x238] sm:$0xff]
      %v927 = vld [vmem:[#allocation12 + $0x240] sm:$0xff]
      %v928 = vld [vmem:[#allocation12 + $0x248] sm:$0xff]
      %v929 = vld [vmem:[#allocation12 + $0x250] sm:$0xff]
      %v930 = vld [vmem:[#allocation12 + $0x258] sm:$0xff]
      %v931 = vld [vmem:[#allocation12 + $0x260] sm:$0xff]
      %v932 = vld [vmem:[#allocation12 + $0x268] sm:$0xff]
      %v933 = vld [vmem:[#allocation12 + $0x270] sm:$0xff]
      %v934 = vld [vmem:[#allocation12 + $0x278] sm:$0xff]
      %v935 = vld [vmem:[#allocation12 + $0x280] sm:$0xff]
      %v936 = vld [vmem:[#allocation12 + $0x288] sm:$0xff]
      %v937 = vld [vmem:[#allocation12 + $0x290] sm:$0xff]
      %v938 = vld [vmem:[#allocation12 + $0x298] sm:$0xff]
      %v939 = vld [vmem:[#allocation12 + $0x2a0] sm:$0xff]
      %v940 = vld [vmem:[#allocation12 + $0x2a8] sm:$0xff]
      %v941 = vld [vmem:[#allocation12 + $0x2b0] sm:$0xff]
      %v942 = vld [vmem:[#allocation12 + $0x2b8] sm:$0xff]
      %v943 = vld [vmem:[#allocation12 + $0x2c0] sm:$0xff]
      %v944 = vld [vmem:[#allocation12 + $0x2c8] sm:$0xff]
      %v945 = vld [vmem:[#allocation12 + $0x2d0] sm:$0xff]
      %v946 = vld [vmem:[#allocation12 + $0x2d8] sm:$0xff]
      %v947 = vld [vmem:[#allocation12 + $0x2e0] sm:$0xff]
      %v948 = vld [vmem:[#allocation12 + $0x2e8] sm:$0xff]
      %v949 = vld [vmem:[#allocation12 + $0x2f0] sm:$0xff]
      %v950 = vld [vmem:[#allocation12 + $0x2f8] sm:$0xff]
      %v951 = vld [vmem:[#allocation12 + $0x300] sm:$0xff]
      %v952 = vld [vmem:[#allocation12 + $0x308] sm:$0xff]
      %v953 = vld [vmem:[#allocation12 + $0x310] sm:$0xff]
      %v954 = vld [vmem:[#allocation12 + $0x318] sm:$0xff]
      %v955 = vld [vmem:[#allocation12 + $0x320] sm:$0xff]
      %v956 = vld [vmem:[#allocation12 + $0x328] sm:$0xff]
      %v957 = vld [vmem:[#allocation12 + $0x330] sm:$0xff]
      %v958 = vld [vmem:[#allocation12 + $0x338] sm:$0xff]
      %v959 = vld [vmem:[#allocation12 + $0x340] sm:$0xff]
      %v960 = vld [vmem:[#allocation12 + $0x348] sm:$0xff]
      %v961 = vld [vmem:[#allocation12 + $0x350] sm:$0xff]
      %v962 = vld [vmem:[#allocation12 + $0x358] sm:$0xff]
      %v963 = vld [vmem:[#allocation12 + $0x360] sm:$0xff]
      %v964 = vld [vmem:[#allocation12 + $0x368] sm:$0xff]
      %v965 = vld [vmem:[#allocation12 + $0x370] sm:$0xff]
      %v966 = vld [vmem:[#allocation12 + $0x378] sm:$0xff]
      %v967 = vld [vmem:[#allocation12 + $0x380] sm:$0xff]
      %v968 = vld [vmem:[#allocation12 + $0x388] sm:$0xff]
      %v969 = vld [vmem:[#allocation12 + $0x390] sm:$0xff]
      %v970 = vld [vmem:[#allocation12 + $0x398] sm:$0xff]
      %v971 = vld [vmem:[#allocation12 + $0x3a0] sm:$0xff]
      %v972 = vld [vmem:[#allocation12 + $0x3a8] sm:$0xff]
      %v973 = vld [vmem:[#allocation12 + $0x3b0] sm:$0xff]
      %v974 = vld [vmem:[#allocation12 + $0x3b8] sm:$0xff]
      %v975 = vld [vmem:[#allocation12 + $0x3c0] sm:$0xff]
      %v976 = vld [vmem:[#allocation12 + $0x3c8] sm:$0xff]
      %v977 = vld [vmem:[#allocation12 + $0x3d0] sm:$0xff]
      %v978 = vld [vmem:[#allocation12 + $0x3d8] sm:$0xff]
      %v979 = vld [vmem:[#allocation12 + $0x3e0] sm:$0xff]
      %v980 = vld [vmem:[#allocation12 + $0x3e8] sm:$0xff]
      %v981 = vld [vmem:[#allocation12 + $0x3f0] sm:$0xff]
      %v982 = vld [vmem:[#allocation12 + $0x3f8] sm:$0xff]
      %v983 = vld [vmem:[#allocation12 + $0x400] sm:$0xff]
      %v984 = vld [vmem:[#allocation12 + $0x408] sm:$0xff]
      %v985 = vld [vmem:[#allocation12 + $0x410] sm:$0xff]
      %v986 = vld [vmem:[#allocation12 + $0x418] sm:$0xff]
      %v987 = vld [vmem:[#allocation12 + $0x420] sm:$0xff]
      %v988 = vld [vmem:[#allocation12 + $0x428] sm:$0xff]
      %v989 = vld [vmem:[#allocation12 + $0x430] sm:$0xff]
      %v990 = vld [vmem:[#allocation12 + $0x438] sm:$0xff]
      %v991 = vld [vmem:[#allocation12 + $0x440] sm:$0xff]
      %v992 = vld [vmem:[#allocation12 + $0x448] sm:$0xff]
      %v993 = vld [vmem:[#allocation12 + $0x450] sm:$0xff]
      %v994 = vld [vmem:[#allocation12 + $0x458] sm:$0xff]
      %v995 = vld [vmem:[#allocation12 + $0x460] sm:$0xff]
      %v996 = vld [vmem:[#allocation12 + $0x468] sm:$0xff]
      %v997 = vld [vmem:[#allocation12 + $0x470] sm:$0xff]
      %v998 = vld [vmem:[#allocation12 + $0x478] sm:$0xff]
      %v999 = vld [vmem:[#allocation12 + $0x480] sm:$0xff]
      %v1000 = vld [vmem:[#allocation12 + $0x488] sm:$0xff]
      %v1001 = vld [vmem:[#allocation12 + $0x490] sm:$0xff]
      %v1002 = vld [vmem:[#allocation12 + $0x498] sm:$0xff]
      %v1003 = vld [vmem:[#allocation12 + $0x4a0] sm:$0xff]
      %v1004 = vld [vmem:[#allocation12 + $0x4a8] sm:$0xff]
      %v1005 = vld [vmem:[#allocation12 + $0x4b0] sm:$0xff]
      %v1006 = vld [vmem:[#allocation12 + $0x4b8] sm:$0xff]
      %v1007 = vld [vmem:[#allocation12 + $0x4c0] sm:$0xff]
      %v1008 = vld [vmem:[#allocation12 + $0x4c8] sm:$0xff]
      %v1009 = vld [vmem:[#allocation12 + $0x4d0] sm:$0xff]
      %v1010 = vld [vmem:[#allocation12 + $0x4d8] sm:$0xff]
      %v1011 = vld [vmem:[#allocation12 + $0x4e0] sm:$0xff]
      %v1012 = vld [vmem:[#allocation12 + $0x4e8] sm:$0xff]
      %v1013 = vld [vmem:[#allocation12 + $0x4f0] sm:$0xff]
      %v1014 = vld [vmem:[#allocation12 + $0x4f8] sm:$0xff]
      %v1015 = vld [vmem:[#allocation12 + $0x500] sm:$0xff]
      %v1016 = vld [vmem:[#allocation12 + $0x508] sm:$0xff]
      %v1017 = vld [vmem:[#allocation12 + $0x510] sm:$0xff]
      %v1018 = vld [vmem:[#allocation12 + $0x518] sm:$0xff]
      %v1019 = vld [vmem:[#allocation12 + $0x520] sm:$0xff]
      %v1020 = vld [vmem:[#allocation12 + $0x528] sm:$0xff]
      %v1021 = vld [vmem:[#allocation12 + $0x530] sm:$0xff]
      %v1022 = vld [vmem:[#allocation12 + $0x538] sm:$0xff]
      %v1023 = vld [vmem:[#allocation12 + $0x540] sm:$0xff]
      %v1024 = vld [vmem:[#allocation12 + $0x548] sm:$0xff]
      %v1025 = vld [vmem:[#allocation12 + $0x550] sm:$0xff]
      %v1026 = vld [vmem:[#allocation12 + $0x558] sm:$0xff]
      %v1027 = vld [vmem:[#allocation12 + $0x560] sm:$0xff]
      %v1028 = vld [vmem:[#allocation12 + $0x568] sm:$0xff]
      %v1029 = vld [vmem:[#allocation12 + $0x570] sm:$0xff]
      %v1030 = vld [vmem:[#allocation12 + $0x578] sm:$0xff]
      %v1031 = vld [vmem:[#allocation12 + $0x580] sm:$0xff]
      %v1032 = vld [vmem:[#allocation12 + $0x588] sm:$0xff]
      %v1033 = vld [vmem:[#allocation12 + $0x590] sm:$0xff]
      %v1034 = vld [vmem:[#allocation12 + $0x598] sm:$0xff]
      %v1035 = vld [vmem:[#allocation12 + $0x5a0] sm:$0xff]
      %v1036 = vld [vmem:[#allocation12 + $0x5a8] sm:$0xff]
      %v1037 = vld [vmem:[#allocation12 + $0x5b0] sm:$0xff]
      %v1038 = vld [vmem:[#allocation12 + $0x5b8] sm:$0xff]
      %v1039 = vld [vmem:[#allocation12 + $0x5c0] sm:$0xff]
      %v1040 = vld [vmem:[#allocation12 + $0x5c8] sm:$0xff]
      %v1041 = vld [vmem:[#allocation12 + $0x5d0] sm:$0xff]
      %v1042 = vld [vmem:[#allocation12 + $0x5d8] sm:$0xff]
      %v1043 = vld [vmem:[#allocation12 + $0x5e0] sm:$0xff]
      %v1044 = vld [vmem:[#allocation12 + $0x5e8] sm:$0xff]
      %v1045 = vld [vmem:[#allocation12 + $0x5f0] sm:$0xff]
      %v1046 = vld [vmem:[#allocation12 + $0x5f8] sm:$0xff]
      %v1047 = vld [vmem:[#allocation12 + $0x600] sm:$0xff]
      %v1048 = vld [vmem:[#allocation12 + $0x608] sm:$0xff]
      %v1049 = vld [vmem:[#allocation12 + $0x610] sm:$0xff]
      %v1050 = vld [vmem:[#allocation12 + $0x618] sm:$0xff]
      %v1051 = vld [vmem:[#allocation12 + $0x620] sm:$0xff]
      %v1052 = vld [vmem:[#allocation12 + $0x628] sm:$0xff]
      %v1053 = vld [vmem:[#allocation12 + $0x630] sm:$0xff]
      %v1054 = vld [vmem:[#allocation12 + $0x638] sm:$0xff]
      %v1055 = vld [vmem:[#allocation12 + $0x640] sm:$0xff]
      %v1056 = vld [vmem:[#allocation12 + $0x648] sm:$0xff]
      %v1057 = vld [vmem:[#allocation12 + $0x650] sm:$0xff]
      %v1058 = vld [vmem:[#allocation12 + $0x658] sm:$0xff]
      %v1059 = vld [vmem:[#allocation12 + $0x660] sm:$0xff]
      %v1060 = vld [vmem:[#allocation12 + $0x668] sm:$0xff]
      %v1061 = vld [vmem:[#allocation12 + $0x670] sm:$0xff]
      %v1062 = vld [vmem:[#allocation12 + $0x678] sm:$0xff]
      %v1063 = vld [vmem:[#allocation12 + $0x680] sm:$0xff]
      %v1064 = vld [vmem:[#allocation12 + $0x688] sm:$0xff]
      %v1065 = vld [vmem:[#allocation12 + $0x690] sm:$0xff]
      %v1066 = vld [vmem:[#allocation12 + $0x698] sm:$0xff]
      %v1067 = vld [vmem:[#allocation12 + $0x6a0] sm:$0xff]
      %v1068 = vld [vmem:[#allocation12 + $0x6a8] sm:$0xff]
      %v1069 = vld [vmem:[#allocation12 + $0x6b0] sm:$0xff]
      %v1070 = vld [vmem:[#allocation12 + $0x6b8] sm:$0xff]
      %v1071 = vld [vmem:[#allocation12 + $0x6c0] sm:$0xff]
      %v1072 = vld [vmem:[#allocation12 + $0x6c8] sm:$0xff]
      %v1073 = vld [vmem:[#allocation12 + $0x6d0] sm:$0xff]
      %v1074 = vld [vmem:[#allocation12 + $0x6d8] sm:$0xff]
      %v1075 = vld [vmem:[#allocation12 + $0x6e0] sm:$0xff]
      %v1076 = vld [vmem:[#allocation12 + $0x6e8] sm:$0xff]
      %v1077 = vld [vmem:[#allocation12 + $0x6f0] sm:$0xff]
      %v1078 = vld [vmem:[#allocation12 + $0x6f8] sm:$0xff]
      %v1079 = vld [vmem:[#allocation12 + $0x700] sm:$0xff]
      %v1080 = vld [vmem:[#allocation12 + $0x708] sm:$0xff]
      %v1081 = vld [vmem:[#allocation12 + $0x710] sm:$0xff]
      %v1082 = vld [vmem:[#allocation12 + $0x718] sm:$0xff]
      %v1083 = vld [vmem:[#allocation12 + $0x720] sm:$0xff]
      %v1084 = vld [vmem:[#allocation12 + $0x728] sm:$0xff]
      %v1085 = vld [vmem:[#allocation12 + $0x730] sm:$0xff]
      %v1086 = vld [vmem:[#allocation12 + $0x738] sm:$0xff]
      %v1087 = vld [vmem:[#allocation12 + $0x740] sm:$0xff]
      %v1088 = vld [vmem:[#allocation12 + $0x748] sm:$0xff]
      %v1089 = vld [vmem:[#allocation12 + $0x750] sm:$0xff]
      %v1090 = vld [vmem:[#allocation12 + $0x758] sm:$0xff]
      %v1091 = vld [vmem:[#allocation12 + $0x760] sm:$0xff]
      %v1092 = vld [vmem:[#allocation12 + $0x768] sm:$0xff]
      %v1093 = vld [vmem:[#allocation12 + $0x770] sm:$0xff]
      %v1094 = vld [vmem:[#allocation12 + $0x778] sm:$0xff]
      %v1095 = vld [vmem:[#allocation12 + $0x780] sm:$0xff]
      %v1096 = vld [vmem:[#allocation12 + $0x788] sm:$0xff]
      %v1097 = vld [vmem:[#allocation12 + $0x790] sm:$0xff]
      %v1098 = vld [vmem:[#allocation12 + $0x798] sm:$0xff]
      %v1099 = vld [vmem:[#allocation12 + $0x7a0] sm:$0xff]
      %v1100 = vld [vmem:[#allocation12 + $0x7a8] sm:$0xff]
      %v1101 = vld [vmem:[#allocation12 + $0x7b0] sm:$0xff]
      %v1102 = vld [vmem:[#allocation12 + $0x7b8] sm:$0xff]
      %v1103 = vld [vmem:[#allocation12 + $0x7c0] sm:$0xff]
      %v1104 = vld [vmem:[#allocation12 + $0x7c8] sm:$0xff]
      %v1105 = vld [vmem:[#allocation12 + $0x7d0] sm:$0xff]
      %v1106 = vld [vmem:[#allocation12 + $0x7d8] sm:$0xff]
      %v1107 = vld [vmem:[#allocation12 + $0x7e0] sm:$0xff]
      %v1108 = vld [vmem:[#allocation12 + $0x7e8] sm:$0xff]
      %v1109 = vld [vmem:[#allocation12 + $0x7f0] sm:$0xff]
      %v1110 = vld [vmem:[#allocation12 + $0x7f8] sm:$0xff]
      %v1111 = vld [vmem:[#allocation14] sm:$0xff]
      %v1113 = vperm.slane %v1111, 0
      %v1114 = vperm.slane %v1111, 1
      %v1115 = vperm.slane %v1111, 2
      %v1116 = vperm.slane %v1111, 3
      %v1117 = vperm.slane %v1111, 4
      %v1118 = vperm.slane %v1111, 5
      %v1119 = vperm.slane %v1111, 6
      %v1120 = vperm.slane %v1111, 7
      %v1385 = vunpack.c.l.b16 %v855
      %v1386 = vunpack.c.h.b16 %v855
      %v1387 = vunpack.c.l.b16 %v856
      %v1388 = vunpack.c.h.b16 %v856
      %v1389 = vunpack.c.l.b16 %v857
      %v1390 = vunpack.c.h.b16 %v857
      %v1391 = vunpack.c.l.b16 %v858
      %v1392 = vunpack.c.h.b16 %v858
      %v1393 = vunpack.c.l.b16 %v859
      %v1394 = vunpack.c.h.b16 %v859
      %v1395 = vunpack.c.l.b16 %v860
      %v1396 = vunpack.c.h.b16 %v860
      %v1397 = vunpack.c.l.b16 %v861
      %v1398 = vunpack.c.h.b16 %v861
      %v1399 = vunpack.c.l.b16 %v862
      %v1400 = vunpack.c.h.b16 %v862
      %v1401 = vunpack.c.l.b16 %v863
      %v1402 = vunpack.c.h.b16 %v863
      %v1403 = vunpack.c.l.b16 %v864
      %v1404 = vunpack.c.h.b16 %v864
      %v1405 = vunpack.c.l.b16 %v865
      %v1406 = vunpack.c.h.b16 %v865
      %v1407 = vunpack.c.l.b16 %v866
      %v1408 = vunpack.c.h.b16 %v866
      %v1409 = vunpack.c.l.b16 %v867
      %v1410 = vunpack.c.h.b16 %v867
      %v1411 = vunpack.c.l.b16 %v868
      %v1412 = vunpack.c.h.b16 %v868
      %v1413 = vunpack.c.l.b16 %v869
      %v1414 = vunpack.c.h.b16 %v869
      %v1415 = vunpack.c.l.b16 %v870
      %v1416 = vunpack.c.h.b16 %v870
      %v1417 = vunpack.c.l.b16 %v871
      %v1418 = vunpack.c.h.b16 %v871
      %v1419 = vunpack.c.l.b16 %v872
      %v1420 = vunpack.c.h.b16 %v872
      %v1421 = vunpack.c.l.b16 %v873
      %v1422 = vunpack.c.h.b16 %v873
      %v1423 = vunpack.c.l.b16 %v874
      %v1424 = vunpack.c.h.b16 %v874
      %v1425 = vunpack.c.l.b16 %v875
      %v1426 = vunpack.c.h.b16 %v875
      %v1427 = vunpack.c.l.b16 %v876
      %v1428 = vunpack.c.h.b16 %v876
      %v1429 = vunpack.c.l.b16 %v877
      %v1430 = vunpack.c.h.b16 %v877
      %v1431 = vunpack.c.l.b16 %v878
      %v1432 = vunpack.c.h.b16 %v878
      %v1433 = vunpack.c.l.b16 %v879
      %v1434 = vunpack.c.h.b16 %v879
      %v1435 = vunpack.c.l.b16 %v880
      %v1436 = vunpack.c.h.b16 %v880
      %v1437 = vunpack.c.l.b16 %v881
      %v1438 = vunpack.c.h.b16 %v881
      %v1439 = vunpack.c.l.b16 %v882
      %v1440 = vunpack.c.h.b16 %v882
      %v1441 = vunpack.c.l.b16 %v883
      %v1442 = vunpack.c.h.b16 %v883
      %v1443 = vunpack.c.l.b16 %v884
      %v1444 = vunpack.c.h.b16 %v884
      %v1445 = vunpack.c.l.b16 %v885
      %v1446 = vunpack.c.h.b16 %v885
      %v1447 = vunpack.c.l.b16 %v886
      %v1448 = vunpack.c.h.b16 %v886
      %v1449 = vunpack.c.l.b16 %v887
      %v1450 = vunpack.c.h.b16 %v887
      %v1451 = vunpack.c.l.b16 %v888
      %v1452 = vunpack.c.h.b16 %v888
      %v1453 = vunpack.c.l.b16 %v889
      %v1454 = vunpack.c.h.b16 %v889
      %v1455 = vunpack.c.l.b16 %v890
      %v1456 = vunpack.c.h.b16 %v890
      %v1457 = vunpack.c.l.b16 %v891
      %v1458 = vunpack.c.h.b16 %v891
      %v1459 = vunpack.c.l.b16 %v892
      %v1460 = vunpack.c.h.b16 %v892
      %v1461 = vunpack.c.l.b16 %v893
      %v1462 = vunpack.c.h.b16 %v893
      %v1463 = vunpack.c.l.b16 %v894
      %v1464 = vunpack.c.h.b16 %v894
      %v1465 = vunpack.c.l.b16 %v895
      %v1466 = vunpack.c.h.b16 %v895
      %v1467 = vunpack.c.l.b16 %v896
      %v1468 = vunpack.c.h.b16 %v896
      %v1469 = vunpack.c.l.b16 %v897
      %v1470 = vunpack.c.h.b16 %v897
      %v1471 = vunpack.c.l.b16 %v898
      %v1472 = vunpack.c.h.b16 %v898
      %v1473 = vunpack.c.l.b16 %v899
      %v1474 = vunpack.c.h.b16 %v899
      %v1475 = vunpack.c.l.b16 %v900
      %v1476 = vunpack.c.h.b16 %v900
      %v1477 = vunpack.c.l.b16 %v901
      %v1478 = vunpack.c.h.b16 %v901
      %v1479 = vunpack.c.l.b16 %v902
      %v1480 = vunpack.c.h.b16 %v902
      %v1481 = vunpack.c.l.b16 %v903
      %v1482 = vunpack.c.h.b16 %v903
      %v1483 = vunpack.c.l.b16 %v904
      %v1484 = vunpack.c.h.b16 %v904
      %v1485 = vunpack.c.l.b16 %v905
      %v1486 = vunpack.c.h.b16 %v905
      %v1487 = vunpack.c.l.b16 %v906
      %v1488 = vunpack.c.h.b16 %v906
      %v1489 = vunpack.c.l.b16 %v907
      %v1490 = vunpack.c.h.b16 %v907
      %v1491 = vunpack.c.l.b16 %v908
      %v1492 = vunpack.c.h.b16 %v908
      %v1493 = vunpack.c.l.b16 %v909
      %v1494 = vunpack.c.h.b16 %v909
      %v1495 = vunpack.c.l.b16 %v910
      %v1496 = vunpack.c.h.b16 %v910
      %v1497 = vunpack.c.l.b16 %v911
      %v1498 = vunpack.c.h.b16 %v911
      %v1499 = vunpack.c.l.b16 %v912
      %v1500 = vunpack.c.h.b16 %v912
      %v1501 = vunpack.c.l.b16 %v913
      %v1502 = vunpack.c.h.b16 %v913
      %v1503 = vunpack.c.l.b16 %v914
      %v1504 = vunpack.c.h.b16 %v914
      %v1505 = vunpack.c.l.b16 %v915
      %v1506 = vunpack.c.h.b16 %v915
      %v1507 = vunpack.c.l.b16 %v916
      %v1508 = vunpack.c.h.b16 %v916
      %v1509 = vunpack.c.l.b16 %v917
      %v1510 = vunpack.c.h.b16 %v917
      %v1511 = vunpack.c.l.b16 %v918
      %v1512 = vunpack.c.h.b16 %v918
      %v1513 = vunpack.c.l.b16 %v919
      %v1514 = vunpack.c.h.b16 %v919
      %v1515 = vunpack.c.l.b16 %v920
      %v1516 = vunpack.c.h.b16 %v920
      %v1517 = vunpack.c.l.b16 %v921
      %v1518 = vunpack.c.h.b16 %v921
      %v1519 = vunpack.c.l.b16 %v922
      %v1520 = vunpack.c.h.b16 %v922
      %v1521 = vunpack.c.l.b16 %v923
      %v1522 = vunpack.c.h.b16 %v923
      %v1523 = vunpack.c.l.b16 %v924
      %v1524 = vunpack.c.h.b16 %v924
      %v1525 = vunpack.c.l.b16 %v925
      %v1526 = vunpack.c.h.b16 %v925
      %v1527 = vunpack.c.l.b16 %v926
      %v1528 = vunpack.c.h.b16 %v926
      %v1529 = vunpack.c.l.b16 %v927
      %v1530 = vunpack.c.h.b16 %v927
      %v1531 = vunpack.c.l.b16 %v928
      %v1532 = vunpack.c.h.b16 %v928
      %v1533 = vunpack.c.l.b16 %v929
      %v1534 = vunpack.c.h.b16 %v929
      %v1535 = vunpack.c.l.b16 %v930
      %v1536 = vunpack.c.h.b16 %v930
      %v1537 = vunpack.c.l.b16 %v931
      %v1538 = vunpack.c.h.b16 %v931
      %v1539 = vunpack.c.l.b16 %v932
      %v1540 = vunpack.c.h.b16 %v932
      %v1541 = vunpack.c.l.b16 %v933
      %v1542 = vunpack.c.h.b16 %v933
      %v1543 = vunpack.c.l.b16 %v934
      %v1544 = vunpack.c.h.b16 %v934
      %v1545 = vunpack.c.l.b16 %v935
      %v1546 = vunpack.c.h.b16 %v935
      %v1547 = vunpack.c.l.b16 %v936
      %v1548 = vunpack.c.h.b16 %v936
      %v1549 = vunpack.c.l.b16 %v937
      %v1550 = vunpack.c.h.b16 %v937
      %v1551 = vunpack.c.l.b16 %v938
      %v1552 = vunpack.c.h.b16 %v938
      %v1553 = vunpack.c.l.b16 %v939
      %v1554 = vunpack.c.h.b16 %v939
      %v1555 = vunpack.c.l.b16 %v940
      %v1556 = vunpack.c.h.b16 %v940
      %v1557 = vunpack.c.l.b16 %v941
      %v1558 = vunpack.c.h.b16 %v941
      %v1559 = vunpack.c.l.b16 %v942
      %v1560 = vunpack.c.h.b16 %v942
      %v1561 = vunpack.c.l.b16 %v943
      %v1562 = vunpack.c.h.b16 %v943
      %v1563 = vunpack.c.l.b16 %v944
      %v1564 = vunpack.c.h.b16 %v944
      %v1565 = vunpack.c.l.b16 %v945
      %v1566 = vunpack.c.h.b16 %v945
      %v1567 = vunpack.c.l.b16 %v946
      %v1568 = vunpack.c.h.b16 %v946
      %v1569 = vunpack.c.l.b16 %v947
      %v1570 = vunpack.c.h.b16 %v947
      %v1571 = vunpack.c.l.b16 %v948
      %v1572 = vunpack.c.h.b16 %v948
      %v1573 = vunpack.c.l.b16 %v949
      %v1574 = vunpack.c.h.b16 %v949
      %v1575 = vunpack.c.l.b16 %v950
      %v1576 = vunpack.c.h.b16 %v950
      %v1577 = vunpack.c.l.b16 %v951
      %v1578 = vunpack.c.h.b16 %v951
      %v1579 = vunpack.c.l.b16 %v952
      %v1580 = vunpack.c.h.b16 %v952
      %v1581 = vunpack.c.l.b16 %v953
      %v1582 = vunpack.c.h.b16 %v953
      %v1583 = vunpack.c.l.b16 %v954
      %v1584 = vunpack.c.h.b16 %v954
      %v1585 = vunpack.c.l.b16 %v955
      %v1586 = vunpack.c.h.b16 %v955
      %v1587 = vunpack.c.l.b16 %v956
      %v1588 = vunpack.c.h.b16 %v956
      %v1589 = vunpack.c.l.b16 %v957
      %v1590 = vunpack.c.h.b16 %v957
      %v1591 = vunpack.c.l.b16 %v958
      %v1592 = vunpack.c.h.b16 %v958
      %v1593 = vunpack.c.l.b16 %v959
      %v1594 = vunpack.c.h.b16 %v959
      %v1595 = vunpack.c.l.b16 %v960
      %v1596 = vunpack.c.h.b16 %v960
      %v1597 = vunpack.c.l.b16 %v961
      %v1598 = vunpack.c.h.b16 %v961
      %v1599 = vunpack.c.l.b16 %v962
      %v1600 = vunpack.c.h.b16 %v962
      %v1601 = vunpack.c.l.b16 %v963
      %v1602 = vunpack.c.h.b16 %v963
      %v1603 = vunpack.c.l.b16 %v964
      %v1604 = vunpack.c.h.b16 %v964
      %v1605 = vunpack.c.l.b16 %v965
      %v1606 = vunpack.c.h.b16 %v965
      %v1607 = vunpack.c.l.b16 %v966
      %v1608 = vunpack.c.h.b16 %v966
      %v1609 = vunpack.c.l.b16 %v967
      %v1610 = vunpack.c.h.b16 %v967
      %v1611 = vunpack.c.l.b16 %v968
      %v1612 = vunpack.c.h.b16 %v968
      %v1613 = vunpack.c.l.b16 %v969
      %v1614 = vunpack.c.h.b16 %v969
      %v1615 = vunpack.c.l.b16 %v970
      %v1616 = vunpack.c.h.b16 %v970
      %v1617 = vunpack.c.l.b16 %v971
      %v1618 = vunpack.c.h.b16 %v971
      %v1619 = vunpack.c.l.b16 %v972
      %v1620 = vunpack.c.h.b16 %v972
      %v1621 = vunpack.c.l.b16 %v973
      %v1622 = vunpack.c.h.b16 %v973
      %v1623 = vunpack.c.l.b16 %v974
      %v1624 = vunpack.c.h.b16 %v974
      %v1625 = vunpack.c.l.b16 %v975
      %v1626 = vunpack.c.h.b16 %v975
      %v1627 = vunpack.c.l.b16 %v976
      %v1628 = vunpack.c.h.b16 %v976
      %v1629 = vunpack.c.l.b16 %v977
      %v1630 = vunpack.c.h.b16 %v977
      %v1631 = vunpack.c.l.b16 %v978
      %v1632 = vunpack.c.h.b16 %v978
      %v1633 = vunpack.c.l.b16 %v979
      %v1634 = vunpack.c.h.b16 %v979
      %v1635 = vunpack.c.l.b16 %v980
      %v1636 = vunpack.c.h.b16 %v980
      %v1637 = vunpack.c.l.b16 %v981
      %v1638 = vunpack.c.h.b16 %v981
      %v1639 = vunpack.c.l.b16 %v982
      %v1640 = vunpack.c.h.b16 %v982
      %v1641 = vunpack.c.l.b16 %v983
      %v1642 = vunpack.c.h.b16 %v983
      %v1643 = vunpack.c.l.b16 %v984
      %v1644 = vunpack.c.h.b16 %v984
      %v1645 = vunpack.c.l.b16 %v985
      %v1646 = vunpack.c.h.b16 %v985
      %v1647 = vunpack.c.l.b16 %v986
      %v1648 = vunpack.c.h.b16 %v986
      %v1649 = vunpack.c.l.b16 %v987
      %v1650 = vunpack.c.h.b16 %v987
      %v1651 = vunpack.c.l.b16 %v988
      %v1652 = vunpack.c.h.b16 %v988
      %v1653 = vunpack.c.l.b16 %v989
      %v1654 = vunpack.c.h.b16 %v989
      %v1655 = vunpack.c.l.b16 %v990
      %v1656 = vunpack.c.h.b16 %v990
      %v1657 = vunpack.c.l.b16 %v991
      %v1658 = vunpack.c.h.b16 %v991
      %v1659 = vunpack.c.l.b16 %v992
      %v1660 = vunpack.c.h.b16 %v992
      %v1661 = vunpack.c.l.b16 %v993
      %v1662 = vunpack.c.h.b16 %v993
      %v1663 = vunpack.c.l.b16 %v994
      %v1664 = vunpack.c.h.b16 %v994
      %v1665 = vunpack.c.l.b16 %v995
      %v1666 = vunpack.c.h.b16 %v995
      %v1667 = vunpack.c.l.b16 %v996
      %v1668 = vunpack.c.h.b16 %v996
      %v1669 = vunpack.c.l.b16 %v997
      %v1670 = vunpack.c.h.b16 %v997
      %v1671 = vunpack.c.l.b16 %v998
      %v1672 = vunpack.c.h.b16 %v998
      %v1673 = vunpack.c.l.b16 %v999
      %v1674 = vunpack.c.h.b16 %v999
      %v1675 = vunpack.c.l.b16 %v1000
      %v1676 = vunpack.c.h.b16 %v1000
      %v1677 = vunpack.c.l.b16 %v1001
      %v1678 = vunpack.c.h.b16 %v1001
      %v1679 = vunpack.c.l.b16 %v1002
      %v1680 = vunpack.c.h.b16 %v1002
      %v1681 = vunpack.c.l.b16 %v1003
      %v1682 = vunpack.c.h.b16 %v1003
      %v1683 = vunpack.c.l.b16 %v1004
      %v1684 = vunpack.c.h.b16 %v1004
      %v1685 = vunpack.c.l.b16 %v1005
      %v1686 = vunpack.c.h.b16 %v1005
      %v1687 = vunpack.c.l.b16 %v1006
      %v1688 = vunpack.c.h.b16 %v1006
      %v1689 = vunpack.c.l.b16 %v1007
      %v1690 = vunpack.c.h.b16 %v1007
      %v1691 = vunpack.c.l.b16 %v1008
      %v1692 = vunpack.c.h.b16 %v1008
      %v1693 = vunpack.c.l.b16 %v1009
      %v1694 = vunpack.c.h.b16 %v1009
      %v1695 = vunpack.c.l.b16 %v1010
      %v1696 = vunpack.c.h.b16 %v1010
      %v1697 = vunpack.c.l.b16 %v1011
      %v1698 = vunpack.c.h.b16 %v1011
      %v1699 = vunpack.c.l.b16 %v1012
      %v1700 = vunpack.c.h.b16 %v1012
      %v1701 = vunpack.c.l.b16 %v1013
      %v1702 = vunpack.c.h.b16 %v1013
      %v1703 = vunpack.c.l.b16 %v1014
      %v1704 = vunpack.c.h.b16 %v1014
      %v1705 = vunpack.c.l.b16 %v1015
      %v1706 = vunpack.c.h.b16 %v1015
      %v1707 = vunpack.c.l.b16 %v1016
      %v1708 = vunpack.c.h.b16 %v1016
      %v1709 = vunpack.c.l.b16 %v1017
      %v1710 = vunpack.c.h.b16 %v1017
      %v1711 = vunpack.c.l.b16 %v1018
      %v1712 = vunpack.c.h.b16 %v1018
      %v1713 = vunpack.c.l.b16 %v1019
      %v1714 = vunpack.c.h.b16 %v1019
      %v1715 = vunpack.c.l.b16 %v1020
      %v1716 = vunpack.c.h.b16 %v1020
      %v1717 = vunpack.c.l.b16 %v1021
      %v1718 = vunpack.c.h.b16 %v1021
      %v1719 = vunpack.c.l.b16 %v1022
      %v1720 = vunpack.c.h.b16 %v1022
      %v1721 = vunpack.c.l.b16 %v1023
      %v1722 = vunpack.c.h.b16 %v1023
      %v1723 = vunpack.c.l.b16 %v1024
      %v1724 = vunpack.c.h.b16 %v1024
      %v1725 = vunpack.c.l.b16 %v1025
      %v1726 = vunpack.c.h.b16 %v1025
      %v1727 = vunpack.c.l.b16 %v1026
      %v1728 = vunpack.c.h.b16 %v1026
      %v1729 = vunpack.c.l.b16 %v1027
      %v1730 = vunpack.c.h.b16 %v1027
      %v1731 = vunpack.c.l.b16 %v1028
      %v1732 = vunpack.c.h.b16 %v1028
      %v1733 = vunpack.c.l.b16 %v1029
      %v1734 = vunpack.c.h.b16 %v1029
      %v1735 = vunpack.c.l.b16 %v1030
      %v1736 = vunpack.c.h.b16 %v1030
      %v1737 = vunpack.c.l.b16 %v1031
      %v1738 = vunpack.c.h.b16 %v1031
      %v1739 = vunpack.c.l.b16 %v1032
      %v1740 = vunpack.c.h.b16 %v1032
      %v1741 = vunpack.c.l.b16 %v1033
      %v1742 = vunpack.c.h.b16 %v1033
      %v1743 = vunpack.c.l.b16 %v1034
      %v1744 = vunpack.c.h.b16 %v1034
      %v1745 = vunpack.c.l.b16 %v1035
      %v1746 = vunpack.c.h.b16 %v1035
      %v1747 = vunpack.c.l.b16 %v1036
      %v1748 = vunpack.c.h.b16 %v1036
      %v1749 = vunpack.c.l.b16 %v1037
      %v1750 = vunpack.c.h.b16 %v1037
      %v1751 = vunpack.c.l.b16 %v1038
      %v1752 = vunpack.c.h.b16 %v1038
      %v1753 = vunpack.c.l.b16 %v1039
      %v1754 = vunpack.c.h.b16 %v1039
      %v1755 = vunpack.c.l.b16 %v1040
      %v1756 = vunpack.c.h.b16 %v1040
      %v1757 = vunpack.c.l.b16 %v1041
      %v1758 = vunpack.c.h.b16 %v1041
      %v1759 = vunpack.c.l.b16 %v1042
      %v1760 = vunpack.c.h.b16 %v1042
      %v1761 = vunpack.c.l.b16 %v1043
      %v1762 = vunpack.c.h.b16 %v1043
      %v1763 = vunpack.c.l.b16 %v1044
      %v1764 = vunpack.c.h.b16 %v1044
      %v1765 = vunpack.c.l.b16 %v1045
      %v1766 = vunpack.c.h.b16 %v1045
      %v1767 = vunpack.c.l.b16 %v1046
      %v1768 = vunpack.c.h.b16 %v1046
      %v1769 = vunpack.c.l.b16 %v1047
      %v1770 = vunpack.c.h.b16 %v1047
      %v1771 = vunpack.c.l.b16 %v1048
      %v1772 = vunpack.c.h.b16 %v1048
      %v1773 = vunpack.c.l.b16 %v1049
      %v1774 = vunpack.c.h.b16 %v1049
      %v1775 = vunpack.c.l.b16 %v1050
      %v1776 = vunpack.c.h.b16 %v1050
      %v1777 = vunpack.c.l.b16 %v1051
      %v1778 = vunpack.c.h.b16 %v1051
      %v1779 = vunpack.c.l.b16 %v1052
      %v1780 = vunpack.c.h.b16 %v1052
      %v1781 = vunpack.c.l.b16 %v1053
      %v1782 = vunpack.c.h.b16 %v1053
      %v1783 = vunpack.c.l.b16 %v1054
      %v1784 = vunpack.c.h.b16 %v1054
      %v1785 = vunpack.c.l.b16 %v1055
      %v1786 = vunpack.c.h.b16 %v1055
      %v1787 = vunpack.c.l.b16 %v1056
      %v1788 = vunpack.c.h.b16 %v1056
      %v1789 = vunpack.c.l.b16 %v1057
      %v1790 = vunpack.c.h.b16 %v1057
      %v1791 = vunpack.c.l.b16 %v1058
      %v1792 = vunpack.c.h.b16 %v1058
      %v1793 = vunpack.c.l.b16 %v1059
      %v1794 = vunpack.c.h.b16 %v1059
      %v1795 = vunpack.c.l.b16 %v1060
      %v1796 = vunpack.c.h.b16 %v1060
      %v1797 = vunpack.c.l.b16 %v1061
      %v1798 = vunpack.c.h.b16 %v1061
      %v1799 = vunpack.c.l.b16 %v1062
      %v1800 = vunpack.c.h.b16 %v1062
      %v1801 = vunpack.c.l.b16 %v1063
      %v1802 = vunpack.c.h.b16 %v1063
      %v1803 = vunpack.c.l.b16 %v1064
      %v1804 = vunpack.c.h.b16 %v1064
      %v1805 = vunpack.c.l.b16 %v1065
      %v1806 = vunpack.c.h.b16 %v1065
      %v1807 = vunpack.c.l.b16 %v1066
      %v1808 = vunpack.c.h.b16 %v1066
      %v1809 = vunpack.c.l.b16 %v1067
      %v1810 = vunpack.c.h.b16 %v1067
      %v1811 = vunpack.c.l.b16 %v1068
      %v1812 = vunpack.c.h.b16 %v1068
      %v1813 = vunpack.c.l.b16 %v1069
      %v1814 = vunpack.c.h.b16 %v1069
      %v1815 = vunpack.c.l.b16 %v1070
      %v1816 = vunpack.c.h.b16 %v1070
      %v1817 = vunpack.c.l.b16 %v1071
      %v1818 = vunpack.c.h.b16 %v1071
      %v1819 = vunpack.c.l.b16 %v1072
      %v1820 = vunpack.c.h.b16 %v1072
      %v1821 = vunpack.c.l.b16 %v1073
      %v1822 = vunpack.c.h.b16 %v1073
      %v1823 = vunpack.c.l.b16 %v1074
      %v1824 = vunpack.c.h.b16 %v1074
      %v1825 = vunpack.c.l.b16 %v1075
      %v1826 = vunpack.c.h.b16 %v1075
      %v1827 = vunpack.c.l.b16 %v1076
      %v1828 = vunpack.c.h.b16 %v1076
      %v1829 = vunpack.c.l.b16 %v1077
      %v1830 = vunpack.c.h.b16 %v1077
      %v1831 = vunpack.c.l.b16 %v1078
      %v1832 = vunpack.c.h.b16 %v1078
      %v1833 = vunpack.c.l.b16 %v1079
      %v1834 = vunpack.c.h.b16 %v1079
      %v1835 = vunpack.c.l.b16 %v1080
      %v1836 = vunpack.c.h.b16 %v1080
      %v1837 = vunpack.c.l.b16 %v1081
      %v1838 = vunpack.c.h.b16 %v1081
      %v1839 = vunpack.c.l.b16 %v1082
      %v1840 = vunpack.c.h.b16 %v1082
      %v1841 = vunpack.c.l.b16 %v1083
      %v1842 = vunpack.c.h.b16 %v1083
      %v1843 = vunpack.c.l.b16 %v1084
      %v1844 = vunpack.c.h.b16 %v1084
      %v1845 = vunpack.c.l.b16 %v1085
      %v1846 = vunpack.c.h.b16 %v1085
      %v1847 = vunpack.c.l.b16 %v1086
      %v1848 = vunpack.c.h.b16 %v1086
      %v1849 = vunpack.c.l.b16 %v1087
      %v1850 = vunpack.c.h.b16 %v1087
      %v1851 = vunpack.c.l.b16 %v1088
      %v1852 = vunpack.c.h.b16 %v1088
      %v1853 = vunpack.c.l.b16 %v1089
      %v1854 = vunpack.c.h.b16 %v1089
      %v1855 = vunpack.c.l.b16 %v1090
      %v1856 = vunpack.c.h.b16 %v1090
      %v1857 = vunpack.c.l.b16 %v1091
      %v1858 = vunpack.c.h.b16 %v1091
      %v1859 = vunpack.c.l.b16 %v1092
      %v1860 = vunpack.c.h.b16 %v1092
      %v1861 = vunpack.c.l.b16 %v1093
      %v1862 = vunpack.c.h.b16 %v1093
      %v1863 = vunpack.c.l.b16 %v1094
      %v1864 = vunpack.c.h.b16 %v1094
      %v1865 = vunpack.c.l.b16 %v1095
      %v1866 = vunpack.c.h.b16 %v1095
      %v1867 = vunpack.c.l.b16 %v1096
      %v1868 = vunpack.c.h.b16 %v1096
      %v1869 = vunpack.c.l.b16 %v1097
      %v1870 = vunpack.c.h.b16 %v1097
      %v1871 = vunpack.c.l.b16 %v1098
      %v1872 = vunpack.c.h.b16 %v1098
      %v1873 = vunpack.c.l.b16 %v1099
      %v1874 = vunpack.c.h.b16 %v1099
      %v1875 = vunpack.c.l.b16 %v1100
      %v1876 = vunpack.c.h.b16 %v1100
      %v1877 = vunpack.c.l.b16 %v1101
      %v1878 = vunpack.c.h.b16 %v1101
      %v1879 = vunpack.c.l.b16 %v1102
      %v1880 = vunpack.c.h.b16 %v1102
      %v1881 = vunpack.c.l.b16 %v1103
      %v1882 = vunpack.c.h.b16 %v1103
      %v1883 = vunpack.c.l.b16 %v1104
      %v1884 = vunpack.c.h.b16 %v1104
      %v1885 = vunpack.c.l.b16 %v1105
      %v1886 = vunpack.c.h.b16 %v1105
      %v1887 = vunpack.c.l.b16 %v1106
      %v1888 = vunpack.c.h.b16 %v1106
      %v1889 = vunpack.c.l.b16 %v1107
      %v1890 = vunpack.c.h.b16 %v1107
      %v1891 = vunpack.c.l.b16 %v1108
      %v1892 = vunpack.c.h.b16 %v1108
      %v1893 = vunpack.c.l.b16 %v1109
      %v1894 = vunpack.c.h.b16 %v1109
      %v1895 = vunpack.c.l.b16 %v1110
      %v1896 = vunpack.c.h.b16 %v1110
      %v1897 = vpack.c.b16 %v1393, %v1385
      %v1898 = vpack.c.b16 %v1394, %v1386
      %v1899 = vpack.c.b16 %v1395, %v1387
      %v1900 = vpack.c.b16 %v1396, %v1388
      %v1901 = vpack.c.b16 %v1397, %v1389
      %v1902 = vpack.c.b16 %v1398, %v1390
      %v1903 = vpack.c.b16 %v1399, %v1391
      %v1904 = vpack.c.b16 %v1400, %v1392
      %v1905 = vpack.c.b16 %v1409, %v1401
      %v1906 = vpack.c.b16 %v1410, %v1402
      %v1907 = vpack.c.b16 %v1411, %v1403
      %v1908 = vpack.c.b16 %v1412, %v1404
      %v1909 = vpack.c.b16 %v1413, %v1405
      %v1910 = vpack.c.b16 %v1414, %v1406
      %v1911 = vpack.c.b16 %v1415, %v1407
      %v1912 = vpack.c.b16 %v1416, %v1408
      %v1913 = vpack.c.b16 %v1425, %v1417
      %v1914 = vpack.c.b16 %v1426, %v1418
      %v1915 = vpack.c.b16 %v1427, %v1419
      %v1916 = vpack.c.b16 %v1428, %v1420
      %v1917 = vpack.c.b16 %v1429, %v1421
      %v1918 = vpack.c.b16 %v1430, %v1422
      %v1919 = vpack.c.b16 %v1431, %v1423
      %v1920 = vpack.c.b16 %v1432, %v1424
      %v1921 = vpack.c.b16 %v1441, %v1433
      %v1922 = vpack.c.b16 %v1442, %v1434
      %v1923 = vpack.c.b16 %v1443, %v1435
      %v1924 = vpack.c.b16 %v1444, %v1436
      %v1925 = vpack.c.b16 %v1445, %v1437
      %v1926 = vpack.c.b16 %v1446, %v1438
      %v1927 = vpack.c.b16 %v1447, %v1439
      %v1928 = vpack.c.b16 %v1448, %v1440
      %v1929 = vpack.c.b16 %v1457, %v1449
      %v1930 = vpack.c.b16 %v1458, %v1450
      %v1931 = vpack.c.b16 %v1459, %v1451
      %v1932 = vpack.c.b16 %v1460, %v1452
      %v1933 = vpack.c.b16 %v1461, %v1453
      %v1934 = vpack.c.b16 %v1462, %v1454
      %v1935 = vpack.c.b16 %v1463, %v1455
      %v1936 = vpack.c.b16 %v1464, %v1456
      %v1937 = vpack.c.b16 %v1473, %v1465
      %v1938 = vpack.c.b16 %v1474, %v1466
      %v1939 = vpack.c.b16 %v1475, %v1467
      %v1940 = vpack.c.b16 %v1476, %v1468
      %v1941 = vpack.c.b16 %v1477, %v1469
      %v1942 = vpack.c.b16 %v1478, %v1470
      %v1943 = vpack.c.b16 %v1479, %v1471
      %v1944 = vpack.c.b16 %v1480, %v1472
      %v1945 = vpack.c.b16 %v1489, %v1481
      %v1946 = vpack.c.b16 %v1490, %v1482
      %v1947 = vpack.c.b16 %v1491, %v1483
      %v1948 = vpack.c.b16 %v1492, %v1484
      %v1949 = vpack.c.b16 %v1493, %v1485
      %v1950 = vpack.c.b16 %v1494, %v1486
      %v1951 = vpack.c.b16 %v1495, %v1487
      %v1952 = vpack.c.b16 %v1496, %v1488
      %v1953 = vpack.c.b16 %v1505, %v1497
      %v1954 = vpack.c.b16 %v1506, %v1498
      %v1955 = vpack.c.b16 %v1507, %v1499
      %v1956 = vpack.c.b16 %v1508, %v1500
      %v1957 = vpack.c.b16 %v1509, %v1501
      %v1958 = vpack.c.b16 %v1510, %v1502
      %v1959 = vpack.c.b16 %v1511, %v1503
      %v1960 = vpack.c.b16 %v1512, %v1504
      %v1961 = vpack.c.b16 %v1521, %v1513
      %v1962 = vpack.c.b16 %v1522, %v1514
      %v1963 = vpack.c.b16 %v1523, %v1515
      %v1964 = vpack.c.b16 %v1524, %v1516
      %v1965 = vpack.c.b16 %v1525, %v1517
      %v1966 = vpack.c.b16 %v1526, %v1518
      %v1967 = vpack.c.b16 %v1527, %v1519
      %v1968 = vpack.c.b16 %v1528, %v1520
      %v1969 = vpack.c.b16 %v1537, %v1529
      %v1970 = vpack.c.b16 %v1538, %v1530
      %v1971 = vpack.c.b16 %v1539, %v1531
      %v1972 = vpack.c.b16 %v1540, %v1532
      %v1973 = vpack.c.b16 %v1541, %v1533
      %v1974 = vpack.c.b16 %v1542, %v1534
      %v1975 = vpack.c.b16 %v1543, %v1535
      %v1976 = vpack.c.b16 %v1544, %v1536
      %v1977 = vpack.c.b16 %v1553, %v1545
      %v1978 = vpack.c.b16 %v1554, %v1546
      %v1979 = vpack.c.b16 %v1555, %v1547
      %v1980 = vpack.c.b16 %v1556, %v1548
      %v1981 = vpack.c.b16 %v1557, %v1549
      %v1982 = vpack.c.b16 %v1558, %v1550
      %v1983 = vpack.c.b16 %v1559, %v1551
      %v1984 = vpack.c.b16 %v1560, %v1552
      %v1985 = vpack.c.b16 %v1569, %v1561
      %v1986 = vpack.c.b16 %v1570, %v1562
      %v1987 = vpack.c.b16 %v1571, %v1563
      %v1988 = vpack.c.b16 %v1572, %v1564
      %v1989 = vpack.c.b16 %v1573, %v1565
      %v1990 = vpack.c.b16 %v1574, %v1566
      %v1991 = vpack.c.b16 %v1575, %v1567
      %v1992 = vpack.c.b16 %v1576, %v1568
      %v1993 = vpack.c.b16 %v1585, %v1577
      %v1994 = vpack.c.b16 %v1586, %v1578
      %v1995 = vpack.c.b16 %v1587, %v1579
      %v1996 = vpack.c.b16 %v1588, %v1580
      %v1997 = vpack.c.b16 %v1589, %v1581
      %v1998 = vpack.c.b16 %v1590, %v1582
      %v1999 = vpack.c.b16 %v1591, %v1583
      %v2000 = vpack.c.b16 %v1592, %v1584
      %v2001 = vpack.c.b16 %v1601, %v1593
      %v2002 = vpack.c.b16 %v1602, %v1594
      %v2003 = vpack.c.b16 %v1603, %v1595
      %v2004 = vpack.c.b16 %v1604, %v1596
      %v2005 = vpack.c.b16 %v1605, %v1597
      %v2006 = vpack.c.b16 %v1606, %v1598
      %v2007 = vpack.c.b16 %v1607, %v1599
      %v2008 = vpack.c.b16 %v1608, %v1600
      %v2009 = vpack.c.b16 %v1617, %v1609
      %v2010 = vpack.c.b16 %v1618, %v1610
      %v2011 = vpack.c.b16 %v1619, %v1611
      %v2012 = vpack.c.b16 %v1620, %v1612
      %v2013 = vpack.c.b16 %v1621, %v1613
      %v2014 = vpack.c.b16 %v1622, %v1614
      %v2015 = vpack.c.b16 %v1623, %v1615
      %v2016 = vpack.c.b16 %v1624, %v1616
      %v2017 = vpack.c.b16 %v1633, %v1625
      %v2018 = vpack.c.b16 %v1634, %v1626
      %v2019 = vpack.c.b16 %v1635, %v1627
      %v2020 = vpack.c.b16 %v1636, %v1628
      %v2021 = vpack.c.b16 %v1637, %v1629
      %v2022 = vpack.c.b16 %v1638, %v1630
      %v2023 = vpack.c.b16 %v1639, %v1631
      %v2024 = vpack.c.b16 %v1640, %v1632
      %v2025 = vpack.c.b16 %v1649, %v1641
      %v2026 = vpack.c.b16 %v1650, %v1642
      %v2027 = vpack.c.b16 %v1651, %v1643
      %v2028 = vpack.c.b16 %v1652, %v1644
      %v2029 = vpack.c.b16 %v1653, %v1645
      %v2030 = vpack.c.b16 %v1654, %v1646
      %v2031 = vpack.c.b16 %v1655, %v1647
      %v2032 = vpack.c.b16 %v1656, %v1648
      %v2033 = vpack.c.b16 %v1665, %v1657
      %v2034 = vpack.c.b16 %v1666, %v1658
      %v2035 = vpack.c.b16 %v1667, %v1659
      %v2036 = vpack.c.b16 %v1668, %v1660
      %v2037 = vpack.c.b16 %v1669, %v1661
      %v2038 = vpack.c.b16 %v1670, %v1662
      %v2039 = vpack.c.b16 %v1671, %v1663
      %v2040 = vpack.c.b16 %v1672, %v1664
      %v2041 = vpack.c.b16 %v1681, %v1673
      %v2042 = vpack.c.b16 %v1682, %v1674
      %v2043 = vpack.c.b16 %v1683, %v1675
      %v2044 = vpack.c.b16 %v1684, %v1676
      %v2045 = vpack.c.b16 %v1685, %v1677
      %v2046 = vpack.c.b16 %v1686, %v1678
      %v2047 = vpack.c.b16 %v1687, %v1679
      %v2048 = vpack.c.b16 %v1688, %v1680
      %v2049 = vpack.c.b16 %v1697, %v1689
      %v2050 = vpack.c.b16 %v1698, %v1690
      %v2051 = vpack.c.b16 %v1699, %v1691
      %v2052 = vpack.c.b16 %v1700, %v1692
      %v2053 = vpack.c.b16 %v1701, %v1693
      %v2054 = vpack.c.b16 %v1702, %v1694
      %v2055 = vpack.c.b16 %v1703, %v1695
      %v2056 = vpack.c.b16 %v1704, %v1696
      %v2057 = vpack.c.b16 %v1713, %v1705
      %v2058 = vpack.c.b16 %v1714, %v1706
      %v2059 = vpack.c.b16 %v1715, %v1707
      %v2060 = vpack.c.b16 %v1716, %v1708
      %v2061 = vpack.c.b16 %v1717, %v1709
      %v2062 = vpack.c.b16 %v1718, %v1710
      %v2063 = vpack.c.b16 %v1719, %v1711
      %v2064 = vpack.c.b16 %v1720, %v1712
      %v2065 = vpack.c.b16 %v1729, %v1721
      %v2066 = vpack.c.b16 %v1730, %v1722
      %v2067 = vpack.c.b16 %v1731, %v1723
      %v2068 = vpack.c.b16 %v1732, %v1724
      %v2069 = vpack.c.b16 %v1733, %v1725
      %v2070 = vpack.c.b16 %v1734, %v1726
      %v2071 = vpack.c.b16 %v1735, %v1727
      %v2072 = vpack.c.b16 %v1736, %v1728
      %v2073 = vpack.c.b16 %v1745, %v1737
      %v2074 = vpack.c.b16 %v1746, %v1738
      %v2075 = vpack.c.b16 %v1747, %v1739
      %v2076 = vpack.c.b16 %v1748, %v1740
      %v2077 = vpack.c.b16 %v1749, %v1741
      %v2078 = vpack.c.b16 %v1750, %v1742
      %v2079 = vpack.c.b16 %v1751, %v1743
      %v2080 = vpack.c.b16 %v1752, %v1744
      %v2081 = vpack.c.b16 %v1761, %v1753
      %v2082 = vpack.c.b16 %v1762, %v1754
      %v2083 = vpack.c.b16 %v1763, %v1755
      %v2084 = vpack.c.b16 %v1764, %v1756
      %v2085 = vpack.c.b16 %v1765, %v1757
      %v2086 = vpack.c.b16 %v1766, %v1758
      %v2087 = vpack.c.b16 %v1767, %v1759
      %v2088 = vpack.c.b16 %v1768, %v1760
      %v2089 = vpack.c.b16 %v1777, %v1769
      %v2090 = vpack.c.b16 %v1778, %v1770
      %v2091 = vpack.c.b16 %v1779, %v1771
      %v2092 = vpack.c.b16 %v1780, %v1772
      %v2093 = vpack.c.b16 %v1781, %v1773
      %v2094 = vpack.c.b16 %v1782, %v1774
      %v2095 = vpack.c.b16 %v1783, %v1775
      %v2096 = vpack.c.b16 %v1784, %v1776
      %v2097 = vpack.c.b16 %v1793, %v1785
      %v2098 = vpack.c.b16 %v1794, %v1786
      %v2099 = vpack.c.b16 %v1795, %v1787
      %v2100 = vpack.c.b16 %v1796, %v1788
      %v2101 = vpack.c.b16 %v1797, %v1789
      %v2102 = vpack.c.b16 %v1798, %v1790
      %v2103 = vpack.c.b16 %v1799, %v1791
      %v2104 = vpack.c.b16 %v1800, %v1792
      %v2105 = vpack.c.b16 %v1809, %v1801
      %v2106 = vpack.c.b16 %v1810, %v1802
      %v2107 = vpack.c.b16 %v1811, %v1803
      %v2108 = vpack.c.b16 %v1812, %v1804
      %v2109 = vpack.c.b16 %v1813, %v1805
      %v2110 = vpack.c.b16 %v1814, %v1806
      %v2111 = vpack.c.b16 %v1815, %v1807
      %v2112 = vpack.c.b16 %v1816, %v1808
      %v2113 = vpack.c.b16 %v1825, %v1817
      %v2114 = vpack.c.b16 %v1826, %v1818
      %v2115 = vpack.c.b16 %v1827, %v1819
      %v2116 = vpack.c.b16 %v1828, %v1820
      %v2117 = vpack.c.b16 %v1829, %v1821
      %v2118 = vpack.c.b16 %v1830, %v1822
      %v2119 = vpack.c.b16 %v1831, %v1823
      %v2120 = vpack.c.b16 %v1832, %v1824
      %v2121 = vpack.c.b16 %v1841, %v1833
      %v2122 = vpack.c.b16 %v1842, %v1834
      %v2123 = vpack.c.b16 %v1843, %v1835
      %v2124 = vpack.c.b16 %v1844, %v1836
      %v2125 = vpack.c.b16 %v1845, %v1837
      %v2126 = vpack.c.b16 %v1846, %v1838
      %v2127 = vpack.c.b16 %v1847, %v1839
      %v2128 = vpack.c.b16 %v1848, %v1840
      %v2129 = vpack.c.b16 %v1857, %v1849
      %v2130 = vpack.c.b16 %v1858, %v1850
      %v2131 = vpack.c.b16 %v1859, %v1851
      %v2132 = vpack.c.b16 %v1860, %v1852
      %v2133 = vpack.c.b16 %v1861, %v1853
      %v2134 = vpack.c.b16 %v1862, %v1854
      %v2135 = vpack.c.b16 %v1863, %v1855
      %v2136 = vpack.c.b16 %v1864, %v1856
      %v2137 = vpack.c.b16 %v1873, %v1865
      %v2138 = vpack.c.b16 %v1874, %v1866
      %v2139 = vpack.c.b16 %v1875, %v1867
      %v2140 = vpack.c.b16 %v1876, %v1868
      %v2141 = vpack.c.b16 %v1877, %v1869
      %v2142 = vpack.c.b16 %v1878, %v1870
      %v2143 = vpack.c.b16 %v1879, %v1871
      %v2144 = vpack.c.b16 %v1880, %v1872
      %v2145 = vpack.c.b16 %v1889, %v1881
      %v2146 = vpack.c.b16 %v1890, %v1882
      %v2147 = vpack.c.b16 %v1891, %v1883
      %v2148 = vpack.c.b16 %v1892, %v1884
      %v2149 = vpack.c.b16 %v1893, %v1885
      %v2150 = vpack.c.b16 %v1894, %v1886
      %v2151 = vpack.c.b16 %v1895, %v1887
      %v2152 = vpack.c.b16 %v1896, %v1888
      %2409 = vmatpush.bf16.msra.mxu0 %v1953
      %2410 = vmatpush.bf16.msra.mxu0 %v1945
      %2411 = vmatpush.bf16.msra.mxu0 %v1937
      %2412 = vmatpush.bf16.msra.mxu0 %v1929
      %2413 = vmatpush.bf16.msra.mxu0 %v1921
      %2414 = vmatpush.bf16.msra.mxu0 %v1913
      %2415 = vmatpush.bf16.msra.mxu0 %v1905
      %2416 = vmatpush.bf16.msra.mxu0 %v1897
      %2417 = vmatmul.bf16.gmra.mxu0 %v851
      %v2418 = vpop.f32.mrf.mxu0
      %v2419 = vadd.f32 %v1113, %v2418
      %v2420 = vpop.f32.mrf.mxu0
      %v2421 = vadd.f32 %v1113, %v2420
      %2422 = vdwg.mxu0
      %2423 = vmatpush.bf16.msra.mxu0 %v2017
      %2424 = vmatpush.bf16.msra.mxu0 %v2009
      %2425 = vmatpush.bf16.msra.mxu0 %v2001
      %2426 = vmatpush.bf16.msra.mxu0 %v1993
      %2427 = vmatpush.bf16.msra.mxu0 %v1985
      %2428 = vmatpush.bf16.msra.mxu0 %v1977
      %2429 = vmatpush.bf16.msra.mxu0 %v1969
      %2430 = vmatpush.bf16.msra.mxu0 %v1961
      %2431 = vmatmul.bf16.gmra.mxu0 %v852
      %v2432 = vpop.f32.mrf.mxu0
      %v2433 = vadd.f32 %v2419, %v2432
      %v2434 = vpop.f32.mrf.mxu0
      %v2435 = vadd.f32 %v2421, %v2434
      %2436 = vdwg.mxu0
      %2437 = vmatpush.bf16.msra.mxu0 %v2081
      %2438 = vmatpush.bf16.msra.mxu0 %v2073
      %2439 = vmatpush.bf16.msra.mxu0 %v2065
      %2440 = vmatpush.bf16.msra.mxu0 %v2057
      %2441 = vmatpush.bf16.msra.mxu0 %v2049
      %2442 = vmatpush.bf16.msra.mxu0 %v2041
      %2443 = vmatpush.bf16.msra.mxu0 %v2033
      %2444 = vmatpush.bf16.msra.mxu0 %v2025
      %2445 = vmatmul.bf16.gmra.mxu0 %v853
      %v2446 = vpop.f32.mrf.mxu0
      %v2447 = vadd.f32 %v2433, %v2446
      %v2448 = vpop.f32.mrf.mxu0
      %v2449 = vadd.f32 %v2435, %v2448
      %2450 = vdwg.mxu0
      %2451 = vmatpush.bf16.msra.mxu0 %v2145
      %2452 = vmatpush.bf16.msra.mxu0 %v2137
      %2453 = vmatpush.bf16.msra.mxu0 %v2129
      %2454 = vmatpush.bf16.msra.mxu0 %v2121
      %2455 = vmatpush.bf16.msra.mxu0 %v2113
      %2456 = vmatpush.bf16.msra.mxu0 %v2105
      %2457 = vmatpush.bf16.msra.mxu0 %v2097
      %2458 = vmatpush.bf16.msra.mxu0 %v2089
      %2459 = vmatmul.bf16.gmra.mxu0 %v854
      %v2460 = vpop.f32.mrf.mxu0
      %v2461 = vadd.f32 %v2447, %v2460
      %v2462 = vpop.f32.mrf.mxu0
      %v2463 = vadd.f32 %v2449, %v2462
      %2464 = vdwg.mxu0
      %2465 = vmatpush.bf16.msra.mxu0 %v1954
      %2466 = vmatpush.bf16.msra.mxu0 %v1946
      %2467 = vmatpush.bf16.msra.mxu0 %v1938
      %2468 = vmatpush.bf16.msra.mxu0 %v1930
      %2469 = vmatpush.bf16.msra.mxu0 %v1922
      %2470 = vmatpush.bf16.msra.mxu0 %v1914
      %2471 = vmatpush.bf16.msra.mxu0 %v1906
      %2472 = vmatpush.bf16.msra.mxu0 %v1898
      %2473 = vmatmul.bf16.gmra.mxu0 %v851
      %v2474 = vpop.f32.mrf.mxu0
      %v2475 = vadd.f32 %v1114, %v2474
      %v2476 = vpop.f32.mrf.mxu0
      %v2477 = vadd.f32 %v1114, %v2476
      %2478 = vdwg.mxu0
      %2479 = vmatpush.bf16.msra.mxu0 %v2018
      %2480 = vmatpush.bf16.msra.mxu0 %v2010
      %2481 = vmatpush.bf16.msra.mxu0 %v2002
      %2482 = vmatpush.bf16.msra.mxu0 %v1994
      %2483 = vmatpush.bf16.msra.mxu0 %v1986
      %2484 = vmatpush.bf16.msra.mxu0 %v1978
      %2485 = vmatpush.bf16.msra.mxu0 %v1970
      %2486 = vmatpush.bf16.msra.mxu0 %v1962
      %2487 = vmatmul.bf16.gmra.mxu0 %v852
      %v2488 = vpop.f32.mrf.mxu0
      %v2489 = vadd.f32 %v2475, %v2488
      %v2490 = vpop.f32.mrf.mxu0
      %v2491 = vadd.f32 %v2477, %v2490
      %2492 = vdwg.mxu0
      %2493 = vmatpush.bf16.msra.mxu0 %v2082
      %2494 = vmatpush.bf16.msra.mxu0 %v2074
      %2495 = vmatpush.bf16.msra.mxu0 %v2066
      %2496 = vmatpush.bf16.msra.mxu0 %v2058
      %2497 = vmatpush.bf16.msra.mxu0 %v2050
      %2498 = vmatpush.bf16.msra.mxu0 %v2042
      %2499 = vmatpush.bf16.msra.mxu0 %v2034
      %2500 = vmatpush.bf16.msra.mxu0 %v2026
      %2501 = vmatmul.bf16.gmra.mxu0 %v853
      %v2502 = vpop.f32.mrf.mxu0
      %v2503 = vadd.f32 %v2489, %v2502
      %v2504 = vpop.f32.mrf.mxu0
      %v2505 = vadd.f32 %v2491, %v2504
      %2506 = vdwg.mxu0
      %2507 = vmatpush.bf16.msra.mxu0 %v2146
      %2508 = vmatpush.bf16.msra.mxu0 %v2138
      %2509 = vmatpush.bf16.msra.mxu0 %v2130
      %2510 = vmatpush.bf16.msra.mxu0 %v2122
      %2511 = vmatpush.bf16.msra.mxu0 %v2114
      %2512 = vmatpush.bf16.msra.mxu0 %v2106
      %2513 = vmatpush.bf16.msra.mxu0 %v2098
      %2514 = vmatpush.bf16.msra.mxu0 %v2090
      %2515 = vmatmul.bf16.gmra.mxu0 %v854
      %v2516 = vpop.f32.mrf.mxu0
      %v2517 = vadd.f32 %v2503, %v2516
      %v2518 = vpop.f32.mrf.mxu0
      %v2519 = vadd.f32 %v2505, %v2518
      %2520 = vdwg.mxu0
      %2521 = vmatpush.bf16.msra.mxu0 %v1955
      %2522 = vmatpush.bf16.msra.mxu0 %v1947
      %2523 = vmatpush.bf16.msra.mxu0 %v1939
      %2524 = vmatpush.bf16.msra.mxu0 %v1931
      %2525 = vmatpush.bf16.msra.mxu0 %v1923
      %2526 = vmatpush.bf16.msra.mxu0 %v1915
      %2527 = vmatpush.bf16.msra.mxu0 %v1907
      %2528 = vmatpush.bf16.msra.mxu0 %v1899
      %2529 = vmatmul.bf16.gmra.mxu0 %v851
      %v2530 = vpop.f32.mrf.mxu0
      %v2531 = vadd.f32 %v1115, %v2530
      %v2532 = vpop.f32.mrf.mxu0
      %v2533 = vadd.f32 %v1115, %v2532
      %2534 = vdwg.mxu0
      %2535 = vmatpush.bf16.msra.mxu0 %v2019
      %2536 = vmatpush.bf16.msra.mxu0 %v2011
      %2537 = vmatpush.bf16.msra.mxu0 %v2003
      %2538 = vmatpush.bf16.msra.mxu0 %v1995
      %2539 = vmatpush.bf16.msra.mxu0 %v1987
      %2540 = vmatpush.bf16.msra.mxu0 %v1979
      %2541 = vmatpush.bf16.msra.mxu0 %v1971
      %2542 = vmatpush.bf16.msra.mxu0 %v1963
      %2543 = vmatmul.bf16.gmra.mxu0 %v852
      %v2544 = vpop.f32.mrf.mxu0
      %v2545 = vadd.f32 %v2531, %v2544
      %v2546 = vpop.f32.mrf.mxu0
      %v2547 = vadd.f32 %v2533, %v2546
      %2548 = vdwg.mxu0
      %2549 = vmatpush.bf16.msra.mxu0 %v2083
      %2550 = vmatpush.bf16.msra.mxu0 %v2075
      %2551 = vmatpush.bf16.msra.mxu0 %v2067
      %2552 = vmatpush.bf16.msra.mxu0 %v2059
      %2553 = vmatpush.bf16.msra.mxu0 %v2051
      %2554 = vmatpush.bf16.msra.mxu0 %v2043
      %2555 = vmatpush.bf16.msra.mxu0 %v2035
      %2556 = vmatpush.bf16.msra.mxu0 %v2027
      %2557 = vmatmul.bf16.gmra.mxu0 %v853
      %v2558 = vpop.f32.mrf.mxu0
      %v2559 = vadd.f32 %v2545, %v2558
      %v2560 = vpop.f32.mrf.mxu0
      %v2561 = vadd.f32 %v2547, %v2560
      %2562 = vdwg.mxu0
      %2563 = vmatpush.bf16.msra.mxu0 %v2147
      %2564 = vmatpush.bf16.msra.mxu0 %v2139
      %2565 = vmatpush.bf16.msra.mxu0 %v2131
      %2566 = vmatpush.bf16.msra.mxu0 %v2123
      %2567 = vmatpush.bf16.msra.mxu0 %v2115
      %2568 = vmatpush.bf16.msra.mxu0 %v2107
      %2569 = vmatpush.bf16.msra.mxu0 %v2099
      %2570 = vmatpush.bf16.msra.mxu0 %v2091
      %2571 = vmatmul.bf16.gmra.mxu0 %v854
      %v2572 = vpop.f32.mrf.mxu0
      %v2573 = vadd.f32 %v2559, %v2572
      %v2574 = vpop.f32.mrf.mxu0
      %v2575 = vadd.f32 %v2561, %v2574
      %2576 = vdwg.mxu0
      %2577 = vmatpush.bf16.msra.mxu0 %v1956
      %2578 = vmatpush.bf16.msra.mxu0 %v1948
      %2579 = vmatpush.bf16.msra.mxu0 %v1940
      %2580 = vmatpush.bf16.msra.mxu0 %v1932
      %2581 = vmatpush.bf16.msra.mxu0 %v1924
      %2582 = vmatpush.bf16.msra.mxu0 %v1916
      %2583 = vmatpush.bf16.msra.mxu0 %v1908
      %2584 = vmatpush.bf16.msra.mxu0 %v1900
      %2585 = vmatmul.bf16.gmra.mxu0 %v851
      %v2586 = vpop.f32.mrf.mxu0
      %v2587 = vadd.f32 %v1116, %v2586
      %v2588 = vpop.f32.mrf.mxu0
      %v2589 = vadd.f32 %v1116, %v2588
      %2590 = vdwg.mxu0
      %2591 = vmatpush.bf16.msra.mxu0 %v2020
      %2592 = vmatpush.bf16.msra.mxu0 %v2012
      %2593 = vmatpush.bf16.msra.mxu0 %v2004
      %2594 = vmatpush.bf16.msra.mxu0 %v1996
      %2595 = vmatpush.bf16.msra.mxu0 %v1988
      %2596 = vmatpush.bf16.msra.mxu0 %v1980
      %2597 = vmatpush.bf16.msra.mxu0 %v1972
      %2598 = vmatpush.bf16.msra.mxu0 %v1964
      %2599 = vmatmul.bf16.gmra.mxu0 %v852
      %v2600 = vpop.f32.mrf.mxu0
      %v2601 = vadd.f32 %v2587, %v2600
      %v2602 = vpop.f32.mrf.mxu0
      %v2603 = vadd.f32 %v2589, %v2602
      %2604 = vdwg.mxu0
      %2605 = vmatpush.bf16.msra.mxu0 %v2084
      %2606 = vmatpush.bf16.msra.mxu0 %v2076
      %2607 = vmatpush.bf16.msra.mxu0 %v2068
      %2608 = vmatpush.bf16.msra.mxu0 %v2060
      %2609 = vmatpush.bf16.msra.mxu0 %v2052
      %2610 = vmatpush.bf16.msra.mxu0 %v2044
      %2611 = vmatpush.bf16.msra.mxu0 %v2036
      %2612 = vmatpush.bf16.msra.mxu0 %v2028
      %2613 = vmatmul.bf16.gmra.mxu0 %v853
      %v2614 = vpop.f32.mrf.mxu0
      %v2615 = vadd.f32 %v2601, %v2614
      %v2616 = vpop.f32.mrf.mxu0
      %v2617 = vadd.f32 %v2603, %v2616
      %2618 = vdwg.mxu0
      %2619 = vmatpush.bf16.msra.mxu0 %v2148
      %2620 = vmatpush.bf16.msra.mxu0 %v2140
      %2621 = vmatpush.bf16.msra.mxu0 %v2132
      %2622 = vmatpush.bf16.msra.mxu0 %v2124
      %2623 = vmatpush.bf16.msra.mxu0 %v2116
      %2624 = vmatpush.bf16.msra.mxu0 %v2108
      %2625 = vmatpush.bf16.msra.mxu0 %v2100
      %2626 = vmatpush.bf16.msra.mxu0 %v2092
      %2627 = vmatmul.bf16.gmra.mxu0 %v854
      %v2628 = vpop.f32.mrf.mxu0
      %v2629 = vadd.f32 %v2615, %v2628
      %v2630 = vpop.f32.mrf.mxu0
      %v2631 = vadd.f32 %v2617, %v2630
      %2632 = vdwg.mxu0
      %2633 = vmatpush.bf16.msra.mxu0 %v1957
      %2634 = vmatpush.bf16.msra.mxu0 %v1949
      %2635 = vmatpush.bf16.msra.mxu0 %v1941
      %2636 = vmatpush.bf16.msra.mxu0 %v1933
      %2637 = vmatpush.bf16.msra.mxu0 %v1925
      %2638 = vmatpush.bf16.msra.mxu0 %v1917
      %2639 = vmatpush.bf16.msra.mxu0 %v1909
      %2640 = vmatpush.bf16.msra.mxu0 %v1901
      %2641 = vmatmul.bf16.gmra.mxu0 %v851
      %v2642 = vpop.f32.mrf.mxu0
      %v2643 = vadd.f32 %v1117, %v2642
      %v2644 = vpop.f32.mrf.mxu0
      %v2645 = vadd.f32 %v1117, %v2644
      %2646 = vdwg.mxu0
      %2647 = vmatpush.bf16.msra.mxu0 %v2021
      %2648 = vmatpush.bf16.msra.mxu0 %v2013
      %2649 = vmatpush.bf16.msra.mxu0 %v2005
      %2650 = vmatpush.bf16.msra.mxu0 %v1997
      %2651 = vmatpush.bf16.msra.mxu0 %v1989
      %2652 = vmatpush.bf16.msra.mxu0 %v1981
      %2653 = vmatpush.bf16.msra.mxu0 %v1973
      %2654 = vmatpush.bf16.msra.mxu0 %v1965
      %2655 = vmatmul.bf16.gmra.mxu0 %v852
      %v2656 = vpop.f32.mrf.mxu0
      %v2657 = vadd.f32 %v2643, %v2656
      %v2658 = vpop.f32.mrf.mxu0
      %v2659 = vadd.f32 %v2645, %v2658
      %2660 = vdwg.mxu0
      %2661 = vmatpush.bf16.msra.mxu0 %v2085
      %2662 = vmatpush.bf16.msra.mxu0 %v2077
      %2663 = vmatpush.bf16.msra.mxu0 %v2069
      %2664 = vmatpush.bf16.msra.mxu0 %v2061
      %2665 = vmatpush.bf16.msra.mxu0 %v2053
      %2666 = vmatpush.bf16.msra.mxu0 %v2045
      %2667 = vmatpush.bf16.msra.mxu0 %v2037
      %2668 = vmatpush.bf16.msra.mxu0 %v2029
      %2669 = vmatmul.bf16.gmra.mxu0 %v853
      %v2670 = vpop.f32.mrf.mxu0
      %v2671 = vadd.f32 %v2657, %v2670
      %v2672 = vpop.f32.mrf.mxu0
      %v2673 = vadd.f32 %v2659, %v2672
      %2674 = vdwg.mxu0
      %2675 = vmatpush.bf16.msra.mxu0 %v2149
      %2676 = vmatpush.bf16.msra.mxu0 %v2141
      %2677 = vmatpush.bf16.msra.mxu0 %v2133
      %2678 = vmatpush.bf16.msra.mxu0 %v2125
      %2679 = vmatpush.bf16.msra.mxu0 %v2117
      %2680 = vmatpush.bf16.msra.mxu0 %v2109
      %2681 = vmatpush.bf16.msra.mxu0 %v2101
      %2682 = vmatpush.bf16.msra.mxu0 %v2093
      %2683 = vmatmul.bf16.gmra.mxu0 %v854
      %v2684 = vpop.f32.mrf.mxu0
      %v2685 = vadd.f32 %v2671, %v2684
      %v2686 = vpop.f32.mrf.mxu0
      %v2687 = vadd.f32 %v2673, %v2686
      %2688 = vdwg.mxu0
      %2689 = vmatpush.bf16.msra.mxu0 %v1958
      %2690 = vmatpush.bf16.msra.mxu0 %v1950
      %2691 = vmatpush.bf16.msra.mxu0 %v1942
      %2692 = vmatpush.bf16.msra.mxu0 %v1934
      %2693 = vmatpush.bf16.msra.mxu0 %v1926
      %2694 = vmatpush.bf16.msra.mxu0 %v1918
      %2695 = vmatpush.bf16.msra.mxu0 %v1910
      %2696 = vmatpush.bf16.msra.mxu0 %v1902
      %2697 = vmatmul.bf16.gmra.mxu0 %v851
      %v2698 = vpop.f32.mrf.mxu0
      %v2699 = vadd.f32 %v1118, %v2698
      %v2700 = vpop.f32.mrf.mxu0
      %v2701 = vadd.f32 %v1118, %v2700
      %2702 = vdwg.mxu0
      %2703 = vmatpush.bf16.msra.mxu0 %v2022
      %2704 = vmatpush.bf16.msra.mxu0 %v2014
      %2705 = vmatpush.bf16.msra.mxu0 %v2006
      %2706 = vmatpush.bf16.msra.mxu0 %v1998
      %2707 = vmatpush.bf16.msra.mxu0 %v1990
      %2708 = vmatpush.bf16.msra.mxu0 %v1982
      %2709 = vmatpush.bf16.msra.mxu0 %v1974
      %2710 = vmatpush.bf16.msra.mxu0 %v1966
      %2711 = vmatmul.bf16.gmra.mxu0 %v852
      %v2712 = vpop.f32.mrf.mxu0
      %v2713 = vadd.f32 %v2699, %v2712
      %v2714 = vpop.f32.mrf.mxu0
      %v2715 = vadd.f32 %v2701, %v2714
      %2716 = vdwg.mxu0
      %2717 = vmatpush.bf16.msra.mxu0 %v2086
      %2718 = vmatpush.bf16.msra.mxu0 %v2078
      %2719 = vmatpush.bf16.msra.mxu0 %v2070
      %2720 = vmatpush.bf16.msra.mxu0 %v2062
      %2721 = vmatpush.bf16.msra.mxu0 %v2054
      %2722 = vmatpush.bf16.msra.mxu0 %v2046
      %2723 = vmatpush.bf16.msra.mxu0 %v2038
      %2724 = vmatpush.bf16.msra.mxu0 %v2030
      %2725 = vmatmul.bf16.gmra.mxu0 %v853
      %v2726 = vpop.f32.mrf.mxu0
      %v2727 = vadd.f32 %v2713, %v2726
      %v2728 = vpop.f32.mrf.mxu0
      %v2729 = vadd.f32 %v2715, %v2728
      %2730 = vdwg.mxu0
      %2731 = vmatpush.bf16.msra.mxu0 %v2150
      %2732 = vmatpush.bf16.msra.mxu0 %v2142
      %2733 = vmatpush.bf16.msra.mxu0 %v2134
      %2734 = vmatpush.bf16.msra.mxu0 %v2126
      %2735 = vmatpush.bf16.msra.mxu0 %v2118
      %2736 = vmatpush.bf16.msra.mxu0 %v2110
      %2737 = vmatpush.bf16.msra.mxu0 %v2102
      %2738 = vmatpush.bf16.msra.mxu0 %v2094
      %2739 = vmatmul.bf16.gmra.mxu0 %v854
      %v2740 = vpop.f32.mrf.mxu0
      %v2741 = vadd.f32 %v2727, %v2740
      %v2742 = vpop.f32.mrf.mxu0
      %v2743 = vadd.f32 %v2729, %v2742
      %2744 = vdwg.mxu0
      %2745 = vmatpush.bf16.msra.mxu0 %v1959
      %2746 = vmatpush.bf16.msra.mxu0 %v1951
      %2747 = vmatpush.bf16.msra.mxu0 %v1943
      %2748 = vmatpush.bf16.msra.mxu0 %v1935
      %2749 = vmatpush.bf16.msra.mxu0 %v1927
      %2750 = vmatpush.bf16.msra.mxu0 %v1919
      %2751 = vmatpush.bf16.msra.mxu0 %v1911
      %2752 = vmatpush.bf16.msra.mxu0 %v1903
      %2753 = vmatmul.bf16.gmra.mxu0 %v851
      %v2754 = vpop.f32.mrf.mxu0
      %v2755 = vadd.f32 %v1119, %v2754
      %v2756 = vpop.f32.mrf.mxu0
      %v2757 = vadd.f32 %v1119, %v2756
      %2758 = vdwg.mxu0
      %2759 = vmatpush.bf16.msra.mxu0 %v2023
      %2760 = vmatpush.bf16.msra.mxu0 %v2015
      %2761 = vmatpush.bf16.msra.mxu0 %v2007
      %2762 = vmatpush.bf16.msra.mxu0 %v1999
      %2763 = vmatpush.bf16.msra.mxu0 %v1991
      %2764 = vmatpush.bf16.msra.mxu0 %v1983
      %2765 = vmatpush.bf16.msra.mxu0 %v1975
      %2766 = vmatpush.bf16.msra.mxu0 %v1967
      %2767 = vmatmul.bf16.gmra.mxu0 %v852
      %v2768 = vpop.f32.mrf.mxu0
      %v2769 = vadd.f32 %v2755, %v2768
      %v2770 = vpop.f32.mrf.mxu0
      %v2771 = vadd.f32 %v2757, %v2770
      %2772 = vdwg.mxu0
      %2773 = vmatpush.bf16.msra.mxu0 %v2087
      %2774 = vmatpush.bf16.msra.mxu0 %v2079
      %2775 = vmatpush.bf16.msra.mxu0 %v2071
      %2776 = vmatpush.bf16.msra.mxu0 %v2063
      %2777 = vmatpush.bf16.msra.mxu0 %v2055
      %2778 = vmatpush.bf16.msra.mxu0 %v2047
      %2779 = vmatpush.bf16.msra.mxu0 %v2039
      %2780 = vmatpush.bf16.msra.mxu0 %v2031
      %2781 = vmatmul.bf16.gmra.mxu0 %v853
      %v2782 = vpop.f32.mrf.mxu0
      %v2783 = vadd.f32 %v2769, %v2782
      %v2784 = vpop.f32.mrf.mxu0
      %v2785 = vadd.f32 %v2771, %v2784
      %2786 = vdwg.mxu0
      %2787 = vmatpush.bf16.msra.mxu0 %v2151
      %2788 = vmatpush.bf16.msra.mxu0 %v2143
      %2789 = vmatpush.bf16.msra.mxu0 %v2135
      %2790 = vmatpush.bf16.msra.mxu0 %v2127
      %2791 = vmatpush.bf16.msra.mxu0 %v2119
      %2792 = vmatpush.bf16.msra.mxu0 %v2111
      %2793 = vmatpush.bf16.msra.mxu0 %v2103
      %2794 = vmatpush.bf16.msra.mxu0 %v2095
      %2795 = vmatmul.bf16.gmra.mxu0 %v854
      %v2796 = vpop.f32.mrf.mxu0
      %v2797 = vadd.f32 %v2783, %v2796
      %v2798 = vpop.f32.mrf.mxu0
      %v2799 = vadd.f32 %v2785, %v2798
      %2800 = vdwg.mxu0
      %2801 = vmatpush.bf16.msra.mxu0 %v1960
      %2802 = vmatpush.bf16.msra.mxu0 %v1952
      %2803 = vmatpush.bf16.msra.mxu0 %v1944
      %2804 = vmatpush.bf16.msra.mxu0 %v1936
      %2805 = vmatpush.bf16.msra.mxu0 %v1928
      %2806 = vmatpush.bf16.msra.mxu0 %v1920
      %2807 = vmatpush.bf16.msra.mxu0 %v1912
      %2808 = vmatpush.bf16.msra.mxu0 %v1904
      %2809 = vmatmul.bf16.gmra.mxu0 %v851
      %v2810 = vpop.f32.mrf.mxu0
      %v2811 = vadd.f32 %v1120, %v2810
      %v2812 = vpop.f32.mrf.mxu0
      %v2813 = vadd.f32 %v1120, %v2812
      %2814 = vdwg.mxu0
      %2815 = vmatpush.bf16.msra.mxu0 %v2024
      %2816 = vmatpush.bf16.msra.mxu0 %v2016
      %2817 = vmatpush.bf16.msra.mxu0 %v2008
      %2818 = vmatpush.bf16.msra.mxu0 %v2000
      %2819 = vmatpush.bf16.msra.mxu0 %v1992
      %2820 = vmatpush.bf16.msra.mxu0 %v1984
      %2821 = vmatpush.bf16.msra.mxu0 %v1976
      %2822 = vmatpush.bf16.msra.mxu0 %v1968
      %2823 = vmatmul.bf16.gmra.mxu0 %v852
      %v2824 = vpop.f32.mrf.mxu0
      %v2825 = vadd.f32 %v2811, %v2824
      %v2826 = vpop.f32.mrf.mxu0
      %v2827 = vadd.f32 %v2813, %v2826
      %2828 = vdwg.mxu0
      %2829 = vmatpush.bf16.msra.mxu0 %v2088
      %2830 = vmatpush.bf16.msra.mxu0 %v2080
      %2831 = vmatpush.bf16.msra.mxu0 %v2072
      %2832 = vmatpush.bf16.msra.mxu0 %v2064
      %2833 = vmatpush.bf16.msra.mxu0 %v2056
      %2834 = vmatpush.bf16.msra.mxu0 %v2048
      %2835 = vmatpush.bf16.msra.mxu0 %v2040
      %2836 = vmatpush.bf16.msra.mxu0 %v2032
      %2837 = vmatmul.bf16.gmra.mxu0 %v853
      %v2838 = vpop.f32.mrf.mxu0
      %v2839 = vadd.f32 %v2825, %v2838
      %v2840 = vpop.f32.mrf.mxu0
      %v2841 = vadd.f32 %v2827, %v2840
      %2842 = vdwg.mxu0
      %2843 = vmatpush.bf16.msra.mxu0 %v2152
      %2844 = vmatpush.bf16.msra.mxu0 %v2144
      %2845 = vmatpush.bf16.msra.mxu0 %v2136
      %2846 = vmatpush.bf16.msra.mxu0 %v2128
      %2847 = vmatpush.bf16.msra.mxu0 %v2120
      %2848 = vmatpush.bf16.msra.mxu0 %v2112
      %2849 = vmatpush.bf16.msra.mxu0 %v2104
      %2850 = vmatpush.bf16.msra.mxu0 %v2096
      %2851 = vmatmul.bf16.gmra.mxu0 %v854
      %v2852 = vpop.f32.mrf.mxu0
      %v2853 = vadd.f32 %v2839, %v2852
      %v2854 = vpop.f32.mrf.mxu0
      %v2855 = vadd.f32 %v2841, %v2854
      %2856 = vdwg.mxu0
      %vm2857 = vcmp.gt.f32.partialorder %v2461, 0.0
      %vm2858 = vcmp.gt.f32.partialorder %v2517, 0.0
      %vm2859 = vcmp.gt.f32.partialorder %v2573, 0.0
      %vm2860 = vcmp.gt.f32.partialorder %v2629, 0.0
      %vm2861 = vcmp.gt.f32.partialorder %v2685, 0.0
      %vm2862 = vcmp.gt.f32.partialorder %v2741, 0.0
      %vm2863 = vcmp.gt.f32.partialorder %v2797, 0.0
      %vm2864 = vcmp.gt.f32.partialorder %v2853, 0.0
      %vm2865 = vcmp.gt.f32.partialorder %v2463, 0.0
      %vm2866 = vcmp.gt.f32.partialorder %v2519, 0.0
      %vm2867 = vcmp.gt.f32.partialorder %v2575, 0.0
      %vm2868 = vcmp.gt.f32.partialorder %v2631, 0.0
      %vm2869 = vcmp.gt.f32.partialorder %v2687, 0.0
      %vm2870 = vcmp.gt.f32.partialorder %v2743, 0.0
      %vm2871 = vcmp.gt.f32.partialorder %v2799, 0.0
      %vm2872 = vcmp.gt.f32.partialorder %v2855, 0.0
      %v2873 = vmul.f32 %v2461, 0.2
      %v2874 = vmul.f32 %v2517, 0.2
      %v2875 = vmul.f32 %v2573, 0.2
      %v2876 = vmul.f32 %v2629, 0.2
      %v2877 = vmul.f32 %v2685, 0.2
      %v2878 = vmul.f32 %v2741, 0.2
      %v2879 = vmul.f32 %v2797, 0.2
      %v2880 = vmul.f32 %v2853, 0.2
      %v2881 = vmul.f32 %v2463, 0.2
      %v2882 = vmul.f32 %v2519, 0.2
      %v2883 = vmul.f32 %v2575, 0.2
      %v2884 = vmul.f32 %v2631, 0.2
      %v2885 = vmul.f32 %v2687, 0.2
      %v2886 = vmul.f32 %v2743, 0.2
      %v2887 = vmul.f32 %v2799, 0.2
      %v2888 = vmul.f32 %v2855, 0.2
      %v2889 = vsel %vm2857, %v2461, %v2873
      %v2890 = vsel %vm2858, %v2517, %v2874
      %v2891 = vsel %vm2859, %v2573, %v2875
      %v2892 = vsel %vm2860, %v2629, %v2876
      %v2893 = vsel %vm2861, %v2685, %v2877
      %v2894 = vsel %vm2862, %v2741, %v2878
      %v2895 = vsel %vm2863, %v2797, %v2879
      %v2896 = vsel %vm2864, %v2853, %v2880
      %v2897 = vsel %vm2865, %v2463, %v2881
      %v2898 = vsel %vm2866, %v2519, %v2882
      %v2899 = vsel %vm2867, %v2575, %v2883
      %v2900 = vsel %vm2868, %v2631, %v2884
      %v2901 = vsel %vm2869, %v2687, %v2885
      %v2902 = vsel %vm2870, %v2743, %v2886
      %v2903 = vsel %vm2871, %v2799, %v2887
      %v2904 = vsel %vm2872, %v2855, %v2888
      %v2905 = vpack.c.bf16 %v2890, %v2889
      %v2906 = vpack.c.bf16 %v2892, %v2891
      %v2907 = vpack.c.bf16 %v2894, %v2893
      %v2908 = vpack.c.bf16 %v2896, %v2895
      %v2909 = vpack.c.bf16 %v2898, %v2897
      %v2910 = vpack.c.bf16 %v2900, %v2899
      %v2911 = vpack.c.bf16 %v2902, %v2901
      %v2912 = vpack.c.bf16 %v2904, %v2903
      %2913 = vst [vmem:[#allocation2] sm:$0xff] %v2905
      %2914 = vst [vmem:[#allocation2 + $0x8] sm:$0xff] %v2906
      %2915 = vst [vmem:[#allocation2 + $0x10] sm:$0xff] %v2907
      %2916 = vst [vmem:[#allocation2 + $0x18] sm:$0xff] %v2908
      %2917 = vst [vmem:[#allocation2 + $0x20] sm:$0xff] %v2909
      %2918 = vst [vmem:[#allocation2 + $0x28] sm:$0xff] %v2910
      %2919 = vst [vmem:[#allocation2 + $0x30] sm:$0xff] %v2911
      %2920 = vst [vmem:[#allocation2 + $0x38] sm:$0xff] %v2912
    $region77: #{tpu_custom_call.1} parent=1 // pred_fallthru
      _
    %v2921 = vld [vmem:[#allocation2] sm:$0xff]
    %v2922 = vld [vmem:[#allocation2 + $0x8] sm:$0xff]
    %v2923 = vld [vmem:[#allocation2 + $0x10] sm:$0xff]
    %v2924 = vld [vmem:[#allocation2 + $0x18] sm:$0xff]
    %v2925 = vld [vmem:[#allocation2 + $0x20] sm:$0xff]
    %v2926 = vld [vmem:[#allocation2 + $0x28] sm:$0xff]
    %v2927 = vld [vmem:[#allocation2 + $0x30] sm:$0xff]
    %v2928 = vld [vmem:[#allocation2 + $0x38] sm:$0xff]
    %v2929 = vld [vmem:[#allocation15] sm:$0xff]
    %v2930 = vld [vmem:[#allocation15 + $0x8] sm:$0xff]
    %v2931 = vld [vmem:[#allocation15 + $0x10] sm:$0xff]
    %v2932 = vld [vmem:[#allocation15 + $0x18] sm:$0xff]
    %v2933 = vld [vmem:[#allocation15 + $0x20] sm:$0xff]
    %v2934 = vld [vmem:[#allocation15 + $0x28] sm:$0xff]
    %v2935 = vld [vmem:[#allocation15 + $0x30] sm:$0xff]
    %v2936 = vld [vmem:[#allocation15 + $0x38] sm:$0xff]
    %v2937 = vld [vmem:[#allocation15 + $0x40] sm:$0xff]
    %v2938 = vld [vmem:[#allocation15 + $0x48] sm:$0xff]
    %v2939 = vld [vmem:[#allocation15 + $0x50] sm:$0xff]
    %v2940 = vld [vmem:[#allocation15 + $0x58] sm:$0xff]
    %v2941 = vld [vmem:[#allocation15 + $0x60] sm:$0xff]
    %v2942 = vld [vmem:[#allocation15 + $0x68] sm:$0xff]
    %v2943 = vld [vmem:[#allocation15 + $0x70] sm:$0xff]
    %v2944 = vld [vmem:[#allocation15 + $0x78] sm:$0xff]
    %v2945 = vld [vmem:[#allocation15 + $0x80] sm:$0xff]
    %v2946 = vld [vmem:[#allocation15 + $0x88] sm:$0xff]
    %v2947 = vld [vmem:[#allocation15 + $0x90] sm:$0xff]
    %v2948 = vld [vmem:[#allocation15 + $0x98] sm:$0xff]
    %v2949 = vld [vmem:[#allocation15 + $0xa0] sm:$0xff]
    %v2950 = vld [vmem:[#allocation15 + $0xa8] sm:$0xff]
    %v2951 = vld [vmem:[#allocation15 + $0xb0] sm:$0xff]
    %v2952 = vld [vmem:[#allocation15 + $0xb8] sm:$0xff]
    %v2953 = vld [vmem:[#allocation15 + $0xc0] sm:$0xff]
    %v2954 = vld [vmem:[#allocation15 + $0xc8] sm:$0xff]
    %v2955 = vld [vmem:[#allocation15 + $0xd0] sm:$0xff]
    %v2956 = vld [vmem:[#allocation15 + $0xd8] sm:$0xff]
    %v2957 = vld [vmem:[#allocation15 + $0xe0] sm:$0xff]
    %v2958 = vld [vmem:[#allocation15 + $0xe8] sm:$0xff]
    %v2959 = vld [vmem:[#allocation15 + $0xf0] sm:$0xff]
    %v2960 = vld [vmem:[#allocation15 + $0xf8] sm:$0xff]
    %v2961 = vld [vmem:[#allocation15 + $0x100] sm:$0xff]
    %v2962 = vld [vmem:[#allocation15 + $0x108] sm:$0xff]
    %v2963 = vld [vmem:[#allocation15 + $0x110] sm:$0xff]
    %v2964 = vld [vmem:[#allocation15 + $0x118] sm:$0xff]
    %v2965 = vld [vmem:[#allocation15 + $0x120] sm:$0xff]
    %v2966 = vld [vmem:[#allocation15 + $0x128] sm:$0xff]
    %v2967 = vld [vmem:[#allocation15 + $0x130] sm:$0xff]
    %v2968 = vld [vmem:[#allocation15 + $0x138] sm:$0xff]
    %v2969 = vld [vmem:[#allocation15 + $0x140] sm:$0xff]
    %v2970 = vld [vmem:[#allocation15 + $0x148] sm:$0xff]
    %v2971 = vld [vmem:[#allocation15 + $0x150] sm:$0xff]
    %v2972 = vld [vmem:[#allocation15 + $0x158] sm:$0xff]
    %v2973 = vld [vmem:[#allocation15 + $0x160] sm:$0xff]
    %v2974 = vld [vmem:[#allocation15 + $0x168] sm:$0xff]
    %v2975 = vld [vmem:[#allocation15 + $0x170] sm:$0xff]
    %v2976 = vld [vmem:[#allocation15 + $0x178] sm:$0xff]
    %v2977 = vld [vmem:[#allocation15 + $0x180] sm:$0xff]
    %v2978 = vld [vmem:[#allocation15 + $0x188] sm:$0xff]
    %v2979 = vld [vmem:[#allocation15 + $0x190] sm:$0xff]
    %v2980 = vld [vmem:[#allocation15 + $0x198] sm:$0xff]
    %v2981 = vld [vmem:[#allocation15 + $0x1a0] sm:$0xff]
    %v2982 = vld [vmem:[#allocation15 + $0x1a8] sm:$0xff]
    %v2983 = vld [vmem:[#allocation15 + $0x1b0] sm:$0xff]
    %v2984 = vld [vmem:[#allocation15 + $0x1b8] sm:$0xff]
    %v2985 = vld [vmem:[#allocation15 + $0x1c0] sm:$0xff]
    %v2986 = vld [vmem:[#allocation15 + $0x1c8] sm:$0xff]
    %v2987 = vld [vmem:[#allocation15 + $0x1d0] sm:$0xff]
    %v2988 = vld [vmem:[#allocation15 + $0x1d8] sm:$0xff]
    %v2989 = vld [vmem:[#allocation15 + $0x1e0] sm:$0xff]
    %v2990 = vld [vmem:[#allocation15 + $0x1e8] sm:$0xff]
    %v2991 = vld [vmem:[#allocation15 + $0x1f0] sm:$0xff]
    %v2992 = vld [vmem:[#allocation15 + $0x1f8] sm:$0xff]
    %v2993 = vld [vmem:[#allocation15 + $0x200] sm:$0xff]
    %v2994 = vld [vmem:[#allocation15 + $0x208] sm:$0xff]
    %v2995 = vld [vmem:[#allocation15 + $0x210] sm:$0xff]
    %v2996 = vld [vmem:[#allocation15 + $0x218] sm:$0xff]
    %v2997 = vld [vmem:[#allocation15 + $0x220] sm:$0xff]
    %v2998 = vld [vmem:[#allocation15 + $0x228] sm:$0xff]
    %v2999 = vld [vmem:[#allocation15 + $0x230] sm:$0xff]
    %v3000 = vld [vmem:[#allocation15 + $0x238] sm:$0xff]
    %v3001 = vld [vmem:[#allocation15 + $0x240] sm:$0xff]
    %v3002 = vld [vmem:[#allocation15 + $0x248] sm:$0xff]
    %v3003 = vld [vmem:[#allocation15 + $0x250] sm:$0xff]
    %v3004 = vld [vmem:[#allocation15 + $0x258] sm:$0xff]
    %v3005 = vld [vmem:[#allocation15 + $0x260] sm:$0xff]
    %v3006 = vld [vmem:[#allocation15 + $0x268] sm:$0xff]
    %v3007 = vld [vmem:[#allocation15 + $0x270] sm:$0xff]
    %v3008 = vld [vmem:[#allocation15 + $0x278] sm:$0xff]
    %v3009 = vld [vmem:[#allocation15 + $0x280] sm:$0xff]
    %v3010 = vld [vmem:[#allocation15 + $0x288] sm:$0xff]
    %v3011 = vld [vmem:[#allocation15 + $0x290] sm:$0xff]
    %v3012 = vld [vmem:[#allocation15 + $0x298] sm:$0xff]
    %v3013 = vld [vmem:[#allocation15 + $0x2a0] sm:$0xff]
    %v3014 = vld [vmem:[#allocation15 + $0x2a8] sm:$0xff]
    %v3015 = vld [vmem:[#allocation15 + $0x2b0] sm:$0xff]
    %v3016 = vld [vmem:[#allocation15 + $0x2b8] sm:$0xff]
    %v3017 = vld [vmem:[#allocation15 + $0x2c0] sm:$0xff]
    %v3018 = vld [vmem:[#allocation15 + $0x2c8] sm:$0xff]
    %v3019 = vld [vmem:[#allocation15 + $0x2d0] sm:$0xff]
    %v3020 = vld [vmem:[#allocation15 + $0x2d8] sm:$0xff]
    %v3021 = vld [vmem:[#allocation15 + $0x2e0] sm:$0xff]
    %v3022 = vld [vmem:[#allocation15 + $0x2e8] sm:$0xff]
    %v3023 = vld [vmem:[#allocation15 + $0x2f0] sm:$0xff]
    %v3024 = vld [vmem:[#allocation15 + $0x2f8] sm:$0xff]
    %v3025 = vld [vmem:[#allocation15 + $0x300] sm:$0xff]
    %v3026 = vld [vmem:[#allocation15 + $0x308] sm:$0xff]
    %v3027 = vld [vmem:[#allocation15 + $0x310] sm:$0xff]
    %v3028 = vld [vmem:[#allocation15 + $0x318] sm:$0xff]
    %v3029 = vld [vmem:[#allocation15 + $0x320] sm:$0xff]
    %v3030 = vld [vmem:[#allocation15 + $0x328] sm:$0xff]
    %v3031 = vld [vmem:[#allocation15 + $0x330] sm:$0xff]
    %v3032 = vld [vmem:[#allocation15 + $0x338] sm:$0xff]
    %v3033 = vld [vmem:[#allocation15 + $0x340] sm:$0xff]
    %v3034 = vld [vmem:[#allocation15 + $0x348] sm:$0xff]
    %v3035 = vld [vmem:[#allocation15 + $0x350] sm:$0xff]
    %v3036 = vld [vmem:[#allocation15 + $0x358] sm:$0xff]
    %v3037 = vld [vmem:[#allocation15 + $0x360] sm:$0xff]
    %v3038 = vld [vmem:[#allocation15 + $0x368] sm:$0xff]
    %v3039 = vld [vmem:[#allocation15 + $0x370] sm:$0xff]
    %v3040 = vld [vmem:[#allocation15 + $0x378] sm:$0xff]
    %v3041 = vld [vmem:[#allocation15 + $0x380] sm:$0xff]
    %v3042 = vld [vmem:[#allocation15 + $0x388] sm:$0xff]
    %v3043 = vld [vmem:[#allocation15 + $0x390] sm:$0xff]
    %v3044 = vld [vmem:[#allocation15 + $0x398] sm:$0xff]
    %v3045 = vld [vmem:[#allocation15 + $0x3a0] sm:$0xff]
    %v3046 = vld [vmem:[#allocation15 + $0x3a8] sm:$0xff]
    %v3047 = vld [vmem:[#allocation15 + $0x3b0] sm:$0xff]
    %v3048 = vld [vmem:[#allocation15 + $0x3b8] sm:$0xff]
    %v3049 = vld [vmem:[#allocation15 + $0x3c0] sm:$0xff]
    %v3050 = vld [vmem:[#allocation15 + $0x3c8] sm:$0xff]
    %v3051 = vld [vmem:[#allocation15 + $0x3d0] sm:$0xff]
    %v3052 = vld [vmem:[#allocation15 + $0x3d8] sm:$0xff]
    %v3053 = vld [vmem:[#allocation15 + $0x3e0] sm:$0xff]
    %v3054 = vld [vmem:[#allocation15 + $0x3e8] sm:$0xff]
    %v3055 = vld [vmem:[#allocation15 + $0x3f0] sm:$0xff]
    %v3056 = vld [vmem:[#allocation15 + $0x3f8] sm:$0xff]
    %v3057 = vld [vmem:[#allocation15 + $0x400] sm:$0xff]
    %v3058 = vld [vmem:[#allocation15 + $0x408] sm:$0xff]
    %v3059 = vld [vmem:[#allocation15 + $0x410] sm:$0xff]
    %v3060 = vld [vmem:[#allocation15 + $0x418] sm:$0xff]
    %v3061 = vld [vmem:[#allocation15 + $0x420] sm:$0xff]
    %v3062 = vld [vmem:[#allocation15 + $0x428] sm:$0xff]
    %v3063 = vld [vmem:[#allocation15 + $0x430] sm:$0xff]
    %v3064 = vld [vmem:[#allocation15 + $0x438] sm:$0xff]
    %v3065 = vld [vmem:[#allocation15 + $0x440] sm:$0xff]
    %v3066 = vld [vmem:[#allocation15 + $0x448] sm:$0xff]
    %v3067 = vld [vmem:[#allocation15 + $0x450] sm:$0xff]
    %v3068 = vld [vmem:[#allocation15 + $0x458] sm:$0xff]
    %v3069 = vld [vmem:[#allocation15 + $0x460] sm:$0xff]
    %v3070 = vld [vmem:[#allocation15 + $0x468] sm:$0xff]
    %v3071 = vld [vmem:[#allocation15 + $0x470] sm:$0xff]
    %v3072 = vld [vmem:[#allocation15 + $0x478] sm:$0xff]
    %v3073 = vld [vmem:[#allocation15 + $0x480] sm:$0xff]
    %v3074 = vld [vmem:[#allocation15 + $0x488] sm:$0xff]
    %v3075 = vld [vmem:[#allocation15 + $0x490] sm:$0xff]
    %v3076 = vld [vmem:[#allocation15 + $0x498] sm:$0xff]
    %v3077 = vld [vmem:[#allocation15 + $0x4a0] sm:$0xff]
    %v3078 = vld [vmem:[#allocation15 + $0x4a8] sm:$0xff]
    %v3079 = vld [vmem:[#allocation15 + $0x4b0] sm:$0xff]
    %v3080 = vld [vmem:[#allocation15 + $0x4b8] sm:$0xff]
    %v3081 = vld [vmem:[#allocation15 + $0x4c0] sm:$0xff]
    %v3082 = vld [vmem:[#allocation15 + $0x4c8] sm:$0xff]
    %v3083 = vld [vmem:[#allocation15 + $0x4d0] sm:$0xff]
    %v3084 = vld [vmem:[#allocation15 + $0x4d8] sm:$0xff]
    %v3085 = vld [vmem:[#allocation15 + $0x4e0] sm:$0xff]
    %v3086 = vld [vmem:[#allocation15 + $0x4e8] sm:$0xff]
    %v3087 = vld [vmem:[#allocation15 + $0x4f0] sm:$0xff]
    %v3088 = vld [vmem:[#allocation15 + $0x4f8] sm:$0xff]
    %v3089 = vld [vmem:[#allocation15 + $0x500] sm:$0xff]
    %v3090 = vld [vmem:[#allocation15 + $0x508] sm:$0xff]
    %v3091 = vld [vmem:[#allocation15 + $0x510] sm:$0xff]
    %v3092 = vld [vmem:[#allocation15 + $0x518] sm:$0xff]
    %v3093 = vld [vmem:[#allocation15 + $0x520] sm:$0xff]
    %v3094 = vld [vmem:[#allocation15 + $0x528] sm:$0xff]
    %v3095 = vld [vmem:[#allocation15 + $0x530] sm:$0xff]
    %v3096 = vld [vmem:[#allocation15 + $0x538] sm:$0xff]
    %v3097 = vld [vmem:[#allocation15 + $0x540] sm:$0xff]
    %v3098 = vld [vmem:[#allocation15 + $0x548] sm:$0xff]
    %v3099 = vld [vmem:[#allocation15 + $0x550] sm:$0xff]
    %v3100 = vld [vmem:[#allocation15 + $0x558] sm:$0xff]
    %v3101 = vld [vmem:[#allocation15 + $0x560] sm:$0xff]
    %v3102 = vld [vmem:[#allocation15 + $0x568] sm:$0xff]
    %v3103 = vld [vmem:[#allocation15 + $0x570] sm:$0xff]
    %v3104 = vld [vmem:[#allocation15 + $0x578] sm:$0xff]
    %v3105 = vld [vmem:[#allocation15 + $0x580] sm:$0xff]
    %v3106 = vld [vmem:[#allocation15 + $0x588] sm:$0xff]
    %v3107 = vld [vmem:[#allocation15 + $0x590] sm:$0xff]
    %v3108 = vld [vmem:[#allocation15 + $0x598] sm:$0xff]
    %v3109 = vld [vmem:[#allocation15 + $0x5a0] sm:$0xff]
    %v3110 = vld [vmem:[#allocation15 + $0x5a8] sm:$0xff]
    %v3111 = vld [vmem:[#allocation15 + $0x5b0] sm:$0xff]
    %v3112 = vld [vmem:[#allocation15 + $0x5b8] sm:$0xff]
    %v3113 = vld [vmem:[#allocation15 + $0x5c0] sm:$0xff]
    %v3114 = vld [vmem:[#allocation15 + $0x5c8] sm:$0xff]
    %v3115 = vld [vmem:[#allocation15 + $0x5d0] sm:$0xff]
    %v3116 = vld [vmem:[#allocation15 + $0x5d8] sm:$0xff]
    %v3117 = vld [vmem:[#allocation15 + $0x5e0] sm:$0xff]
    %v3118 = vld [vmem:[#allocation15 + $0x5e8] sm:$0xff]
    %v3119 = vld [vmem:[#allocation15 + $0x5f0] sm:$0xff]
    %v3120 = vld [vmem:[#allocation15 + $0x5f8] sm:$0xff]
    %v3121 = vld [vmem:[#allocation15 + $0x600] sm:$0xff]
    %v3122 = vld [vmem:[#allocation15 + $0x608] sm:$0xff]
    %v3123 = vld [vmem:[#allocation15 + $0x610] sm:$0xff]
    %v3124 = vld [vmem:[#allocation15 + $0x618] sm:$0xff]
    %v3125 = vld [vmem:[#allocation15 + $0x620] sm:$0xff]
    %v3126 = vld [vmem:[#allocation15 + $0x628] sm:$0xff]
    %v3127 = vld [vmem:[#allocation15 + $0x630] sm:$0xff]
    %v3128 = vld [vmem:[#allocation15 + $0x638] sm:$0xff]
    %v3129 = vld [vmem:[#allocation15 + $0x640] sm:$0xff]
    %v3130 = vld [vmem:[#allocation15 + $0x648] sm:$0xff]
    %v3131 = vld [vmem:[#allocation15 + $0x650] sm:$0xff]
    %v3132 = vld [vmem:[#allocation15 + $0x658] sm:$0xff]
    %v3133 = vld [vmem:[#allocation15 + $0x660] sm:$0xff]
    %v3134 = vld [vmem:[#allocation15 + $0x668] sm:$0xff]
    %v3135 = vld [vmem:[#allocation15 + $0x670] sm:$0xff]
    %v3136 = vld [vmem:[#allocation15 + $0x678] sm:$0xff]
    %v3137 = vld [vmem:[#allocation15 + $0x680] sm:$0xff]
    %v3138 = vld [vmem:[#allocation15 + $0x688] sm:$0xff]
    %v3139 = vld [vmem:[#allocation15 + $0x690] sm:$0xff]
    %v3140 = vld [vmem:[#allocation15 + $0x698] sm:$0xff]
    %v3141 = vld [vmem:[#allocation15 + $0x6a0] sm:$0xff]
    %v3142 = vld [vmem:[#allocation15 + $0x6a8] sm:$0xff]
    %v3143 = vld [vmem:[#allocation15 + $0x6b0] sm:$0xff]
    %v3144 = vld [vmem:[#allocation15 + $0x6b8] sm:$0xff]
    %v3145 = vld [vmem:[#allocation15 + $0x6c0] sm:$0xff]
    %v3146 = vld [vmem:[#allocation15 + $0x6c8] sm:$0xff]
    %v3147 = vld [vmem:[#allocation15 + $0x6d0] sm:$0xff]
    %v3148 = vld [vmem:[#allocation15 + $0x6d8] sm:$0xff]
    %v3149 = vld [vmem:[#allocation15 + $0x6e0] sm:$0xff]
    %v3150 = vld [vmem:[#allocation15 + $0x6e8] sm:$0xff]
    %v3151 = vld [vmem:[#allocation15 + $0x6f0] sm:$0xff]
    %v3152 = vld [vmem:[#allocation15 + $0x6f8] sm:$0xff]
    %v3153 = vld [vmem:[#allocation15 + $0x700] sm:$0xff]
    %v3154 = vld [vmem:[#allocation15 + $0x708] sm:$0xff]
    %v3155 = vld [vmem:[#allocation15 + $0x710] sm:$0xff]
    %v3156 = vld [vmem:[#allocation15 + $0x718] sm:$0xff]
    %v3157 = vld [vmem:[#allocation15 + $0x720] sm:$0xff]
    %v3158 = vld [vmem:[#allocation15 + $0x728] sm:$0xff]
    %v3159 = vld [vmem:[#allocation15 + $0x730] sm:$0xff]
    %v3160 = vld [vmem:[#allocation15 + $0x738] sm:$0xff]
    %v3161 = vld [vmem:[#allocation15 + $0x740] sm:$0xff]
    %v3162 = vld [vmem:[#allocation15 + $0x748] sm:$0xff]
    %v3163 = vld [vmem:[#allocation15 + $0x750] sm:$0xff]
    %v3164 = vld [vmem:[#allocation15 + $0x758] sm:$0xff]
    %v3165 = vld [vmem:[#allocation15 + $0x760] sm:$0xff]
    %v3166 = vld [vmem:[#allocation15 + $0x768] sm:$0xff]
    %v3167 = vld [vmem:[#allocation15 + $0x770] sm:$0xff]
    %v3168 = vld [vmem:[#allocation15 + $0x778] sm:$0xff]
    %v3169 = vld [vmem:[#allocation15 + $0x780] sm:$0xff]
    %v3170 = vld [vmem:[#allocation15 + $0x788] sm:$0xff]
    %v3171 = vld [vmem:[#allocation15 + $0x790] sm:$0xff]
    %v3172 = vld [vmem:[#allocation15 + $0x798] sm:$0xff]
    %v3173 = vld [vmem:[#allocation15 + $0x7a0] sm:$0xff]
    %v3174 = vld [vmem:[#allocation15 + $0x7a8] sm:$0xff]
    %v3175 = vld [vmem:[#allocation15 + $0x7b0] sm:$0xff]
    %v3176 = vld [vmem:[#allocation15 + $0x7b8] sm:$0xff]
    %v3177 = vld [vmem:[#allocation15 + $0x7c0] sm:$0xff]
    %v3178 = vld [vmem:[#allocation15 + $0x7c8] sm:$0xff]
    %v3179 = vld [vmem:[#allocation15 + $0x7d0] sm:$0xff]
    %v3180 = vld [vmem:[#allocation15 + $0x7d8] sm:$0xff]
    %v3181 = vld [vmem:[#allocation15 + $0x7e0] sm:$0xff]
    %v3182 = vld [vmem:[#allocation15 + $0x7e8] sm:$0xff]
    %v3183 = vld [vmem:[#allocation15 + $0x7f0] sm:$0xff]
    %v3184 = vld [vmem:[#allocation15 + $0x7f8] sm:$0xff]
    %v3185 = vld [vmem:[#allocation15 + $0x800] sm:$0xff]
    %v3186 = vld [vmem:[#allocation15 + $0x808] sm:$0xff]
    %v3187 = vld [vmem:[#allocation15 + $0x810] sm:$0xff]
    %v3188 = vld [vmem:[#allocation15 + $0x818] sm:$0xff]
    %v3189 = vld [vmem:[#allocation15 + $0x820] sm:$0xff]
    %v3190 = vld [vmem:[#allocation15 + $0x828] sm:$0xff]
    %v3191 = vld [vmem:[#allocation15 + $0x830] sm:$0xff]
    %v3192 = vld [vmem:[#allocation15 + $0x838] sm:$0xff]
    %v3193 = vld [vmem:[#allocation15 + $0x840] sm:$0xff]
    %v3194 = vld [vmem:[#allocation15 + $0x848] sm:$0xff]
    %v3195 = vld [vmem:[#allocation15 + $0x850] sm:$0xff]
    %v3196 = vld [vmem:[#allocation15 + $0x858] sm:$0xff]
    %v3197 = vld [vmem:[#allocation15 + $0x860] sm:$0xff]
    %v3198 = vld [vmem:[#allocation15 + $0x868] sm:$0xff]
    %v3199 = vld [vmem:[#allocation15 + $0x870] sm:$0xff]
    %v3200 = vld [vmem:[#allocation15 + $0x878] sm:$0xff]
    %v3201 = vld [vmem:[#allocation15 + $0x880] sm:$0xff]
    %v3202 = vld [vmem:[#allocation15 + $0x888] sm:$0xff]
    %v3203 = vld [vmem:[#allocation15 + $0x890] sm:$0xff]
    %v3204 = vld [vmem:[#allocation15 + $0x898] sm:$0xff]
    %v3205 = vld [vmem:[#allocation15 + $0x8a0] sm:$0xff]
    %v3206 = vld [vmem:[#allocation15 + $0x8a8] sm:$0xff]
    %v3207 = vld [vmem:[#allocation15 + $0x8b0] sm:$0xff]
    %v3208 = vld [vmem:[#allocation15 + $0x8b8] sm:$0xff]
    %v3209 = vld [vmem:[#allocation15 + $0x8c0] sm:$0xff]
    %v3210 = vld [vmem:[#allocation15 + $0x8c8] sm:$0xff]
    %v3211 = vld [vmem:[#allocation15 + $0x8d0] sm:$0xff]
    %v3212 = vld [vmem:[#allocation15 + $0x8d8] sm:$0xff]
    %v3213 = vld [vmem:[#allocation15 + $0x8e0] sm:$0xff]
    %v3214 = vld [vmem:[#allocation15 + $0x8e8] sm:$0xff]
    %v3215 = vld [vmem:[#allocation15 + $0x8f0] sm:$0xff]
    %v3216 = vld [vmem:[#allocation15 + $0x8f8] sm:$0xff]
    %v3217 = vld [vmem:[#allocation15 + $0x900] sm:$0xff]
    %v3218 = vld [vmem:[#allocation15 + $0x908] sm:$0xff]
    %v3219 = vld [vmem:[#allocation15 + $0x910] sm:$0xff]
    %v3220 = vld [vmem:[#allocation15 + $0x918] sm:$0xff]
    %v3221 = vld [vmem:[#allocation15 + $0x920] sm:$0xff]
    %v3222 = vld [vmem:[#allocation15 + $0x928] sm:$0xff]
    %v3223 = vld [vmem:[#allocation15 + $0x930] sm:$0xff]
    %v3224 = vld [vmem:[#allocation15 + $0x938] sm:$0xff]
    %v3225 = vld [vmem:[#allocation15 + $0x940] sm:$0xff]
    %v3226 = vld [vmem:[#allocation15 + $0x948] sm:$0xff]
    %v3227 = vld [vmem:[#allocation15 + $0x950] sm:$0xff]
    %v3228 = vld [vmem:[#allocation15 + $0x958] sm:$0xff]
    %v3229 = vld [vmem:[#allocation15 + $0x960] sm:$0xff]
    %v3230 = vld [vmem:[#allocation15 + $0x968] sm:$0xff]
    %v3231 = vld [vmem:[#allocation15 + $0x970] sm:$0xff]
    %v3232 = vld [vmem:[#allocation15 + $0x978] sm:$0xff]
    %v3233 = vld [vmem:[#allocation15 + $0x980] sm:$0xff]
    %v3234 = vld [vmem:[#allocation15 + $0x988] sm:$0xff]
    %v3235 = vld [vmem:[#allocation15 + $0x990] sm:$0xff]
    %v3236 = vld [vmem:[#allocation15 + $0x998] sm:$0xff]
    %v3237 = vld [vmem:[#allocation15 + $0x9a0] sm:$0xff]
    %v3238 = vld [vmem:[#allocation15 + $0x9a8] sm:$0xff]
    %v3239 = vld [vmem:[#allocation15 + $0x9b0] sm:$0xff]
    %v3240 = vld [vmem:[#allocation15 + $0x9b8] sm:$0xff]
    %v3241 = vld [vmem:[#allocation15 + $0x9c0] sm:$0xff]
    %v3242 = vld [vmem:[#allocation15 + $0x9c8] sm:$0xff]
    %v3243 = vld [vmem:[#allocation15 + $0x9d0] sm:$0xff]
    %v3244 = vld [vmem:[#allocation15 + $0x9d8] sm:$0xff]
    %v3245 = vld [vmem:[#allocation15 + $0x9e0] sm:$0xff]
    %v3246 = vld [vmem:[#allocation15 + $0x9e8] sm:$0xff]
    %v3247 = vld [vmem:[#allocation15 + $0x9f0] sm:$0xff]
    %v3248 = vld [vmem:[#allocation15 + $0x9f8] sm:$0xff]
    %v3249 = vld [vmem:[#allocation15 + $0xa00] sm:$0xff]
    %v3250 = vld [vmem:[#allocation15 + $0xa08] sm:$0xff]
    %v3251 = vld [vmem:[#allocation15 + $0xa10] sm:$0xff]
    %v3252 = vld [vmem:[#allocation15 + $0xa18] sm:$0xff]
    %v3253 = vld [vmem:[#allocation15 + $0xa20] sm:$0xff]
    %v3254 = vld [vmem:[#allocation15 + $0xa28] sm:$0xff]
    %v3255 = vld [vmem:[#allocation15 + $0xa30] sm:$0xff]
    %v3256 = vld [vmem:[#allocation15 + $0xa38] sm:$0xff]
    %v3257 = vld [vmem:[#allocation15 + $0xa40] sm:$0xff]
    %v3258 = vld [vmem:[#allocation15 + $0xa48] sm:$0xff]
    %v3259 = vld [vmem:[#allocation15 + $0xa50] sm:$0xff]
    %v3260 = vld [vmem:[#allocation15 + $0xa58] sm:$0xff]
    %v3261 = vld [vmem:[#allocation15 + $0xa60] sm:$0xff]
    %v3262 = vld [vmem:[#allocation15 + $0xa68] sm:$0xff]
    %v3263 = vld [vmem:[#allocation15 + $0xa70] sm:$0xff]
    %v3264 = vld [vmem:[#allocation15 + $0xa78] sm:$0xff]
    %v3265 = vld [vmem:[#allocation15 + $0xa80] sm:$0xff]
    %v3266 = vld [vmem:[#allocation15 + $0xa88] sm:$0xff]
    %v3267 = vld [vmem:[#allocation15 + $0xa90] sm:$0xff]
    %v3268 = vld [vmem:[#allocation15 + $0xa98] sm:$0xff]
    %v3269 = vld [vmem:[#allocation15 + $0xaa0] sm:$0xff]
    %v3270 = vld [vmem:[#allocation15 + $0xaa8] sm:$0xff]
    %v3271 = vld [vmem:[#allocation15 + $0xab0] sm:$0xff]
    %v3272 = vld [vmem:[#allocation15 + $0xab8] sm:$0xff]
    %v3273 = vld [vmem:[#allocation15 + $0xac0] sm:$0xff]
    %v3274 = vld [vmem:[#allocation15 + $0xac8] sm:$0xff]
    %v3275 = vld [vmem:[#allocation15 + $0xad0] sm:$0xff]
    %v3276 = vld [vmem:[#allocation15 + $0xad8] sm:$0xff]
    %v3277 = vld [vmem:[#allocation15 + $0xae0] sm:$0xff]
    %v3278 = vld [vmem:[#allocation15 + $0xae8] sm:$0xff]
    %v3279 = vld [vmem:[#allocation15 + $0xaf0] sm:$0xff]
    %v3280 = vld [vmem:[#allocation15 + $0xaf8] sm:$0xff]
    %v3281 = vld [vmem:[#allocation15 + $0xb00] sm:$0xff]
    %v3282 = vld [vmem:[#allocation15 + $0xb08] sm:$0xff]
    %v3283 = vld [vmem:[#allocation15 + $0xb10] sm:$0xff]
    %v3284 = vld [vmem:[#allocation15 + $0xb18] sm:$0xff]
    %v3285 = vld [vmem:[#allocation15 + $0xb20] sm:$0xff]
    %v3286 = vld [vmem:[#allocation15 + $0xb28] sm:$0xff]
    %v3287 = vld [vmem:[#allocation15 + $0xb30] sm:$0xff]
    %v3288 = vld [vmem:[#allocation15 + $0xb38] sm:$0xff]
    %v3289 = vld [vmem:[#allocation15 + $0xb40] sm:$0xff]
    %v3290 = vld [vmem:[#allocation15 + $0xb48] sm:$0xff]
    %v3291 = vld [vmem:[#allocation15 + $0xb50] sm:$0xff]
    %v3292 = vld [vmem:[#allocation15 + $0xb58] sm:$0xff]
    %v3293 = vld [vmem:[#allocation15 + $0xb60] sm:$0xff]
    %v3294 = vld [vmem:[#allocation15 + $0xb68] sm:$0xff]
    %v3295 = vld [vmem:[#allocation15 + $0xb70] sm:$0xff]
    %v3296 = vld [vmem:[#allocation15 + $0xb78] sm:$0xff]
    %v3297 = vld [vmem:[#allocation15 + $0xb80] sm:$0xff]
    %v3298 = vld [vmem:[#allocation15 + $0xb88] sm:$0xff]
    %v3299 = vld [vmem:[#allocation15 + $0xb90] sm:$0xff]
    %v3300 = vld [vmem:[#allocation15 + $0xb98] sm:$0xff]
    %v3301 = vld [vmem:[#allocation15 + $0xba0] sm:$0xff]
    %v3302 = vld [vmem:[#allocation15 + $0xba8] sm:$0xff]
    %v3303 = vld [vmem:[#allocation15 + $0xbb0] sm:$0xff]
    %v3304 = vld [vmem:[#allocation15 + $0xbb8] sm:$0xff]
    %v3305 = vld [vmem:[#allocation15 + $0xbc0] sm:$0xff]
    %v3306 = vld [vmem:[#allocation15 + $0xbc8] sm:$0xff]
    %v3307 = vld [vmem:[#allocation15 + $0xbd0] sm:$0xff]
    %v3308 = vld [vmem:[#allocation15 + $0xbd8] sm:$0xff]
    %v3309 = vld [vmem:[#allocation15 + $0xbe0] sm:$0xff]
    %v3310 = vld [vmem:[#allocation15 + $0xbe8] sm:$0xff]
    %v3311 = vld [vmem:[#allocation15 + $0xbf0] sm:$0xff]
    %v3312 = vld [vmem:[#allocation15 + $0xbf8] sm:$0xff]
    %v3313 = vld [vmem:[#allocation17] sm:$0x3f]
    %v3315 = vperm.slane %v3313, 0
    %v3316 = vperm.slane %v3313, 1
    %v3317 = vperm.slane %v3313, 2
    %v3318 = vperm.slane %v3313, 3
    %v3319 = vperm.slane %v3313, 4
    %v3320 = vperm.slane %v3313, 5
    %v3335 = vunpack.c.l.b16 %v2921
    %v3336 = vunpack.c.h.b16 %v2921
    %v3337 = vunpack.c.l.b16 %v2922
    %v3338 = vunpack.c.h.b16 %v2922
    %v3339 = vunpack.c.l.b16 %v2923
    %v3340 = vunpack.c.h.b16 %v2923
    %v3341 = vunpack.c.l.b16 %v2924
    %v3342 = vunpack.c.h.b16 %v2924
    %v3343 = vunpack.c.l.b16 %v2925
    %v3344 = vunpack.c.h.b16 %v2925
    %v3345 = vunpack.c.l.b16 %v2926
    %v3346 = vunpack.c.h.b16 %v2926
    %v3347 = vunpack.c.l.b16 %v2927
    %v3348 = vunpack.c.h.b16 %v2927
    %v3349 = vunpack.c.l.b16 %v2928
    %v3350 = vunpack.c.h.b16 %v2928
    %v3351 = vpack.c.b16 %v3343, %v3335
    %v3352 = vpack.c.b16 %v3344, %v3336
    %v3353 = vpack.c.b16 %v3345, %v3337
    %v3354 = vpack.c.b16 %v3346, %v3338
    %v3355 = vpack.c.b16 %v3347, %v3339
    %v3356 = vpack.c.b16 %v3348, %v3340
    %v3357 = vpack.c.b16 %v3349, %v3341
    %v3358 = vpack.c.b16 %v3350, %v3342
    %v3751 = vunpack.c.l.b16 %v2929
    %v3752 = vunpack.c.h.b16 %v2929
    %v3753 = vunpack.c.l.b16 %v2930
    %v3754 = vunpack.c.h.b16 %v2930
    %v3755 = vunpack.c.l.b16 %v2931
    %v3756 = vunpack.c.h.b16 %v2931
    %v3757 = vunpack.c.l.b16 %v2932
    %v3758 = vunpack.c.h.b16 %v2932
    %v3759 = vunpack.c.l.b16 %v2933
    %v3760 = vunpack.c.h.b16 %v2933
    %v3761 = vunpack.c.l.b16 %v2934
    %v3762 = vunpack.c.h.b16 %v2934
    %v3763 = vunpack.c.l.b16 %v2935
    %v3764 = vunpack.c.h.b16 %v2935
    %v3765 = vunpack.c.l.b16 %v2936
    %v3766 = vunpack.c.h.b16 %v2936
    %v3767 = vunpack.c.l.b16 %v2937
    %v3768 = vunpack.c.h.b16 %v2937
    %v3769 = vunpack.c.l.b16 %v2938
    %v3770 = vunpack.c.h.b16 %v2938
    %v3771 = vunpack.c.l.b16 %v2939
    %v3772 = vunpack.c.h.b16 %v2939
    %v3773 = vunpack.c.l.b16 %v2940
    %v3774 = vunpack.c.h.b16 %v2940
    %v3775 = vunpack.c.l.b16 %v2941
    %v3776 = vunpack.c.h.b16 %v2941
    %v3777 = vunpack.c.l.b16 %v2942
    %v3778 = vunpack.c.h.b16 %v2942
    %v3779 = vunpack.c.l.b16 %v2943
    %v3780 = vunpack.c.h.b16 %v2943
    %v3781 = vunpack.c.l.b16 %v2944
    %v3782 = vunpack.c.h.b16 %v2944
    %v3783 = vunpack.c.l.b16 %v2945
    %v3784 = vunpack.c.h.b16 %v2945
    %v3785 = vunpack.c.l.b16 %v2946
    %v3786 = vunpack.c.h.b16 %v2946
    %v3787 = vunpack.c.l.b16 %v2947
    %v3788 = vunpack.c.h.b16 %v2947
    %v3789 = vunpack.c.l.b16 %v2948
    %v3790 = vunpack.c.h.b16 %v2948
    %v3791 = vunpack.c.l.b16 %v2949
    %v3792 = vunpack.c.h.b16 %v2949
    %v3793 = vunpack.c.l.b16 %v2950
    %v3794 = vunpack.c.h.b16 %v2950
    %v3795 = vunpack.c.l.b16 %v2951
    %v3796 = vunpack.c.h.b16 %v2951
    %v3797 = vunpack.c.l.b16 %v2952
    %v3798 = vunpack.c.h.b16 %v2952
    %v3799 = vunpack.c.l.b16 %v2953
    %v3800 = vunpack.c.h.b16 %v2953
    %v3801 = vunpack.c.l.b16 %v2954
    %v3802 = vunpack.c.h.b16 %v2954
    %v3803 = vunpack.c.l.b16 %v2955
    %v3804 = vunpack.c.h.b16 %v2955
    %v3805 = vunpack.c.l.b16 %v2956
    %v3806 = vunpack.c.h.b16 %v2956
    %v3807 = vunpack.c.l.b16 %v2957
    %v3808 = vunpack.c.h.b16 %v2957
    %v3809 = vunpack.c.l.b16 %v2958
    %v3810 = vunpack.c.h.b16 %v2958
    %v3811 = vunpack.c.l.b16 %v2959
    %v3812 = vunpack.c.h.b16 %v2959
    %v3813 = vunpack.c.l.b16 %v2960
    %v3814 = vunpack.c.h.b16 %v2960
    %v3815 = vunpack.c.l.b16 %v2961
    %v3816 = vunpack.c.h.b16 %v2961
    %v3817 = vunpack.c.l.b16 %v2962
    %v3818 = vunpack.c.h.b16 %v2962
    %v3819 = vunpack.c.l.b16 %v2963
    %v3820 = vunpack.c.h.b16 %v2963
    %v3821 = vunpack.c.l.b16 %v2964
    %v3822 = vunpack.c.h.b16 %v2964
    %v3823 = vunpack.c.l.b16 %v2965
    %v3824 = vunpack.c.h.b16 %v2965
    %v3825 = vunpack.c.l.b16 %v2966
    %v3826 = vunpack.c.h.b16 %v2966
    %v3827 = vunpack.c.l.b16 %v2967
    %v3828 = vunpack.c.h.b16 %v2967
    %v3829 = vunpack.c.l.b16 %v2968
    %v3830 = vunpack.c.h.b16 %v2968
    %v3831 = vunpack.c.l.b16 %v2969
    %v3832 = vunpack.c.h.b16 %v2969
    %v3833 = vunpack.c.l.b16 %v2970
    %v3834 = vunpack.c.h.b16 %v2970
    %v3835 = vunpack.c.l.b16 %v2971
    %v3836 = vunpack.c.h.b16 %v2971
    %v3837 = vunpack.c.l.b16 %v2972
    %v3838 = vunpack.c.h.b16 %v2972
    %v3839 = vunpack.c.l.b16 %v2973
    %v3840 = vunpack.c.h.b16 %v2973
    %v3841 = vunpack.c.l.b16 %v2974
    %v3842 = vunpack.c.h.b16 %v2974
    %v3843 = vunpack.c.l.b16 %v2975
    %v3844 = vunpack.c.h.b16 %v2975
    %v3845 = vunpack.c.l.b16 %v2976
    %v3846 = vunpack.c.h.b16 %v2976
    %v3847 = vunpack.c.l.b16 %v2977
    %v3848 = vunpack.c.h.b16 %v2977
    %v3849 = vunpack.c.l.b16 %v2978
    %v3850 = vunpack.c.h.b16 %v2978
    %v3851 = vunpack.c.l.b16 %v2979
    %v3852 = vunpack.c.h.b16 %v2979
    %v3853 = vunpack.c.l.b16 %v2980
    %v3854 = vunpack.c.h.b16 %v2980
    %v3855 = vunpack.c.l.b16 %v2981
    %v3856 = vunpack.c.h.b16 %v2981
    %v3857 = vunpack.c.l.b16 %v2982
    %v3858 = vunpack.c.h.b16 %v2982
    %v3859 = vunpack.c.l.b16 %v2983
    %v3860 = vunpack.c.h.b16 %v2983
    %v3861 = vunpack.c.l.b16 %v2984
    %v3862 = vunpack.c.h.b16 %v2984
    %v3863 = vunpack.c.l.b16 %v2985
    %v3864 = vunpack.c.h.b16 %v2985
    %v3865 = vunpack.c.l.b16 %v2986
    %v3866 = vunpack.c.h.b16 %v2986
    %v3867 = vunpack.c.l.b16 %v2987
    %v3868 = vunpack.c.h.b16 %v2987
    %v3869 = vunpack.c.l.b16 %v2988
    %v3870 = vunpack.c.h.b16 %v2988
    %v3871 = vunpack.c.l.b16 %v2989
    %v3872 = vunpack.c.h.b16 %v2989
    %v3873 = vunpack.c.l.b16 %v2990
    %v3874 = vunpack.c.h.b16 %v2990
    %v3875 = vunpack.c.l.b16 %v2991
    %v3876 = vunpack.c.h.b16 %v2991
    %v3877 = vunpack.c.l.b16 %v2992
    %v3878 = vunpack.c.h.b16 %v2992
    %v3879 = vunpack.c.l.b16 %v2993
    %v3880 = vunpack.c.h.b16 %v2993
    %v3881 = vunpack.c.l.b16 %v2994
    %v3882 = vunpack.c.h.b16 %v2994
    %v3883 = vunpack.c.l.b16 %v2995
    %v3884 = vunpack.c.h.b16 %v2995
    %v3885 = vunpack.c.l.b16 %v2996
    %v3886 = vunpack.c.h.b16 %v2996
    %v3887 = vunpack.c.l.b16 %v2997
    %v3888 = vunpack.c.h.b16 %v2997
    %v3889 = vunpack.c.l.b16 %v2998
    %v3890 = vunpack.c.h.b16 %v2998
    %v3891 = vunpack.c.l.b16 %v2999
    %v3892 = vunpack.c.h.b16 %v2999
    %v3893 = vunpack.c.l.b16 %v3000
    %v3894 = vunpack.c.h.b16 %v3000
    %v3895 = vunpack.c.l.b16 %v3001
    %v3896 = vunpack.c.h.b16 %v3001
    %v3897 = vunpack.c.l.b16 %v3002
    %v3898 = vunpack.c.h.b16 %v3002
    %v3899 = vunpack.c.l.b16 %v3003
    %v3900 = vunpack.c.h.b16 %v3003
    %v3901 = vunpack.c.l.b16 %v3004
    %v3902 = vunpack.c.h.b16 %v3004
    %v3903 = vunpack.c.l.b16 %v3005
    %v3904 = vunpack.c.h.b16 %v3005
    %v3905 = vunpack.c.l.b16 %v3006
    %v3906 = vunpack.c.h.b16 %v3006
    %v3907 = vunpack.c.l.b16 %v3007
    %v3908 = vunpack.c.h.b16 %v3007
    %v3909 = vunpack.c.l.b16 %v3008
    %v3910 = vunpack.c.h.b16 %v3008
    %v3911 = vunpack.c.l.b16 %v3009
    %v3912 = vunpack.c.h.b16 %v3009
    %v3913 = vunpack.c.l.b16 %v3010
    %v3914 = vunpack.c.h.b16 %v3010
    %v3915 = vunpack.c.l.b16 %v3011
    %v3916 = vunpack.c.h.b16 %v3011
    %v3917 = vunpack.c.l.b16 %v3012
    %v3918 = vunpack.c.h.b16 %v3012
    %v3919 = vunpack.c.l.b16 %v3013
    %v3920 = vunpack.c.h.b16 %v3013
    %v3921 = vunpack.c.l.b16 %v3014
    %v3922 = vunpack.c.h.b16 %v3014
    %v3923 = vunpack.c.l.b16 %v3015
    %v3924 = vunpack.c.h.b16 %v3015
    %v3925 = vunpack.c.l.b16 %v3016
    %v3926 = vunpack.c.h.b16 %v3016
    %v3927 = vunpack.c.l.b16 %v3017
    %v3928 = vunpack.c.h.b16 %v3017
    %v3929 = vunpack.c.l.b16 %v3018
    %v3930 = vunpack.c.h.b16 %v3018
    %v3931 = vunpack.c.l.b16 %v3019
    %v3932 = vunpack.c.h.b16 %v3019
    %v3933 = vunpack.c.l.b16 %v3020
    %v3934 = vunpack.c.h.b16 %v3020
    %v3935 = vunpack.c.l.b16 %v3021
    %v3936 = vunpack.c.h.b16 %v3021
    %v3937 = vunpack.c.l.b16 %v3022
    %v3938 = vunpack.c.h.b16 %v3022
    %v3939 = vunpack.c.l.b16 %v3023
    %v3940 = vunpack.c.h.b16 %v3023
    %v3941 = vunpack.c.l.b16 %v3024
    %v3942 = vunpack.c.h.b16 %v3024
    %v3943 = vunpack.c.l.b16 %v3025
    %v3944 = vunpack.c.h.b16 %v3025
    %v3945 = vunpack.c.l.b16 %v3026
    %v3946 = vunpack.c.h.b16 %v3026
    %v3947 = vunpack.c.l.b16 %v3027
    %v3948 = vunpack.c.h.b16 %v3027
    %v3949 = vunpack.c.l.b16 %v3028
    %v3950 = vunpack.c.h.b16 %v3028
    %v3951 = vunpack.c.l.b16 %v3029
    %v3952 = vunpack.c.h.b16 %v3029
    %v3953 = vunpack.c.l.b16 %v3030
    %v3954 = vunpack.c.h.b16 %v3030
    %v3955 = vunpack.c.l.b16 %v3031
    %v3956 = vunpack.c.h.b16 %v3031
    %v3957 = vunpack.c.l.b16 %v3032
    %v3958 = vunpack.c.h.b16 %v3032
    %v3959 = vunpack.c.l.b16 %v3033
    %v3960 = vunpack.c.h.b16 %v3033
    %v3961 = vunpack.c.l.b16 %v3034
    %v3962 = vunpack.c.h.b16 %v3034
    %v3963 = vunpack.c.l.b16 %v3035
    %v3964 = vunpack.c.h.b16 %v3035
    %v3965 = vunpack.c.l.b16 %v3036
    %v3966 = vunpack.c.h.b16 %v3036
    %v3967 = vunpack.c.l.b16 %v3037
    %v3968 = vunpack.c.h.b16 %v3037
    %v3969 = vunpack.c.l.b16 %v3038
    %v3970 = vunpack.c.h.b16 %v3038
    %v3971 = vunpack.c.l.b16 %v3039
    %v3972 = vunpack.c.h.b16 %v3039
    %v3973 = vunpack.c.l.b16 %v3040
    %v3974 = vunpack.c.h.b16 %v3040
    %v3975 = vunpack.c.l.b16 %v3041
    %v3976 = vunpack.c.h.b16 %v3041
    %v3977 = vunpack.c.l.b16 %v3042
    %v3978 = vunpack.c.h.b16 %v3042
    %v3979 = vunpack.c.l.b16 %v3043
    %v3980 = vunpack.c.h.b16 %v3043
    %v3981 = vunpack.c.l.b16 %v3044
    %v3982 = vunpack.c.h.b16 %v3044
    %v3983 = vunpack.c.l.b16 %v3045
    %v3984 = vunpack.c.h.b16 %v3045
    %v3985 = vunpack.c.l.b16 %v3046
    %v3986 = vunpack.c.h.b16 %v3046
    %v3987 = vunpack.c.l.b16 %v3047
    %v3988 = vunpack.c.h.b16 %v3047
    %v3989 = vunpack.c.l.b16 %v3048
    %v3990 = vunpack.c.h.b16 %v3048
    %v3991 = vunpack.c.l.b16 %v3049
    %v3992 = vunpack.c.h.b16 %v3049
    %v3993 = vunpack.c.l.b16 %v3050
    %v3994 = vunpack.c.h.b16 %v3050
    %v3995 = vunpack.c.l.b16 %v3051
    %v3996 = vunpack.c.h.b16 %v3051
    %v3997 = vunpack.c.l.b16 %v3052
    %v3998 = vunpack.c.h.b16 %v3052
    %v3999 = vunpack.c.l.b16 %v3053
    %v4000 = vunpack.c.h.b16 %v3053
    %v4001 = vunpack.c.l.b16 %v3054
    %v4002 = vunpack.c.h.b16 %v3054
    %v4003 = vunpack.c.l.b16 %v3055
    %v4004 = vunpack.c.h.b16 %v3055
    %v4005 = vunpack.c.l.b16 %v3056
    %v4006 = vunpack.c.h.b16 %v3056
    %v4007 = vunpack.c.l.b16 %v3057
    %v4008 = vunpack.c.h.b16 %v3057
    %v4009 = vunpack.c.l.b16 %v3058
    %v4010 = vunpack.c.h.b16 %v3058
    %v4011 = vunpack.c.l.b16 %v3059
    %v4012 = vunpack.c.h.b16 %v3059
    %v4013 = vunpack.c.l.b16 %v3060
    %v4014 = vunpack.c.h.b16 %v3060
    %v4015 = vunpack.c.l.b16 %v3061
    %v4016 = vunpack.c.h.b16 %v3061
    %v4017 = vunpack.c.l.b16 %v3062
    %v4018 = vunpack.c.h.b16 %v3062
    %v4019 = vunpack.c.l.b16 %v3063
    %v4020 = vunpack.c.h.b16 %v3063
    %v4021 = vunpack.c.l.b16 %v3064
    %v4022 = vunpack.c.h.b16 %v3064
    %v4023 = vunpack.c.l.b16 %v3065
    %v4024 = vunpack.c.h.b16 %v3065
    %v4025 = vunpack.c.l.b16 %v3066
    %v4026 = vunpack.c.h.b16 %v3066
    %v4027 = vunpack.c.l.b16 %v3067
    %v4028 = vunpack.c.h.b16 %v3067
    %v4029 = vunpack.c.l.b16 %v3068
    %v4030 = vunpack.c.h.b16 %v3068
    %v4031 = vunpack.c.l.b16 %v3069
    %v4032 = vunpack.c.h.b16 %v3069
    %v4033 = vunpack.c.l.b16 %v3070
    %v4034 = vunpack.c.h.b16 %v3070
    %v4035 = vunpack.c.l.b16 %v3071
    %v4036 = vunpack.c.h.b16 %v3071
    %v4037 = vunpack.c.l.b16 %v3072
    %v4038 = vunpack.c.h.b16 %v3072
    %v4039 = vunpack.c.l.b16 %v3073
    %v4040 = vunpack.c.h.b16 %v3073
    %v4041 = vunpack.c.l.b16 %v3074
    %v4042 = vunpack.c.h.b16 %v3074
    %v4043 = vunpack.c.l.b16 %v3075
    %v4044 = vunpack.c.h.b16 %v3075
    %v4045 = vunpack.c.l.b16 %v3076
    %v4046 = vunpack.c.h.b16 %v3076
    %v4047 = vunpack.c.l.b16 %v3077
    %v4048 = vunpack.c.h.b16 %v3077
    %v4049 = vunpack.c.l.b16 %v3078
    %v4050 = vunpack.c.h.b16 %v3078
    %v4051 = vunpack.c.l.b16 %v3079
    %v4052 = vunpack.c.h.b16 %v3079
    %v4053 = vunpack.c.l.b16 %v3080
    %v4054 = vunpack.c.h.b16 %v3080
    %v4055 = vunpack.c.l.b16 %v3081
    %v4056 = vunpack.c.h.b16 %v3081
    %v4057 = vunpack.c.l.b16 %v3082
    %v4058 = vunpack.c.h.b16 %v3082
    %v4059 = vunpack.c.l.b16 %v3083
    %v4060 = vunpack.c.h.b16 %v3083
    %v4061 = vunpack.c.l.b16 %v3084
    %v4062 = vunpack.c.h.b16 %v3084
    %v4063 = vunpack.c.l.b16 %v3085
    %v4064 = vunpack.c.h.b16 %v3085
    %v4065 = vunpack.c.l.b16 %v3086
    %v4066 = vunpack.c.h.b16 %v3086
    %v4067 = vunpack.c.l.b16 %v3087
    %v4068 = vunpack.c.h.b16 %v3087
    %v4069 = vunpack.c.l.b16 %v3088
    %v4070 = vunpack.c.h.b16 %v3088
    %v4071 = vunpack.c.l.b16 %v3089
    %v4072 = vunpack.c.h.b16 %v3089
    %v4073 = vunpack.c.l.b16 %v3090
    %v4074 = vunpack.c.h.b16 %v3090
    %v4075 = vunpack.c.l.b16 %v3091
    %v4076 = vunpack.c.h.b16 %v3091
    %v4077 = vunpack.c.l.b16 %v3092
    %v4078 = vunpack.c.h.b16 %v3092
    %v4079 = vunpack.c.l.b16 %v3093
    %v4080 = vunpack.c.h.b16 %v3093
    %v4081 = vunpack.c.l.b16 %v3094
    %v4082 = vunpack.c.h.b16 %v3094
    %v4083 = vunpack.c.l.b16 %v3095
    %v4084 = vunpack.c.h.b16 %v3095
    %v4085 = vunpack.c.l.b16 %v3096
    %v4086 = vunpack.c.h.b16 %v3096
    %v4087 = vunpack.c.l.b16 %v3097
    %v4088 = vunpack.c.h.b16 %v3097
    %v4089 = vunpack.c.l.b16 %v3098
    %v4090 = vunpack.c.h.b16 %v3098
    %v4091 = vunpack.c.l.b16 %v3099
    %v4092 = vunpack.c.h.b16 %v3099
    %v4093 = vunpack.c.l.b16 %v3100
    %v4094 = vunpack.c.h.b16 %v3100
    %v4095 = vunpack.c.l.b16 %v3101
    %v4096 = vunpack.c.h.b16 %v3101
    %v4097 = vunpack.c.l.b16 %v3102
    %v4098 = vunpack.c.h.b16 %v3102
    %v4099 = vunpack.c.l.b16 %v3103
    %v4100 = vunpack.c.h.b16 %v3103
    %v4101 = vunpack.c.l.b16 %v3104
    %v4102 = vunpack.c.h.b16 %v3104
    %v4103 = vunpack.c.l.b16 %v3105
    %v4104 = vunpack.c.h.b16 %v3105
    %v4105 = vunpack.c.l.b16 %v3106
    %v4106 = vunpack.c.h.b16 %v3106
    %v4107 = vunpack.c.l.b16 %v3107
    %v4108 = vunpack.c.h.b16 %v3107
    %v4109 = vunpack.c.l.b16 %v3108
    %v4110 = vunpack.c.h.b16 %v3108
    %v4111 = vunpack.c.l.b16 %v3109
    %v4112 = vunpack.c.h.b16 %v3109
    %v4113 = vunpack.c.l.b16 %v3110
    %v4114 = vunpack.c.h.b16 %v3110
    %v4115 = vunpack.c.l.b16 %v3111
    %v4116 = vunpack.c.h.b16 %v3111
    %v4117 = vunpack.c.l.b16 %v3112
    %v4118 = vunpack.c.h.b16 %v3112
    %v4119 = vunpack.c.l.b16 %v3113
    %v4120 = vunpack.c.h.b16 %v3113
    %v4121 = vunpack.c.l.b16 %v3114
    %v4122 = vunpack.c.h.b16 %v3114
    %v4123 = vunpack.c.l.b16 %v3115
    %v4124 = vunpack.c.h.b16 %v3115
    %v4125 = vunpack.c.l.b16 %v3116
    %v4126 = vunpack.c.h.b16 %v3116
    %v4127 = vunpack.c.l.b16 %v3117
    %v4128 = vunpack.c.h.b16 %v3117
    %v4129 = vunpack.c.l.b16 %v3118
    %v4130 = vunpack.c.h.b16 %v3118
    %v4131 = vunpack.c.l.b16 %v3119
    %v4132 = vunpack.c.h.b16 %v3119
    %v4133 = vunpack.c.l.b16 %v3120
    %v4134 = vunpack.c.h.b16 %v3120
    %v4135 = vunpack.c.l.b16 %v3121
    %v4136 = vunpack.c.h.b16 %v3121
    %v4137 = vunpack.c.l.b16 %v3122
    %v4138 = vunpack.c.h.b16 %v3122
    %v4139 = vunpack.c.l.b16 %v3123
    %v4140 = vunpack.c.h.b16 %v3123
    %v4141 = vunpack.c.l.b16 %v3124
    %v4142 = vunpack.c.h.b16 %v3124
    %v4143 = vunpack.c.l.b16 %v3125
    %v4144 = vunpack.c.h.b16 %v3125
    %v4145 = vunpack.c.l.b16 %v3126
    %v4146 = vunpack.c.h.b16 %v3126
    %v4147 = vunpack.c.l.b16 %v3127
    %v4148 = vunpack.c.h.b16 %v3127
    %v4149 = vunpack.c.l.b16 %v3128
    %v4150 = vunpack.c.h.b16 %v3128
    %v4151 = vunpack.c.l.b16 %v3129
    %v4152 = vunpack.c.h.b16 %v3129
    %v4153 = vunpack.c.l.b16 %v3130
    %v4154 = vunpack.c.h.b16 %v3130
    %v4155 = vunpack.c.l.b16 %v3131
    %v4156 = vunpack.c.h.b16 %v3131
    %v4157 = vunpack.c.l.b16 %v3132
    %v4158 = vunpack.c.h.b16 %v3132
    %v4159 = vunpack.c.l.b16 %v3133
    %v4160 = vunpack.c.h.b16 %v3133
    %v4161 = vunpack.c.l.b16 %v3134
    %v4162 = vunpack.c.h.b16 %v3134
    %v4163 = vunpack.c.l.b16 %v3135
    %v4164 = vunpack.c.h.b16 %v3135
    %v4165 = vunpack.c.l.b16 %v3136
    %v4166 = vunpack.c.h.b16 %v3136
    %v4167 = vunpack.c.l.b16 %v3137
    %v4168 = vunpack.c.h.b16 %v3137
    %v4169 = vunpack.c.l.b16 %v3138
    %v4170 = vunpack.c.h.b16 %v3138
    %v4171 = vunpack.c.l.b16 %v3139
    %v4172 = vunpack.c.h.b16 %v3139
    %v4173 = vunpack.c.l.b16 %v3140
    %v4174 = vunpack.c.h.b16 %v3140
    %v4175 = vunpack.c.l.b16 %v3141
    %v4176 = vunpack.c.h.b16 %v3141
    %v4177 = vunpack.c.l.b16 %v3142
    %v4178 = vunpack.c.h.b16 %v3142
    %v4179 = vunpack.c.l.b16 %v3143
    %v4180 = vunpack.c.h.b16 %v3143
    %v4181 = vunpack.c.l.b16 %v3144
    %v4182 = vunpack.c.h.b16 %v3144
    %v4183 = vunpack.c.l.b16 %v3145
    %v4184 = vunpack.c.h.b16 %v3145
    %v4185 = vunpack.c.l.b16 %v3146
    %v4186 = vunpack.c.h.b16 %v3146
    %v4187 = vunpack.c.l.b16 %v3147
    %v4188 = vunpack.c.h.b16 %v3147
    %v4189 = vunpack.c.l.b16 %v3148
    %v4190 = vunpack.c.h.b16 %v3148
    %v4191 = vunpack.c.l.b16 %v3149
    %v4192 = vunpack.c.h.b16 %v3149
    %v4193 = vunpack.c.l.b16 %v3150
    %v4194 = vunpack.c.h.b16 %v3150
    %v4195 = vunpack.c.l.b16 %v3151
    %v4196 = vunpack.c.h.b16 %v3151
    %v4197 = vunpack.c.l.b16 %v3152
    %v4198 = vunpack.c.h.b16 %v3152
    %v4199 = vunpack.c.l.b16 %v3153
    %v4200 = vunpack.c.h.b16 %v3153
    %v4201 = vunpack.c.l.b16 %v3154
    %v4202 = vunpack.c.h.b16 %v3154
    %v4203 = vunpack.c.l.b16 %v3155
    %v4204 = vunpack.c.h.b16 %v3155
    %v4205 = vunpack.c.l.b16 %v3156
    %v4206 = vunpack.c.h.b16 %v3156
    %v4207 = vunpack.c.l.b16 %v3157
    %v4208 = vunpack.c.h.b16 %v3157
    %v4209 = vunpack.c.l.b16 %v3158
    %v4210 = vunpack.c.h.b16 %v3158
    %v4211 = vunpack.c.l.b16 %v3159
    %v4212 = vunpack.c.h.b16 %v3159
    %v4213 = vunpack.c.l.b16 %v3160
    %v4214 = vunpack.c.h.b16 %v3160
    %v4215 = vunpack.c.l.b16 %v3161
    %v4216 = vunpack.c.h.b16 %v3161
    %v4217 = vunpack.c.l.b16 %v3162
    %v4218 = vunpack.c.h.b16 %v3162
    %v4219 = vunpack.c.l.b16 %v3163
    %v4220 = vunpack.c.h.b16 %v3163
    %v4221 = vunpack.c.l.b16 %v3164
    %v4222 = vunpack.c.h.b16 %v3164
    %v4223 = vunpack.c.l.b16 %v3165
    %v4224 = vunpack.c.h.b16 %v3165
    %v4225 = vunpack.c.l.b16 %v3166
    %v4226 = vunpack.c.h.b16 %v3166
    %v4227 = vunpack.c.l.b16 %v3167
    %v4228 = vunpack.c.h.b16 %v3167
    %v4229 = vunpack.c.l.b16 %v3168
    %v4230 = vunpack.c.h.b16 %v3168
    %v4231 = vunpack.c.l.b16 %v3169
    %v4232 = vunpack.c.h.b16 %v3169
    %v4233 = vunpack.c.l.b16 %v3170
    %v4234 = vunpack.c.h.b16 %v3170
    %v4235 = vunpack.c.l.b16 %v3171
    %v4236 = vunpack.c.h.b16 %v3171
    %v4237 = vunpack.c.l.b16 %v3172
    %v4238 = vunpack.c.h.b16 %v3172
    %v4239 = vunpack.c.l.b16 %v3173
    %v4240 = vunpack.c.h.b16 %v3173
    %v4241 = vunpack.c.l.b16 %v3174
    %v4242 = vunpack.c.h.b16 %v3174
    %v4243 = vunpack.c.l.b16 %v3175
    %v4244 = vunpack.c.h.b16 %v3175
    %v4245 = vunpack.c.l.b16 %v3176
    %v4246 = vunpack.c.h.b16 %v3176
    %v4247 = vunpack.c.l.b16 %v3177
    %v4248 = vunpack.c.h.b16 %v3177
    %v4249 = vunpack.c.l.b16 %v3178
    %v4250 = vunpack.c.h.b16 %v3178
    %v4251 = vunpack.c.l.b16 %v3179
    %v4252 = vunpack.c.h.b16 %v3179
    %v4253 = vunpack.c.l.b16 %v3180
    %v4254 = vunpack.c.h.b16 %v3180
    %v4255 = vunpack.c.l.b16 %v3181
    %v4256 = vunpack.c.h.b16 %v3181
    %v4257 = vunpack.c.l.b16 %v3182
    %v4258 = vunpack.c.h.b16 %v3182
    %v4259 = vunpack.c.l.b16 %v3183
    %v4260 = vunpack.c.h.b16 %v3183
    %v4261 = vunpack.c.l.b16 %v3184
    %v4262 = vunpack.c.h.b16 %v3184
    %v4263 = vunpack.c.l.b16 %v3185
    %v4264 = vunpack.c.h.b16 %v3185
    %v4265 = vunpack.c.l.b16 %v3186
    %v4266 = vunpack.c.h.b16 %v3186
    %v4267 = vunpack.c.l.b16 %v3187
    %v4268 = vunpack.c.h.b16 %v3187
    %v4269 = vunpack.c.l.b16 %v3188
    %v4270 = vunpack.c.h.b16 %v3188
    %v4271 = vunpack.c.l.b16 %v3189
    %v4272 = vunpack.c.h.b16 %v3189
    %v4273 = vunpack.c.l.b16 %v3190
    %v4274 = vunpack.c.h.b16 %v3190
    %v4275 = vunpack.c.l.b16 %v3191
    %v4276 = vunpack.c.h.b16 %v3191
    %v4277 = vunpack.c.l.b16 %v3192
    %v4278 = vunpack.c.h.b16 %v3192
    %v4279 = vunpack.c.l.b16 %v3193
    %v4280 = vunpack.c.h.b16 %v3193
    %v4281 = vunpack.c.l.b16 %v3194
    %v4282 = vunpack.c.h.b16 %v3194
    %v4283 = vunpack.c.l.b16 %v3195
    %v4284 = vunpack.c.h.b16 %v3195
    %v4285 = vunpack.c.l.b16 %v3196
    %v4286 = vunpack.c.h.b16 %v3196
    %v4287 = vunpack.c.l.b16 %v3197
    %v4288 = vunpack.c.h.b16 %v3197
    %v4289 = vunpack.c.l.b16 %v3198
    %v4290 = vunpack.c.h.b16 %v3198
    %v4291 = vunpack.c.l.b16 %v3199
    %v4292 = vunpack.c.h.b16 %v3199
    %v4293 = vunpack.c.l.b16 %v3200
    %v4294 = vunpack.c.h.b16 %v3200
    %v4295 = vunpack.c.l.b16 %v3201
    %v4296 = vunpack.c.h.b16 %v3201
    %v4297 = vunpack.c.l.b16 %v3202
    %v4298 = vunpack.c.h.b16 %v3202
    %v4299 = vunpack.c.l.b16 %v3203
    %v4300 = vunpack.c.h.b16 %v3203
    %v4301 = vunpack.c.l.b16 %v3204
    %v4302 = vunpack.c.h.b16 %v3204
    %v4303 = vunpack.c.l.b16 %v3205
    %v4304 = vunpack.c.h.b16 %v3205
    %v4305 = vunpack.c.l.b16 %v3206
    %v4306 = vunpack.c.h.b16 %v3206
    %v4307 = vunpack.c.l.b16 %v3207
    %v4308 = vunpack.c.h.b16 %v3207
    %v4309 = vunpack.c.l.b16 %v3208
    %v4310 = vunpack.c.h.b16 %v3208
    %v4311 = vunpack.c.l.b16 %v3209
    %v4312 = vunpack.c.h.b16 %v3209
    %v4313 = vunpack.c.l.b16 %v3210
    %v4314 = vunpack.c.h.b16 %v3210
    %v4315 = vunpack.c.l.b16 %v3211
    %v4316 = vunpack.c.h.b16 %v3211
    %v4317 = vunpack.c.l.b16 %v3212
    %v4318 = vunpack.c.h.b16 %v3212
    %v4319 = vunpack.c.l.b16 %v3213
    %v4320 = vunpack.c.h.b16 %v3213
    %v4321 = vunpack.c.l.b16 %v3214
    %v4322 = vunpack.c.h.b16 %v3214
    %v4323 = vunpack.c.l.b16 %v3215
    %v4324 = vunpack.c.h.b16 %v3215
    %v4325 = vunpack.c.l.b16 %v3216
    %v4326 = vunpack.c.h.b16 %v3216
    %v4327 = vunpack.c.l.b16 %v3217
    %v4328 = vunpack.c.h.b16 %v3217
    %v4329 = vunpack.c.l.b16 %v3218
    %v4330 = vunpack.c.h.b16 %v3218
    %v4331 = vunpack.c.l.b16 %v3219
    %v4332 = vunpack.c.h.b16 %v3219
    %v4333 = vunpack.c.l.b16 %v3220
    %v4334 = vunpack.c.h.b16 %v3220
    %v4335 = vunpack.c.l.b16 %v3221
    %v4336 = vunpack.c.h.b16 %v3221
    %v4337 = vunpack.c.l.b16 %v3222
    %v4338 = vunpack.c.h.b16 %v3222
    %v4339 = vunpack.c.l.b16 %v3223
    %v4340 = vunpack.c.h.b16 %v3223
    %v4341 = vunpack.c.l.b16 %v3224
    %v4342 = vunpack.c.h.b16 %v3224
    %v4343 = vunpack.c.l.b16 %v3225
    %v4344 = vunpack.c.h.b16 %v3225
    %v4345 = vunpack.c.l.b16 %v3226
    %v4346 = vunpack.c.h.b16 %v3226
    %v4347 = vunpack.c.l.b16 %v3227
    %v4348 = vunpack.c.h.b16 %v3227
    %v4349 = vunpack.c.l.b16 %v3228
    %v4350 = vunpack.c.h.b16 %v3228
    %v4351 = vunpack.c.l.b16 %v3229
    %v4352 = vunpack.c.h.b16 %v3229
    %v4353 = vunpack.c.l.b16 %v3230
    %v4354 = vunpack.c.h.b16 %v3230
    %v4355 = vunpack.c.l.b16 %v3231
    %v4356 = vunpack.c.h.b16 %v3231
    %v4357 = vunpack.c.l.b16 %v3232
    %v4358 = vunpack.c.h.b16 %v3232
    %v4359 = vunpack.c.l.b16 %v3233
    %v4360 = vunpack.c.h.b16 %v3233
    %v4361 = vunpack.c.l.b16 %v3234
    %v4362 = vunpack.c.h.b16 %v3234
    %v4363 = vunpack.c.l.b16 %v3235
    %v4364 = vunpack.c.h.b16 %v3235
    %v4365 = vunpack.c.l.b16 %v3236
    %v4366 = vunpack.c.h.b16 %v3236
    %v4367 = vunpack.c.l.b16 %v3237
    %v4368 = vunpack.c.h.b16 %v3237
    %v4369 = vunpack.c.l.b16 %v3238
    %v4370 = vunpack.c.h.b16 %v3238
    %v4371 = vunpack.c.l.b16 %v3239
    %v4372 = vunpack.c.h.b16 %v3239
    %v4373 = vunpack.c.l.b16 %v3240
    %v4374 = vunpack.c.h.b16 %v3240
    %v4375 = vunpack.c.l.b16 %v3241
    %v4376 = vunpack.c.h.b16 %v3241
    %v4377 = vunpack.c.l.b16 %v3242
    %v4378 = vunpack.c.h.b16 %v3242
    %v4379 = vunpack.c.l.b16 %v3243
    %v4380 = vunpack.c.h.b16 %v3243
    %v4381 = vunpack.c.l.b16 %v3244
    %v4382 = vunpack.c.h.b16 %v3244
    %v4383 = vunpack.c.l.b16 %v3245
    %v4384 = vunpack.c.h.b16 %v3245
    %v4385 = vunpack.c.l.b16 %v3246
    %v4386 = vunpack.c.h.b16 %v3246
    %v4387 = vunpack.c.l.b16 %v3247
    %v4388 = vunpack.c.h.b16 %v3247
    %v4389 = vunpack.c.l.b16 %v3248
    %v4390 = vunpack.c.h.b16 %v3248
    %v4391 = vunpack.c.l.b16 %v3249
    %v4392 = vunpack.c.h.b16 %v3249
    %v4393 = vunpack.c.l.b16 %v3250
    %v4394 = vunpack.c.h.b16 %v3250
    %v4395 = vunpack.c.l.b16 %v3251
    %v4396 = vunpack.c.h.b16 %v3251
    %v4397 = vunpack.c.l.b16 %v3252
    %v4398 = vunpack.c.h.b16 %v3252
    %v4399 = vunpack.c.l.b16 %v3253
    %v4400 = vunpack.c.h.b16 %v3253
    %v4401 = vunpack.c.l.b16 %v3254
    %v4402 = vunpack.c.h.b16 %v3254
    %v4403 = vunpack.c.l.b16 %v3255
    %v4404 = vunpack.c.h.b16 %v3255
    %v4405 = vunpack.c.l.b16 %v3256
    %v4406 = vunpack.c.h.b16 %v3256
    %v4407 = vunpack.c.l.b16 %v3257
    %v4408 = vunpack.c.h.b16 %v3257
    %v4409 = vunpack.c.l.b16 %v3258
    %v4410 = vunpack.c.h.b16 %v3258
    %v4411 = vunpack.c.l.b16 %v3259
    %v4412 = vunpack.c.h.b16 %v3259
    %v4413 = vunpack.c.l.b16 %v3260
    %v4414 = vunpack.c.h.b16 %v3260
    %v4415 = vunpack.c.l.b16 %v3261
    %v4416 = vunpack.c.h.b16 %v3261
    %v4417 = vunpack.c.l.b16 %v3262
    %v4418 = vunpack.c.h.b16 %v3262
    %v4419 = vunpack.c.l.b16 %v3263
    %v4420 = vunpack.c.h.b16 %v3263
    %v4421 = vunpack.c.l.b16 %v3264
    %v4422 = vunpack.c.h.b16 %v3264
    %v4423 = vunpack.c.l.b16 %v3265
    %v4424 = vunpack.c.h.b16 %v3265
    %v4425 = vunpack.c.l.b16 %v3266
    %v4426 = vunpack.c.h.b16 %v3266
    %v4427 = vunpack.c.l.b16 %v3267
    %v4428 = vunpack.c.h.b16 %v3267
    %v4429 = vunpack.c.l.b16 %v3268
    %v4430 = vunpack.c.h.b16 %v3268
    %v4431 = vunpack.c.l.b16 %v3269
    %v4432 = vunpack.c.h.b16 %v3269
    %v4433 = vunpack.c.l.b16 %v3270
    %v4434 = vunpack.c.h.b16 %v3270
    %v4435 = vunpack.c.l.b16 %v3271
    %v4436 = vunpack.c.h.b16 %v3271
    %v4437 = vunpack.c.l.b16 %v3272
    %v4438 = vunpack.c.h.b16 %v3272
    %v4439 = vunpack.c.l.b16 %v3273
    %v4440 = vunpack.c.h.b16 %v3273
    %v4441 = vunpack.c.l.b16 %v3274
    %v4442 = vunpack.c.h.b16 %v3274
    %v4443 = vunpack.c.l.b16 %v3275
    %v4444 = vunpack.c.h.b16 %v3275
    %v4445 = vunpack.c.l.b16 %v3276
    %v4446 = vunpack.c.h.b16 %v3276
    %v4447 = vunpack.c.l.b16 %v3277
    %v4448 = vunpack.c.h.b16 %v3277
    %v4449 = vunpack.c.l.b16 %v3278
    %v4450 = vunpack.c.h.b16 %v3278
    %v4451 = vunpack.c.l.b16 %v3279
    %v4452 = vunpack.c.h.b16 %v3279
    %v4453 = vunpack.c.l.b16 %v3280
    %v4454 = vunpack.c.h.b16 %v3280
    %v4455 = vunpack.c.l.b16 %v3281
    %v4456 = vunpack.c.h.b16 %v3281
    %v4457 = vunpack.c.l.b16 %v3282
    %v4458 = vunpack.c.h.b16 %v3282
    %v4459 = vunpack.c.l.b16 %v3283
    %v4460 = vunpack.c.h.b16 %v3283
    %v4461 = vunpack.c.l.b16 %v3284
    %v4462 = vunpack.c.h.b16 %v3284
    %v4463 = vunpack.c.l.b16 %v3285
    %v4464 = vunpack.c.h.b16 %v3285
    %v4465 = vunpack.c.l.b16 %v3286
    %v4466 = vunpack.c.h.b16 %v3286
    %v4467 = vunpack.c.l.b16 %v3287
    %v4468 = vunpack.c.h.b16 %v3287
    %v4469 = vunpack.c.l.b16 %v3288
    %v4470 = vunpack.c.h.b16 %v3288
    %v4471 = vunpack.c.l.b16 %v3289
    %v4472 = vunpack.c.h.b16 %v3289
    %v4473 = vunpack.c.l.b16 %v3290
    %v4474 = vunpack.c.h.b16 %v3290
    %v4475 = vunpack.c.l.b16 %v3291
    %v4476 = vunpack.c.h.b16 %v3291
    %v4477 = vunpack.c.l.b16 %v3292
    %v4478 = vunpack.c.h.b16 %v3292
    %v4479 = vunpack.c.l.b16 %v3293
    %v4480 = vunpack.c.h.b16 %v3293
    %v4481 = vunpack.c.l.b16 %v3294
    %v4482 = vunpack.c.h.b16 %v3294
    %v4483 = vunpack.c.l.b16 %v3295
    %v4484 = vunpack.c.h.b16 %v3295
    %v4485 = vunpack.c.l.b16 %v3296
    %v4486 = vunpack.c.h.b16 %v3296
    %v4487 = vunpack.c.l.b16 %v3297
    %v4488 = vunpack.c.h.b16 %v3297
    %v4489 = vunpack.c.l.b16 %v3298
    %v4490 = vunpack.c.h.b16 %v3298
    %v4491 = vunpack.c.l.b16 %v3299
    %v4492 = vunpack.c.h.b16 %v3299
    %v4493 = vunpack.c.l.b16 %v3300
    %v4494 = vunpack.c.h.b16 %v3300
    %v4495 = vunpack.c.l.b16 %v3301
    %v4496 = vunpack.c.h.b16 %v3301
    %v4497 = vunpack.c.l.b16 %v3302
    %v4498 = vunpack.c.h.b16 %v3302
    %v4499 = vunpack.c.l.b16 %v3303
    %v4500 = vunpack.c.h.b16 %v3303
    %v4501 = vunpack.c.l.b16 %v3304
    %v4502 = vunpack.c.h.b16 %v3304
    %v4503 = vunpack.c.l.b16 %v3305
    %v4504 = vunpack.c.h.b16 %v3305
    %v4505 = vunpack.c.l.b16 %v3306
    %v4506 = vunpack.c.h.b16 %v3306
    %v4507 = vunpack.c.l.b16 %v3307
    %v4508 = vunpack.c.h.b16 %v3307
    %v4509 = vunpack.c.l.b16 %v3308
    %v4510 = vunpack.c.h.b16 %v3308
    %v4511 = vunpack.c.l.b16 %v3309
    %v4512 = vunpack.c.h.b16 %v3309
    %v4513 = vunpack.c.l.b16 %v3310
    %v4514 = vunpack.c.h.b16 %v3310
    %v4515 = vunpack.c.l.b16 %v3311
    %v4516 = vunpack.c.h.b16 %v3311
    %v4517 = vunpack.c.l.b16 %v3312
    %v4518 = vunpack.c.h.b16 %v3312
    %v4519 = vpack.c.b16 %v3757, %v3751
    %v4520 = vpack.c.b16 %v3758, %v3752
    %v4521 = vpack.c.b16 %v3759, %v3753
    %v4522 = vpack.c.b16 %v3760, %v3754
    %v4523 = vpack.c.b16 %v3761, %v3755
    %v4524 = vpack.c.b16 %v3762, %v3756
    %v4525 = vpack.c.b16 %v3769, %v3763
    %v4526 = vpack.c.b16 %v3770, %v3764
    %v4527 = vpack.c.b16 %v3771, %v3765
    %v4528 = vpack.c.b16 %v3772, %v3766
    %v4529 = vpack.c.b16 %v3773, %v3767
    %v4530 = vpack.c.b16 %v3774, %v3768
    %v4531 = vpack.c.b16 %v3781, %v3775
    %v4532 = vpack.c.b16 %v3782, %v3776
    %v4533 = vpack.c.b16 %v3783, %v3777
    %v4534 = vpack.c.b16 %v3784, %v3778
    %v4535 = vpack.c.b16 %v3785, %v3779
    %v4536 = vpack.c.b16 %v3786, %v3780
    %v4537 = vpack.c.b16 %v3793, %v3787
    %v4538 = vpack.c.b16 %v3794, %v3788
    %v4539 = vpack.c.b16 %v3795, %v3789
    %v4540 = vpack.c.b16 %v3796, %v3790
    %v4541 = vpack.c.b16 %v3797, %v3791
    %v4542 = vpack.c.b16 %v3798, %v3792
    %v4543 = vpack.c.b16 %v3805, %v3799
    %v4544 = vpack.c.b16 %v3806, %v3800
    %v4545 = vpack.c.b16 %v3807, %v3801
    %v4546 = vpack.c.b16 %v3808, %v3802
    %v4547 = vpack.c.b16 %v3809, %v3803
    %v4548 = vpack.c.b16 %v3810, %v3804
    %v4549 = vpack.c.b16 %v3817, %v3811
    %v4550 = vpack.c.b16 %v3818, %v3812
    %v4551 = vpack.c.b16 %v3819, %v3813
    %v4552 = vpack.c.b16 %v3820, %v3814
    %v4553 = vpack.c.b16 %v3821, %v3815
    %v4554 = vpack.c.b16 %v3822, %v3816
    %v4555 = vpack.c.b16 %v3829, %v3823
    %v4556 = vpack.c.b16 %v3830, %v3824
    %v4557 = vpack.c.b16 %v3831, %v3825
    %v4558 = vpack.c.b16 %v3832, %v3826
    %v4559 = vpack.c.b16 %v3833, %v3827
    %v4560 = vpack.c.b16 %v3834, %v3828
    %v4561 = vpack.c.b16 %v3841, %v3835
    %v4562 = vpack.c.b16 %v3842, %v3836
    %v4563 = vpack.c.b16 %v3843, %v3837
    %v4564 = vpack.c.b16 %v3844, %v3838
    %v4565 = vpack.c.b16 %v3845, %v3839
    %v4566 = vpack.c.b16 %v3846, %v3840
    %v4567 = vpack.c.b16 %v3853, %v3847
    %v4568 = vpack.c.b16 %v3854, %v3848
    %v4569 = vpack.c.b16 %v3855, %v3849
    %v4570 = vpack.c.b16 %v3856, %v3850
    %v4571 = vpack.c.b16 %v3857, %v3851
    %v4572 = vpack.c.b16 %v3858, %v3852
    %v4573 = vpack.c.b16 %v3865, %v3859
    %v4574 = vpack.c.b16 %v3866, %v3860
    %v4575 = vpack.c.b16 %v3867, %v3861
    %v4576 = vpack.c.b16 %v3868, %v3862
    %v4577 = vpack.c.b16 %v3869, %v3863
    %v4578 = vpack.c.b16 %v3870, %v3864
    %v4579 = vpack.c.b16 %v3877, %v3871
    %v4580 = vpack.c.b16 %v3878, %v3872
    %v4581 = vpack.c.b16 %v3879, %v3873
    %v4582 = vpack.c.b16 %v3880, %v3874
    %v4583 = vpack.c.b16 %v3881, %v3875
    %v4584 = vpack.c.b16 %v3882, %v3876
    %v4585 = vpack.c.b16 %v3889, %v3883
    %v4586 = vpack.c.b16 %v3890, %v3884
    %v4587 = vpack.c.b16 %v3891, %v3885
    %v4588 = vpack.c.b16 %v3892, %v3886
    %v4589 = vpack.c.b16 %v3893, %v3887
    %v4590 = vpack.c.b16 %v3894, %v3888
    %v4591 = vpack.c.b16 %v3901, %v3895
    %v4592 = vpack.c.b16 %v3902, %v3896
    %v4593 = vpack.c.b16 %v3903, %v3897
    %v4594 = vpack.c.b16 %v3904, %v3898
    %v4595 = vpack.c.b16 %v3905, %v3899
    %v4596 = vpack.c.b16 %v3906, %v3900
    %v4597 = vpack.c.b16 %v3913, %v3907
    %v4598 = vpack.c.b16 %v3914, %v3908
    %v4599 = vpack.c.b16 %v3915, %v3909
    %v4600 = vpack.c.b16 %v3916, %v3910
    %v4601 = vpack.c.b16 %v3917, %v3911
    %v4602 = vpack.c.b16 %v3918, %v3912
    %v4603 = vpack.c.b16 %v3925, %v3919
    %v4604 = vpack.c.b16 %v3926, %v3920
    %v4605 = vpack.c.b16 %v3927, %v3921
    %v4606 = vpack.c.b16 %v3928, %v3922
    %v4607 = vpack.c.b16 %v3929, %v3923
    %v4608 = vpack.c.b16 %v3930, %v3924
    %v4609 = vpack.c.b16 %v3937, %v3931
    %v4610 = vpack.c.b16 %v3938, %v3932
    %v4611 = vpack.c.b16 %v3939, %v3933
    %v4612 = vpack.c.b16 %v3940, %v3934
    %v4613 = vpack.c.b16 %v3941, %v3935
    %v4614 = vpack.c.b16 %v3942, %v3936
    %v4615 = vpack.c.b16 %v3949, %v3943
    %v4616 = vpack.c.b16 %v3950, %v3944
    %v4617 = vpack.c.b16 %v3951, %v3945
    %v4618 = vpack.c.b16 %v3952, %v3946
    %v4619 = vpack.c.b16 %v3953, %v3947
    %v4620 = vpack.c.b16 %v3954, %v3948
    %v4621 = vpack.c.b16 %v3961, %v3955
    %v4622 = vpack.c.b16 %v3962, %v3956
    %v4623 = vpack.c.b16 %v3963, %v3957
    %v4624 = vpack.c.b16 %v3964, %v3958
    %v4625 = vpack.c.b16 %v3965, %v3959
    %v4626 = vpack.c.b16 %v3966, %v3960
    %v4627 = vpack.c.b16 %v3973, %v3967
    %v4628 = vpack.c.b16 %v3974, %v3968
    %v4629 = vpack.c.b16 %v3975, %v3969
    %v4630 = vpack.c.b16 %v3976, %v3970
    %v4631 = vpack.c.b16 %v3977, %v3971
    %v4632 = vpack.c.b16 %v3978, %v3972
    %v4633 = vpack.c.b16 %v3985, %v3979
    %v4634 = vpack.c.b16 %v3986, %v3980
    %v4635 = vpack.c.b16 %v3987, %v3981
    %v4636 = vpack.c.b16 %v3988, %v3982
    %v4637 = vpack.c.b16 %v3989, %v3983
    %v4638 = vpack.c.b16 %v3990, %v3984
    %v4639 = vpack.c.b16 %v3997, %v3991
    %v4640 = vpack.c.b16 %v3998, %v3992
    %v4641 = vpack.c.b16 %v3999, %v3993
    %v4642 = vpack.c.b16 %v4000, %v3994
    %v4643 = vpack.c.b16 %v4001, %v3995
    %v4644 = vpack.c.b16 %v4002, %v3996
    %v4645 = vpack.c.b16 %v4009, %v4003
    %v4646 = vpack.c.b16 %v4010, %v4004
    %v4647 = vpack.c.b16 %v4011, %v4005
    %v4648 = vpack.c.b16 %v4012, %v4006
    %v4649 = vpack.c.b16 %v4013, %v4007
    %v4650 = vpack.c.b16 %v4014, %v4008
    %v4651 = vpack.c.b16 %v4021, %v4015
    %v4652 = vpack.c.b16 %v4022, %v4016
    %v4653 = vpack.c.b16 %v4023, %v4017
    %v4654 = vpack.c.b16 %v4024, %v4018
    %v4655 = vpack.c.b16 %v4025, %v4019
    %v4656 = vpack.c.b16 %v4026, %v4020
    %v4657 = vpack.c.b16 %v4033, %v4027
    %v4658 = vpack.c.b16 %v4034, %v4028
    %v4659 = vpack.c.b16 %v4035, %v4029
    %v4660 = vpack.c.b16 %v4036, %v4030
    %v4661 = vpack.c.b16 %v4037, %v4031
    %v4662 = vpack.c.b16 %v4038, %v4032
    %v4663 = vpack.c.b16 %v4045, %v4039
    %v4664 = vpack.c.b16 %v4046, %v4040
    %v4665 = vpack.c.b16 %v4047, %v4041
    %v4666 = vpack.c.b16 %v4048, %v4042
    %v4667 = vpack.c.b16 %v4049, %v4043
    %v4668 = vpack.c.b16 %v4050, %v4044
    %v4669 = vpack.c.b16 %v4057, %v4051
    %v4670 = vpack.c.b16 %v4058, %v4052
    %v4671 = vpack.c.b16 %v4059, %v4053
    %v4672 = vpack.c.b16 %v4060, %v4054
    %v4673 = vpack.c.b16 %v4061, %v4055
    %v4674 = vpack.c.b16 %v4062, %v4056
    %v4675 = vpack.c.b16 %v4069, %v4063
    %v4676 = vpack.c.b16 %v4070, %v4064
    %v4677 = vpack.c.b16 %v4071, %v4065
    %v4678 = vpack.c.b16 %v4072, %v4066
    %v4679 = vpack.c.b16 %v4073, %v4067
    %v4680 = vpack.c.b16 %v4074, %v4068
    %v4681 = vpack.c.b16 %v4081, %v4075
    %v4682 = vpack.c.b16 %v4082, %v4076
    %v4683 = vpack.c.b16 %v4083, %v4077
    %v4684 = vpack.c.b16 %v4084, %v4078
    %v4685 = vpack.c.b16 %v4085, %v4079
    %v4686 = vpack.c.b16 %v4086, %v4080
    %v4687 = vpack.c.b16 %v4093, %v4087
    %v4688 = vpack.c.b16 %v4094, %v4088
    %v4689 = vpack.c.b16 %v4095, %v4089
    %v4690 = vpack.c.b16 %v4096, %v4090
    %v4691 = vpack.c.b16 %v4097, %v4091
    %v4692 = vpack.c.b16 %v4098, %v4092
    %v4693 = vpack.c.b16 %v4105, %v4099
    %v4694 = vpack.c.b16 %v4106, %v4100
    %v4695 = vpack.c.b16 %v4107, %v4101
    %v4696 = vpack.c.b16 %v4108, %v4102
    %v4697 = vpack.c.b16 %v4109, %v4103
    %v4698 = vpack.c.b16 %v4110, %v4104
    %v4699 = vpack.c.b16 %v4117, %v4111
    %v4700 = vpack.c.b16 %v4118, %v4112
    %v4701 = vpack.c.b16 %v4119, %v4113
    %v4702 = vpack.c.b16 %v4120, %v4114
    %v4703 = vpack.c.b16 %v4121, %v4115
    %v4704 = vpack.c.b16 %v4122, %v4116
    %v4705 = vpack.c.b16 %v4129, %v4123
    %v4706 = vpack.c.b16 %v4130, %v4124
    %v4707 = vpack.c.b16 %v4131, %v4125
    %v4708 = vpack.c.b16 %v4132, %v4126
    %v4709 = vpack.c.b16 %v4133, %v4127
    %v4710 = vpack.c.b16 %v4134, %v4128
    %v4711 = vpack.c.b16 %v4141, %v4135
    %v4712 = vpack.c.b16 %v4142, %v4136
    %v4713 = vpack.c.b16 %v4143, %v4137
    %v4714 = vpack.c.b16 %v4144, %v4138
    %v4715 = vpack.c.b16 %v4145, %v4139
    %v4716 = vpack.c.b16 %v4146, %v4140
    %v4717 = vpack.c.b16 %v4153, %v4147
    %v4718 = vpack.c.b16 %v4154, %v4148
    %v4719 = vpack.c.b16 %v4155, %v4149
    %v4720 = vpack.c.b16 %v4156, %v4150
    %v4721 = vpack.c.b16 %v4157, %v4151
    %v4722 = vpack.c.b16 %v4158, %v4152
    %v4723 = vpack.c.b16 %v4165, %v4159
    %v4724 = vpack.c.b16 %v4166, %v4160
    %v4725 = vpack.c.b16 %v4167, %v4161
    %v4726 = vpack.c.b16 %v4168, %v4162
    %v4727 = vpack.c.b16 %v4169, %v4163
    %v4728 = vpack.c.b16 %v4170, %v4164
    %v4729 = vpack.c.b16 %v4177, %v4171
    %v4730 = vpack.c.b16 %v4178, %v4172
    %v4731 = vpack.c.b16 %v4179, %v4173
    %v4732 = vpack.c.b16 %v4180, %v4174
    %v4733 = vpack.c.b16 %v4181, %v4175
    %v4734 = vpack.c.b16 %v4182, %v4176
    %v4735 = vpack.c.b16 %v4189, %v4183
    %v4736 = vpack.c.b16 %v4190, %v4184
    %v4737 = vpack.c.b16 %v4191, %v4185
    %v4738 = vpack.c.b16 %v4192, %v4186
    %v4739 = vpack.c.b16 %v4193, %v4187
    %v4740 = vpack.c.b16 %v4194, %v4188
    %v4741 = vpack.c.b16 %v4201, %v4195
    %v4742 = vpack.c.b16 %v4202, %v4196
    %v4743 = vpack.c.b16 %v4203, %v4197
    %v4744 = vpack.c.b16 %v4204, %v4198
    %v4745 = vpack.c.b16 %v4205, %v4199
    %v4746 = vpack.c.b16 %v4206, %v4200
    %v4747 = vpack.c.b16 %v4213, %v4207
    %v4748 = vpack.c.b16 %v4214, %v4208
    %v4749 = vpack.c.b16 %v4215, %v4209
    %v4750 = vpack.c.b16 %v4216, %v4210
    %v4751 = vpack.c.b16 %v4217, %v4211
    %v4752 = vpack.c.b16 %v4218, %v4212
    %v4753 = vpack.c.b16 %v4225, %v4219
    %v4754 = vpack.c.b16 %v4226, %v4220
    %v4755 = vpack.c.b16 %v4227, %v4221
    %v4756 = vpack.c.b16 %v4228, %v4222
    %v4757 = vpack.c.b16 %v4229, %v4223
    %v4758 = vpack.c.b16 %v4230, %v4224
    %v4759 = vpack.c.b16 %v4237, %v4231
    %v4760 = vpack.c.b16 %v4238, %v4232
    %v4761 = vpack.c.b16 %v4239, %v4233
    %v4762 = vpack.c.b16 %v4240, %v4234
    %v4763 = vpack.c.b16 %v4241, %v4235
    %v4764 = vpack.c.b16 %v4242, %v4236
    %v4765 = vpack.c.b16 %v4249, %v4243
    %v4766 = vpack.c.b16 %v4250, %v4244
    %v4767 = vpack.c.b16 %v4251, %v4245
    %v4768 = vpack.c.b16 %v4252, %v4246
    %v4769 = vpack.c.b16 %v4253, %v4247
    %v4770 = vpack.c.b16 %v4254, %v4248
    %v4771 = vpack.c.b16 %v4261, %v4255
    %v4772 = vpack.c.b16 %v4262, %v4256
    %v4773 = vpack.c.b16 %v4263, %v4257
    %v4774 = vpack.c.b16 %v4264, %v4258
    %v4775 = vpack.c.b16 %v4265, %v4259
    %v4776 = vpack.c.b16 %v4266, %v4260
    %v4777 = vpack.c.b16 %v4273, %v4267
    %v4778 = vpack.c.b16 %v4274, %v4268
    %v4779 = vpack.c.b16 %v4275, %v4269
    %v4780 = vpack.c.b16 %v4276, %v4270
    %v4781 = vpack.c.b16 %v4277, %v4271
    %v4782 = vpack.c.b16 %v4278, %v4272
    %v4783 = vpack.c.b16 %v4285, %v4279
    %v4784 = vpack.c.b16 %v4286, %v4280
    %v4785 = vpack.c.b16 %v4287, %v4281
    %v4786 = vpack.c.b16 %v4288, %v4282
    %v4787 = vpack.c.b16 %v4289, %v4283
    %v4788 = vpack.c.b16 %v4290, %v4284
    %v4789 = vpack.c.b16 %v4297, %v4291
    %v4790 = vpack.c.b16 %v4298, %v4292
    %v4791 = vpack.c.b16 %v4299, %v4293
    %v4792 = vpack.c.b16 %v4300, %v4294
    %v4793 = vpack.c.b16 %v4301, %v4295
    %v4794 = vpack.c.b16 %v4302, %v4296
    %v4795 = vpack.c.b16 %v4309, %v4303
    %v4796 = vpack.c.b16 %v4310, %v4304
    %v4797 = vpack.c.b16 %v4311, %v4305
    %v4798 = vpack.c.b16 %v4312, %v4306
    %v4799 = vpack.c.b16 %v4313, %v4307
    %v4800 = vpack.c.b16 %v4314, %v4308
    %v4801 = vpack.c.b16 %v4321, %v4315
    %v4802 = vpack.c.b16 %v4322, %v4316
    %v4803 = vpack.c.b16 %v4323, %v4317
    %v4804 = vpack.c.b16 %v4324, %v4318
    %v4805 = vpack.c.b16 %v4325, %v4319
    %v4806 = vpack.c.b16 %v4326, %v4320
    %v4807 = vpack.c.b16 %v4333, %v4327
    %v4808 = vpack.c.b16 %v4334, %v4328
    %v4809 = vpack.c.b16 %v4335, %v4329
    %v4810 = vpack.c.b16 %v4336, %v4330
    %v4811 = vpack.c.b16 %v4337, %v4331
    %v4812 = vpack.c.b16 %v4338, %v4332
    %v4813 = vpack.c.b16 %v4345, %v4339
    %v4814 = vpack.c.b16 %v4346, %v4340
    %v4815 = vpack.c.b16 %v4347, %v4341
    %v4816 = vpack.c.b16 %v4348, %v4342
    %v4817 = vpack.c.b16 %v4349, %v4343
    %v4818 = vpack.c.b16 %v4350, %v4344
    %v4819 = vpack.c.b16 %v4357, %v4351
    %v4820 = vpack.c.b16 %v4358, %v4352
    %v4821 = vpack.c.b16 %v4359, %v4353
    %v4822 = vpack.c.b16 %v4360, %v4354
    %v4823 = vpack.c.b16 %v4361, %v4355
    %v4824 = vpack.c.b16 %v4362, %v4356
    %v4825 = vpack.c.b16 %v4369, %v4363
    %v4826 = vpack.c.b16 %v4370, %v4364
    %v4827 = vpack.c.b16 %v4371, %v4365
    %v4828 = vpack.c.b16 %v4372, %v4366
    %v4829 = vpack.c.b16 %v4373, %v4367
    %v4830 = vpack.c.b16 %v4374, %v4368
    %v4831 = vpack.c.b16 %v4381, %v4375
    %v4832 = vpack.c.b16 %v4382, %v4376
    %v4833 = vpack.c.b16 %v4383, %v4377
    %v4834 = vpack.c.b16 %v4384, %v4378
    %v4835 = vpack.c.b16 %v4385, %v4379
    %v4836 = vpack.c.b16 %v4386, %v4380
    %v4837 = vpack.c.b16 %v4393, %v4387
    %v4838 = vpack.c.b16 %v4394, %v4388
    %v4839 = vpack.c.b16 %v4395, %v4389
    %v4840 = vpack.c.b16 %v4396, %v4390
    %v4841 = vpack.c.b16 %v4397, %v4391
    %v4842 = vpack.c.b16 %v4398, %v4392
    %v4843 = vpack.c.b16 %v4405, %v4399
    %v4844 = vpack.c.b16 %v4406, %v4400
    %v4845 = vpack.c.b16 %v4407, %v4401
    %v4846 = vpack.c.b16 %v4408, %v4402
    %v4847 = vpack.c.b16 %v4409, %v4403
    %v4848 = vpack.c.b16 %v4410, %v4404
    %v4849 = vpack.c.b16 %v4417, %v4411
    %v4850 = vpack.c.b16 %v4418, %v4412
    %v4851 = vpack.c.b16 %v4419, %v4413
    %v4852 = vpack.c.b16 %v4420, %v4414
    %v4853 = vpack.c.b16 %v4421, %v4415
    %v4854 = vpack.c.b16 %v4422, %v4416
    %v4855 = vpack.c.b16 %v4429, %v4423
    %v4856 = vpack.c.b16 %v4430, %v4424
    %v4857 = vpack.c.b16 %v4431, %v4425
    %v4858 = vpack.c.b16 %v4432, %v4426
    %v4859 = vpack.c.b16 %v4433, %v4427
    %v4860 = vpack.c.b16 %v4434, %v4428
    %v4861 = vpack.c.b16 %v4441, %v4435
    %v4862 = vpack.c.b16 %v4442, %v4436
    %v4863 = vpack.c.b16 %v4443, %v4437
    %v4864 = vpack.c.b16 %v4444, %v4438
    %v4865 = vpack.c.b16 %v4445, %v4439
    %v4866 = vpack.c.b16 %v4446, %v4440
    %v4867 = vpack.c.b16 %v4453, %v4447
    %v4868 = vpack.c.b16 %v4454, %v4448
    %v4869 = vpack.c.b16 %v4455, %v4449
    %v4870 = vpack.c.b16 %v4456, %v4450
    %v4871 = vpack.c.b16 %v4457, %v4451
    %v4872 = vpack.c.b16 %v4458, %v4452
    %v4873 = vpack.c.b16 %v4465, %v4459
    %v4874 = vpack.c.b16 %v4466, %v4460
    %v4875 = vpack.c.b16 %v4467, %v4461
    %v4876 = vpack.c.b16 %v4468, %v4462
    %v4877 = vpack.c.b16 %v4469, %v4463
    %v4878 = vpack.c.b16 %v4470, %v4464
    %v4879 = vpack.c.b16 %v4477, %v4471
    %v4880 = vpack.c.b16 %v4478, %v4472
    %v4881 = vpack.c.b16 %v4479, %v4473
    %v4882 = vpack.c.b16 %v4480, %v4474
    %v4883 = vpack.c.b16 %v4481, %v4475
    %v4884 = vpack.c.b16 %v4482, %v4476
    %v4885 = vpack.c.b16 %v4489, %v4483
    %v4886 = vpack.c.b16 %v4490, %v4484
    %v4887 = vpack.c.b16 %v4491, %v4485
    %v4888 = vpack.c.b16 %v4492, %v4486
    %v4889 = vpack.c.b16 %v4493, %v4487
    %v4890 = vpack.c.b16 %v4494, %v4488
    %v4891 = vpack.c.b16 %v4501, %v4495
    %v4892 = vpack.c.b16 %v4502, %v4496
    %v4893 = vpack.c.b16 %v4503, %v4497
    %v4894 = vpack.c.b16 %v4504, %v4498
    %v4895 = vpack.c.b16 %v4505, %v4499
    %v4896 = vpack.c.b16 %v4506, %v4500
    %v4897 = vpack.c.b16 %v4513, %v4507
    %v4898 = vpack.c.b16 %v4514, %v4508
    %v4899 = vpack.c.b16 %v4515, %v4509
    %v4900 = vpack.c.b16 %v4516, %v4510
    %v4901 = vpack.c.b16 %v4517, %v4511
    %v4902 = vpack.c.b16 %v4518, %v4512
    %5287 = vmatpush.bf16.msra.mxu0 %v4561
    %5288 = vmatpush.bf16.msra.mxu0 %v4555
    %5289 = vmatpush.bf16.msra.mxu0 %v4549
    %5290 = vmatpush.bf16.msra.mxu0 %v4543
    %5291 = vmatpush.bf16.msra.mxu0 %v4537
    %5292 = vmatpush.bf16.msra.mxu0 %v4531
    %5293 = vmatpush.bf16.msra.mxu0 %v4525
    %5294 = vmatpush.bf16.msra.mxu0 %v4519
    %5295 = vmatmul.bf16.gmra.mxu0 %v3351
    %v5296 = vpop.f32.mrf.mxu0
    %v5297 = vadd.f32 %v3315, %v5296
    %v5298 = vpop.f32.mrf.mxu0
    %v5299 = vadd.f32 %v3315, %v5298
    %5300 = vdwg.mxu0
    %5301 = vmatpush.bf16.msra.mxu0 %v4609
    %5302 = vmatpush.bf16.msra.mxu0 %v4603
    %5303 = vmatpush.bf16.msra.mxu0 %v4597
    %5304 = vmatpush.bf16.msra.mxu0 %v4591
    %5305 = vmatpush.bf16.msra.mxu0 %v4585
    %5306 = vmatpush.bf16.msra.mxu0 %v4579
    %5307 = vmatpush.bf16.msra.mxu0 %v4573
    %5308 = vmatpush.bf16.msra.mxu0 %v4567
    %5309 = vmatmul.bf16.gmra.mxu0 %v3352
    %v5310 = vpop.f32.mrf.mxu0
    %v5311 = vadd.f32 %v5297, %v5310
    %v5312 = vpop.f32.mrf.mxu0
    %v5313 = vadd.f32 %v5299, %v5312
    %5314 = vdwg.mxu0
    %5315 = vmatpush.bf16.msra.mxu0 %v4657
    %5316 = vmatpush.bf16.msra.mxu0 %v4651
    %5317 = vmatpush.bf16.msra.mxu0 %v4645
    %5318 = vmatpush.bf16.msra.mxu0 %v4639
    %5319 = vmatpush.bf16.msra.mxu0 %v4633
    %5320 = vmatpush.bf16.msra.mxu0 %v4627
    %5321 = vmatpush.bf16.msra.mxu0 %v4621
    %5322 = vmatpush.bf16.msra.mxu0 %v4615
    %5323 = vmatmul.bf16.gmra.mxu0 %v3353
    %v5324 = vpop.f32.mrf.mxu0
    %v5325 = vadd.f32 %v5311, %v5324
    %v5326 = vpop.f32.mrf.mxu0
    %v5327 = vadd.f32 %v5313, %v5326
    %5328 = vdwg.mxu0
    %5329 = vmatpush.bf16.msra.mxu0 %v4705
    %5330 = vmatpush.bf16.msra.mxu0 %v4699
    %5331 = vmatpush.bf16.msra.mxu0 %v4693
    %5332 = vmatpush.bf16.msra.mxu0 %v4687
    %5333 = vmatpush.bf16.msra.mxu0 %v4681
    %5334 = vmatpush.bf16.msra.mxu0 %v4675
    %5335 = vmatpush.bf16.msra.mxu0 %v4669
    %5336 = vmatpush.bf16.msra.mxu0 %v4663
    %5337 = vmatmul.bf16.gmra.mxu0 %v3354
    %v5338 = vpop.f32.mrf.mxu0
    %v5339 = vadd.f32 %v5325, %v5338
    %v5340 = vpop.f32.mrf.mxu0
    %v5341 = vadd.f32 %v5327, %v5340
    %5342 = vdwg.mxu0
    %5343 = vmatpush.bf16.msra.mxu0 %v4753
    %5344 = vmatpush.bf16.msra.mxu0 %v4747
    %5345 = vmatpush.bf16.msra.mxu0 %v4741
    %5346 = vmatpush.bf16.msra.mxu0 %v4735
    %5347 = vmatpush.bf16.msra.mxu0 %v4729
    %5348 = vmatpush.bf16.msra.mxu0 %v4723
    %5349 = vmatpush.bf16.msra.mxu0 %v4717
    %5350 = vmatpush.bf16.msra.mxu0 %v4711
    %5351 = vmatmul.bf16.gmra.mxu0 %v3355
    %v5352 = vpop.f32.mrf.mxu0
    %v5353 = vadd.f32 %v5339, %v5352
    %v5354 = vpop.f32.mrf.mxu0
    %v5355 = vadd.f32 %v5341, %v5354
    %5356 = vdwg.mxu0
    %5357 = vmatpush.bf16.msra.mxu0 %v4801
    %5358 = vmatpush.bf16.msra.mxu0 %v4795
    %5359 = vmatpush.bf16.msra.mxu0 %v4789
    %5360 = vmatpush.bf16.msra.mxu0 %v4783
    %5361 = vmatpush.bf16.msra.mxu0 %v4777
    %5362 = vmatpush.bf16.msra.mxu0 %v4771
    %5363 = vmatpush.bf16.msra.mxu0 %v4765
    %5364 = vmatpush.bf16.msra.mxu0 %v4759
    %5365 = vmatmul.bf16.gmra.mxu0 %v3356
    %v5366 = vpop.f32.mrf.mxu0
    %v5367 = vadd.f32 %v5353, %v5366
    %v5368 = vpop.f32.mrf.mxu0
    %v5369 = vadd.f32 %v5355, %v5368
    %5370 = vdwg.mxu0
    %5371 = vmatpush.bf16.msra.mxu0 %v4849
    %5372 = vmatpush.bf16.msra.mxu0 %v4843
    %5373 = vmatpush.bf16.msra.mxu0 %v4837
    %5374 = vmatpush.bf16.msra.mxu0 %v4831
    %5375 = vmatpush.bf16.msra.mxu0 %v4825
    %5376 = vmatpush.bf16.msra.mxu0 %v4819
    %5377 = vmatpush.bf16.msra.mxu0 %v4813
    %5378 = vmatpush.bf16.msra.mxu0 %v4807
    %5379 = vmatmul.bf16.gmra.mxu0 %v3357
    %v5380 = vpop.f32.mrf.mxu0
    %v5381 = vadd.f32 %v5367, %v5380
    %v5382 = vpop.f32.mrf.mxu0
    %v5383 = vadd.f32 %v5369, %v5382
    %5384 = vdwg.mxu0
    %5385 = vmatpush.bf16.msra.mxu0 %v4897
    %5386 = vmatpush.bf16.msra.mxu0 %v4891
    %5387 = vmatpush.bf16.msra.mxu0 %v4885
    %5388 = vmatpush.bf16.msra.mxu0 %v4879
    %5389 = vmatpush.bf16.msra.mxu0 %v4873
    %5390 = vmatpush.bf16.msra.mxu0 %v4867
    %5391 = vmatpush.bf16.msra.mxu0 %v4861
    %5392 = vmatpush.bf16.msra.mxu0 %v4855
    %5393 = vmatmul.bf16.gmra.mxu0 %v3358
    %v5394 = vpop.f32.mrf.mxu0
    %v5395 = vadd.f32 %v5381, %v5394
    %v5396 = vpop.f32.mrf.mxu0
    %v5397 = vadd.f32 %v5383, %v5396
    %5398 = vdwg.mxu0
    %5399 = vmatpush.bf16.msra.mxu0 %v4562
    %5400 = vmatpush.bf16.msra.mxu0 %v4556
    %5401 = vmatpush.bf16.msra.mxu0 %v4550
    %5402 = vmatpush.bf16.msra.mxu0 %v4544
    %5403 = vmatpush.bf16.msra.mxu0 %v4538
    %5404 = vmatpush.bf16.msra.mxu0 %v4532
    %5405 = vmatpush.bf16.msra.mxu0 %v4526
    %5406 = vmatpush.bf16.msra.mxu0 %v4520
    %5407 = vmatmul.bf16.gmra.mxu0 %v3351
    %v5408 = vpop.f32.mrf.mxu0
    %v5409 = vadd.f32 %v3316, %v5408
    %v5410 = vpop.f32.mrf.mxu0
    %v5411 = vadd.f32 %v3316, %v5410
    %5412 = vdwg.mxu0
    %5413 = vmatpush.bf16.msra.mxu0 %v4610
    %5414 = vmatpush.bf16.msra.mxu0 %v4604
    %5415 = vmatpush.bf16.msra.mxu0 %v4598
    %5416 = vmatpush.bf16.msra.mxu0 %v4592
    %5417 = vmatpush.bf16.msra.mxu0 %v4586
    %5418 = vmatpush.bf16.msra.mxu0 %v4580
    %5419 = vmatpush.bf16.msra.mxu0 %v4574
    %5420 = vmatpush.bf16.msra.mxu0 %v4568
    %5421 = vmatmul.bf16.gmra.mxu0 %v3352
    %v5422 = vpop.f32.mrf.mxu0
    %v5423 = vadd.f32 %v5409, %v5422
    %v5424 = vpop.f32.mrf.mxu0
    %v5425 = vadd.f32 %v5411, %v5424
    %5426 = vdwg.mxu0
    %5427 = vmatpush.bf16.msra.mxu0 %v4658
    %5428 = vmatpush.bf16.msra.mxu0 %v4652
    %5429 = vmatpush.bf16.msra.mxu0 %v4646
    %5430 = vmatpush.bf16.msra.mxu0 %v4640
    %5431 = vmatpush.bf16.msra.mxu0 %v4634
    %5432 = vmatpush.bf16.msra.mxu0 %v4628
    %5433 = vmatpush.bf16.msra.mxu0 %v4622
    %5434 = vmatpush.bf16.msra.mxu0 %v4616
    %5435 = vmatmul.bf16.gmra.mxu0 %v3353
    %v5436 = vpop.f32.mrf.mxu0
    %v5437 = vadd.f32 %v5423, %v5436
    %v5438 = vpop.f32.mrf.mxu0
    %v5439 = vadd.f32 %v5425, %v5438
    %5440 = vdwg.mxu0
    %5441 = vmatpush.bf16.msra.mxu0 %v4706
    %5442 = vmatpush.bf16.msra.mxu0 %v4700
    %5443 = vmatpush.bf16.msra.mxu0 %v4694
    %5444 = vmatpush.bf16.msra.mxu0 %v4688
    %5445 = vmatpush.bf16.msra.mxu0 %v4682
    %5446 = vmatpush.bf16.msra.mxu0 %v4676
    %5447 = vmatpush.bf16.msra.mxu0 %v4670
    %5448 = vmatpush.bf16.msra.mxu0 %v4664
    %5449 = vmatmul.bf16.gmra.mxu0 %v3354
    %v5450 = vpop.f32.mrf.mxu0
    %v5451 = vadd.f32 %v5437, %v5450
    %v5452 = vpop.f32.mrf.mxu0
    %v5453 = vadd.f32 %v5439, %v5452
    %5454 = vdwg.mxu0
    %5455 = vmatpush.bf16.msra.mxu0 %v4754
    %5456 = vmatpush.bf16.msra.mxu0 %v4748
    %5457 = vmatpush.bf16.msra.mxu0 %v4742
    %5458 = vmatpush.bf16.msra.mxu0 %v4736
    %5459 = vmatpush.bf16.msra.mxu0 %v4730
    %5460 = vmatpush.bf16.msra.mxu0 %v4724
    %5461 = vmatpush.bf16.msra.mxu0 %v4718
    %5462 = vmatpush.bf16.msra.mxu0 %v4712
    %5463 = vmatmul.bf16.gmra.mxu0 %v3355
    %v5464 = vpop.f32.mrf.mxu0
    %v5465 = vadd.f32 %v5451, %v5464
    %v5466 = vpop.f32.mrf.mxu0
    %v5467 = vadd.f32 %v5453, %v5466
    %5468 = vdwg.mxu0
    %5469 = vmatpush.bf16.msra.mxu0 %v4802
    %5470 = vmatpush.bf16.msra.mxu0 %v4796
    %5471 = vmatpush.bf16.msra.mxu0 %v4790
    %5472 = vmatpush.bf16.msra.mxu0 %v4784
    %5473 = vmatpush.bf16.msra.mxu0 %v4778
    %5474 = vmatpush.bf16.msra.mxu0 %v4772
    %5475 = vmatpush.bf16.msra.mxu0 %v4766
    %5476 = vmatpush.bf16.msra.mxu0 %v4760
    %5477 = vmatmul.bf16.gmra.mxu0 %v3356
    %v5478 = vpop.f32.mrf.mxu0
    %v5479 = vadd.f32 %v5465, %v5478
    %v5480 = vpop.f32.mrf.mxu0
    %v5481 = vadd.f32 %v5467, %v5480
    %5482 = vdwg.mxu0
    %5483 = vmatpush.bf16.msra.mxu0 %v4850
    %5484 = vmatpush.bf16.msra.mxu0 %v4844
    %5485 = vmatpush.bf16.msra.mxu0 %v4838
    %5486 = vmatpush.bf16.msra.mxu0 %v4832
    %5487 = vmatpush.bf16.msra.mxu0 %v4826
    %5488 = vmatpush.bf16.msra.mxu0 %v4820
    %5489 = vmatpush.bf16.msra.mxu0 %v4814
    %5490 = vmatpush.bf16.msra.mxu0 %v4808
    %5491 = vmatmul.bf16.gmra.mxu0 %v3357
    %v5492 = vpop.f32.mrf.mxu0
    %v5493 = vadd.f32 %v5479, %v5492
    %v5494 = vpop.f32.mrf.mxu0
    %v5495 = vadd.f32 %v5481, %v5494
    %5496 = vdwg.mxu0
    %5497 = vmatpush.bf16.msra.mxu0 %v4898
    %5498 = vmatpush.bf16.msra.mxu0 %v4892
    %5499 = vmatpush.bf16.msra.mxu0 %v4886
    %5500 = vmatpush.bf16.msra.mxu0 %v4880
    %5501 = vmatpush.bf16.msra.mxu0 %v4874
    %5502 = vmatpush.bf16.msra.mxu0 %v4868
    %5503 = vmatpush.bf16.msra.mxu0 %v4862
    %5504 = vmatpush.bf16.msra.mxu0 %v4856
    %5505 = vmatmul.bf16.gmra.mxu0 %v3358
    %v5506 = vpop.f32.mrf.mxu0
    %v5507 = vadd.f32 %v5493, %v5506
    %v5508 = vpop.f32.mrf.mxu0
    %v5509 = vadd.f32 %v5495, %v5508
    %5510 = vdwg.mxu0
    %5511 = vmatpush.bf16.msra.mxu0 %v4563
    %5512 = vmatpush.bf16.msra.mxu0 %v4557
    %5513 = vmatpush.bf16.msra.mxu0 %v4551
    %5514 = vmatpush.bf16.msra.mxu0 %v4545
    %5515 = vmatpush.bf16.msra.mxu0 %v4539
    %5516 = vmatpush.bf16.msra.mxu0 %v4533
    %5517 = vmatpush.bf16.msra.mxu0 %v4527
    %5518 = vmatpush.bf16.msra.mxu0 %v4521
    %5519 = vmatmul.bf16.gmra.mxu0 %v3351
    %v5520 = vpop.f32.mrf.mxu0
    %v5521 = vadd.f32 %v3317, %v5520
    %v5522 = vpop.f32.mrf.mxu0
    %v5523 = vadd.f32 %v3317, %v5522
    %5524 = vdwg.mxu0
    %5525 = vmatpush.bf16.msra.mxu0 %v4611
    %5526 = vmatpush.bf16.msra.mxu0 %v4605
    %5527 = vmatpush.bf16.msra.mxu0 %v4599
    %5528 = vmatpush.bf16.msra.mxu0 %v4593
    %5529 = vmatpush.bf16.msra.mxu0 %v4587
    %5530 = vmatpush.bf16.msra.mxu0 %v4581
    %5531 = vmatpush.bf16.msra.mxu0 %v4575
    %5532 = vmatpush.bf16.msra.mxu0 %v4569
    %5533 = vmatmul.bf16.gmra.mxu0 %v3352
    %v5534 = vpop.f32.mrf.mxu0
    %v5535 = vadd.f32 %v5521, %v5534
    %v5536 = vpop.f32.mrf.mxu0
    %v5537 = vadd.f32 %v5523, %v5536
    %5538 = vdwg.mxu0
    %5539 = vmatpush.bf16.msra.mxu0 %v4659
    %5540 = vmatpush.bf16.msra.mxu0 %v4653
    %5541 = vmatpush.bf16.msra.mxu0 %v4647
    %5542 = vmatpush.bf16.msra.mxu0 %v4641
    %5543 = vmatpush.bf16.msra.mxu0 %v4635
    %5544 = vmatpush.bf16.msra.mxu0 %v4629
    %5545 = vmatpush.bf16.msra.mxu0 %v4623
    %5546 = vmatpush.bf16.msra.mxu0 %v4617
    %5547 = vmatmul.bf16.gmra.mxu0 %v3353
    %v5548 = vpop.f32.mrf.mxu0
    %v5549 = vadd.f32 %v5535, %v5548
    %v5550 = vpop.f32.mrf.mxu0
    %v5551 = vadd.f32 %v5537, %v5550
    %5552 = vdwg.mxu0
    %5553 = vmatpush.bf16.msra.mxu0 %v4707
    %5554 = vmatpush.bf16.msra.mxu0 %v4701
    %5555 = vmatpush.bf16.msra.mxu0 %v4695
    %5556 = vmatpush.bf16.msra.mxu0 %v4689
    %5557 = vmatpush.bf16.msra.mxu0 %v4683
    %5558 = vmatpush.bf16.msra.mxu0 %v4677
    %5559 = vmatpush.bf16.msra.mxu0 %v4671
    %5560 = vmatpush.bf16.msra.mxu0 %v4665
    %5561 = vmatmul.bf16.gmra.mxu0 %v3354
    %v5562 = vpop.f32.mrf.mxu0
    %v5563 = vadd.f32 %v5549, %v5562
    %v5564 = vpop.f32.mrf.mxu0
    %v5565 = vadd.f32 %v5551, %v5564
    %5566 = vdwg.mxu0
    %5567 = vmatpush.bf16.msra.mxu0 %v4755
    %5568 = vmatpush.bf16.msra.mxu0 %v4749
    %5569 = vmatpush.bf16.msra.mxu0 %v4743
    %5570 = vmatpush.bf16.msra.mxu0 %v4737
    %5571 = vmatpush.bf16.msra.mxu0 %v4731
    %5572 = vmatpush.bf16.msra.mxu0 %v4725
    %5573 = vmatpush.bf16.msra.mxu0 %v4719
    %5574 = vmatpush.bf16.msra.mxu0 %v4713
    %5575 = vmatmul.bf16.gmra.mxu0 %v3355
    %v5576 = vpop.f32.mrf.mxu0
    %v5577 = vadd.f32 %v5563, %v5576
    %v5578 = vpop.f32.mrf.mxu0
    %v5579 = vadd.f32 %v5565, %v5578
    %5580 = vdwg.mxu0
    %5581 = vmatpush.bf16.msra.mxu0 %v4803
    %5582 = vmatpush.bf16.msra.mxu0 %v4797
    %5583 = vmatpush.bf16.msra.mxu0 %v4791
    %5584 = vmatpush.bf16.msra.mxu0 %v4785
    %5585 = vmatpush.bf16.msra.mxu0 %v4779
    %5586 = vmatpush.bf16.msra.mxu0 %v4773
    %5587 = vmatpush.bf16.msra.mxu0 %v4767
    %5588 = vmatpush.bf16.msra.mxu0 %v4761
    %5589 = vmatmul.bf16.gmra.mxu0 %v3356
    %v5590 = vpop.f32.mrf.mxu0
    %v5591 = vadd.f32 %v5577, %v5590
    %v5592 = vpop.f32.mrf.mxu0
    %v5593 = vadd.f32 %v5579, %v5592
    %5594 = vdwg.mxu0
    %5595 = vmatpush.bf16.msra.mxu0 %v4851
    %5596 = vmatpush.bf16.msra.mxu0 %v4845
    %5597 = vmatpush.bf16.msra.mxu0 %v4839
    %5598 = vmatpush.bf16.msra.mxu0 %v4833
    %5599 = vmatpush.bf16.msra.mxu0 %v4827
    %5600 = vmatpush.bf16.msra.mxu0 %v4821
    %5601 = vmatpush.bf16.msra.mxu0 %v4815
    %5602 = vmatpush.bf16.msra.mxu0 %v4809
    %5603 = vmatmul.bf16.gmra.mxu0 %v3357
    %v5604 = vpop.f32.mrf.mxu0
    %v5605 = vadd.f32 %v5591, %v5604
    %v5606 = vpop.f32.mrf.mxu0
    %v5607 = vadd.f32 %v5593, %v5606
    %5608 = vdwg.mxu0
    %5609 = vmatpush.bf16.msra.mxu0 %v4899
    %5610 = vmatpush.bf16.msra.mxu0 %v4893
    %5611 = vmatpush.bf16.msra.mxu0 %v4887
    %5612 = vmatpush.bf16.msra.mxu0 %v4881
    %5613 = vmatpush.bf16.msra.mxu0 %v4875
    %5614 = vmatpush.bf16.msra.mxu0 %v4869
    %5615 = vmatpush.bf16.msra.mxu0 %v4863
    %5616 = vmatpush.bf16.msra.mxu0 %v4857
    %5617 = vmatmul.bf16.gmra.mxu0 %v3358
    %v5618 = vpop.f32.mrf.mxu0
    %v5619 = vadd.f32 %v5605, %v5618
    %v5620 = vpop.f32.mrf.mxu0
    %v5621 = vadd.f32 %v5607, %v5620
    %5622 = vdwg.mxu0
    %5623 = vmatpush.bf16.msra.mxu0 %v4564
    %5624 = vmatpush.bf16.msra.mxu0 %v4558
    %5625 = vmatpush.bf16.msra.mxu0 %v4552
    %5626 = vmatpush.bf16.msra.mxu0 %v4546
    %5627 = vmatpush.bf16.msra.mxu0 %v4540
    %5628 = vmatpush.bf16.msra.mxu0 %v4534
    %5629 = vmatpush.bf16.msra.mxu0 %v4528
    %5630 = vmatpush.bf16.msra.mxu0 %v4522
    %5631 = vmatmul.bf16.gmra.mxu0 %v3351
    %v5632 = vpop.f32.mrf.mxu0
    %v5633 = vadd.f32 %v3318, %v5632
    %v5634 = vpop.f32.mrf.mxu0
    %v5635 = vadd.f32 %v3318, %v5634
    %5636 = vdwg.mxu0
    %5637 = vmatpush.bf16.msra.mxu0 %v4612
    %5638 = vmatpush.bf16.msra.mxu0 %v4606
    %5639 = vmatpush.bf16.msra.mxu0 %v4600
    %5640 = vmatpush.bf16.msra.mxu0 %v4594
    %5641 = vmatpush.bf16.msra.mxu0 %v4588
    %5642 = vmatpush.bf16.msra.mxu0 %v4582
    %5643 = vmatpush.bf16.msra.mxu0 %v4576
    %5644 = vmatpush.bf16.msra.mxu0 %v4570
    %5645 = vmatmul.bf16.gmra.mxu0 %v3352
    %v5646 = vpop.f32.mrf.mxu0
    %v5647 = vadd.f32 %v5633, %v5646
    %v5648 = vpop.f32.mrf.mxu0
    %v5649 = vadd.f32 %v5635, %v5648
    %5650 = vdwg.mxu0
    %5651 = vmatpush.bf16.msra.mxu0 %v4660
    %5652 = vmatpush.bf16.msra.mxu0 %v4654
    %5653 = vmatpush.bf16.msra.mxu0 %v4648
    %5654 = vmatpush.bf16.msra.mxu0 %v4642
    %5655 = vmatpush.bf16.msra.mxu0 %v4636
    %5656 = vmatpush.bf16.msra.mxu0 %v4630
    %5657 = vmatpush.bf16.msra.mxu0 %v4624
    %5658 = vmatpush.bf16.msra.mxu0 %v4618
    %5659 = vmatmul.bf16.gmra.mxu0 %v3353
    %v5660 = vpop.f32.mrf.mxu0
    %v5661 = vadd.f32 %v5647, %v5660
    %v5662 = vpop.f32.mrf.mxu0
    %v5663 = vadd.f32 %v5649, %v5662
    %5664 = vdwg.mxu0
    %5665 = vmatpush.bf16.msra.mxu0 %v4708
    %5666 = vmatpush.bf16.msra.mxu0 %v4702
    %5667 = vmatpush.bf16.msra.mxu0 %v4696
    %5668 = vmatpush.bf16.msra.mxu0 %v4690
    %5669 = vmatpush.bf16.msra.mxu0 %v4684
    %5670 = vmatpush.bf16.msra.mxu0 %v4678
    %5671 = vmatpush.bf16.msra.mxu0 %v4672
    %5672 = vmatpush.bf16.msra.mxu0 %v4666
    %5673 = vmatmul.bf16.gmra.mxu0 %v3354
    %v5674 = vpop.f32.mrf.mxu0
    %v5675 = vadd.f32 %v5661, %v5674
    %v5676 = vpop.f32.mrf.mxu0
    %v5677 = vadd.f32 %v5663, %v5676
    %5678 = vdwg.mxu0
    %5679 = vmatpush.bf16.msra.mxu0 %v4756
    %5680 = vmatpush.bf16.msra.mxu0 %v4750
    %5681 = vmatpush.bf16.msra.mxu0 %v4744
    %5682 = vmatpush.bf16.msra.mxu0 %v4738
    %5683 = vmatpush.bf16.msra.mxu0 %v4732
    %5684 = vmatpush.bf16.msra.mxu0 %v4726
    %5685 = vmatpush.bf16.msra.mxu0 %v4720
    %5686 = vmatpush.bf16.msra.mxu0 %v4714
    %5687 = vmatmul.bf16.gmra.mxu0 %v3355
    %v5688 = vpop.f32.mrf.mxu0
    %v5689 = vadd.f32 %v5675, %v5688
    %v5690 = vpop.f32.mrf.mxu0
    %v5691 = vadd.f32 %v5677, %v5690
    %5692 = vdwg.mxu0
    %5693 = vmatpush.bf16.msra.mxu0 %v4804
    %5694 = vmatpush.bf16.msra.mxu0 %v4798
    %5695 = vmatpush.bf16.msra.mxu0 %v4792
    %5696 = vmatpush.bf16.msra.mxu0 %v4786
    %5697 = vmatpush.bf16.msra.mxu0 %v4780
    %5698 = vmatpush.bf16.msra.mxu0 %v4774
    %5699 = vmatpush.bf16.msra.mxu0 %v4768
    %5700 = vmatpush.bf16.msra.mxu0 %v4762
    %5701 = vmatmul.bf16.gmra.mxu0 %v3356
    %v5702 = vpop.f32.mrf.mxu0
    %v5703 = vadd.f32 %v5689, %v5702
    %v5704 = vpop.f32.mrf.mxu0
    %v5705 = vadd.f32 %v5691, %v5704
    %5706 = vdwg.mxu0
    %5707 = vmatpush.bf16.msra.mxu0 %v4852
    %5708 = vmatpush.bf16.msra.mxu0 %v4846
    %5709 = vmatpush.bf16.msra.mxu0 %v4840
    %5710 = vmatpush.bf16.msra.mxu0 %v4834
    %5711 = vmatpush.bf16.msra.mxu0 %v4828
    %5712 = vmatpush.bf16.msra.mxu0 %v4822
    %5713 = vmatpush.bf16.msra.mxu0 %v4816
    %5714 = vmatpush.bf16.msra.mxu0 %v4810
    %5715 = vmatmul.bf16.gmra.mxu0 %v3357
    %v5716 = vpop.f32.mrf.mxu0
    %v5717 = vadd.f32 %v5703, %v5716
    %v5718 = vpop.f32.mrf.mxu0
    %v5719 = vadd.f32 %v5705, %v5718
    %5720 = vdwg.mxu0
    %5721 = vmatpush.bf16.msra.mxu0 %v4900
    %5722 = vmatpush.bf16.msra.mxu0 %v4894
    %5723 = vmatpush.bf16.msra.mxu0 %v4888
    %5724 = vmatpush.bf16.msra.mxu0 %v4882
    %5725 = vmatpush.bf16.msra.mxu0 %v4876
    %5726 = vmatpush.bf16.msra.mxu0 %v4870
    %5727 = vmatpush.bf16.msra.mxu0 %v4864
    %5728 = vmatpush.bf16.msra.mxu0 %v4858
    %5729 = vmatmul.bf16.gmra.mxu0 %v3358
    %v5730 = vpop.f32.mrf.mxu0
    %v5731 = vadd.f32 %v5717, %v5730
    %v5732 = vpop.f32.mrf.mxu0
    %v5733 = vadd.f32 %v5719, %v5732
    %5734 = vdwg.mxu0
    %5735 = vmatpush.bf16.msra.mxu0 %v4565
    %5736 = vmatpush.bf16.msra.mxu0 %v4559
    %5737 = vmatpush.bf16.msra.mxu0 %v4553
    %5738 = vmatpush.bf16.msra.mxu0 %v4547
    %5739 = vmatpush.bf16.msra.mxu0 %v4541
    %5740 = vmatpush.bf16.msra.mxu0 %v4535
    %5741 = vmatpush.bf16.msra.mxu0 %v4529
    %5742 = vmatpush.bf16.msra.mxu0 %v4523
    %5743 = vmatmul.bf16.gmra.mxu0 %v3351
    %v5744 = vpop.f32.mrf.mxu0
    %v5745 = vadd.f32 %v3319, %v5744
    %v5746 = vpop.f32.mrf.mxu0
    %v5747 = vadd.f32 %v3319, %v5746
    %5748 = vdwg.mxu0
    %5749 = vmatpush.bf16.msra.mxu0 %v4613
    %5750 = vmatpush.bf16.msra.mxu0 %v4607
    %5751 = vmatpush.bf16.msra.mxu0 %v4601
    %5752 = vmatpush.bf16.msra.mxu0 %v4595
    %5753 = vmatpush.bf16.msra.mxu0 %v4589
    %5754 = vmatpush.bf16.msra.mxu0 %v4583
    %5755 = vmatpush.bf16.msra.mxu0 %v4577
    %5756 = vmatpush.bf16.msra.mxu0 %v4571
    %5757 = vmatmul.bf16.gmra.mxu0 %v3352
    %v5758 = vpop.f32.mrf.mxu0
    %v5759 = vadd.f32 %v5745, %v5758
    %v5760 = vpop.f32.mrf.mxu0
    %v5761 = vadd.f32 %v5747, %v5760
    %5762 = vdwg.mxu0
    %5763 = vmatpush.bf16.msra.mxu0 %v4661
    %5764 = vmatpush.bf16.msra.mxu0 %v4655
    %5765 = vmatpush.bf16.msra.mxu0 %v4649
    %5766 = vmatpush.bf16.msra.mxu0 %v4643
    %5767 = vmatpush.bf16.msra.mxu0 %v4637
    %5768 = vmatpush.bf16.msra.mxu0 %v4631
    %5769 = vmatpush.bf16.msra.mxu0 %v4625
    %5770 = vmatpush.bf16.msra.mxu0 %v4619
    %5771 = vmatmul.bf16.gmra.mxu0 %v3353
    %v5772 = vpop.f32.mrf.mxu0
    %v5773 = vadd.f32 %v5759, %v5772
    %v5774 = vpop.f32.mrf.mxu0
    %v5775 = vadd.f32 %v5761, %v5774
    %5776 = vdwg.mxu0
    %5777 = vmatpush.bf16.msra.mxu0 %v4709
    %5778 = vmatpush.bf16.msra.mxu0 %v4703
    %5779 = vmatpush.bf16.msra.mxu0 %v4697
    %5780 = vmatpush.bf16.msra.mxu0 %v4691
    %5781 = vmatpush.bf16.msra.mxu0 %v4685
    %5782 = vmatpush.bf16.msra.mxu0 %v4679
    %5783 = vmatpush.bf16.msra.mxu0 %v4673
    %5784 = vmatpush.bf16.msra.mxu0 %v4667
    %5785 = vmatmul.bf16.gmra.mxu0 %v3354
    %v5786 = vpop.f32.mrf.mxu0
    %v5787 = vadd.f32 %v5773, %v5786
    %v5788 = vpop.f32.mrf.mxu0
    %v5789 = vadd.f32 %v5775, %v5788
    %5790 = vdwg.mxu0
    %5791 = vmatpush.bf16.msra.mxu0 %v4757
    %5792 = vmatpush.bf16.msra.mxu0 %v4751
    %5793 = vmatpush.bf16.msra.mxu0 %v4745
    %5794 = vmatpush.bf16.msra.mxu0 %v4739
    %5795 = vmatpush.bf16.msra.mxu0 %v4733
    %5796 = vmatpush.bf16.msra.mxu0 %v4727
    %5797 = vmatpush.bf16.msra.mxu0 %v4721
    %5798 = vmatpush.bf16.msra.mxu0 %v4715
    %5799 = vmatmul.bf16.gmra.mxu0 %v3355
    %v5800 = vpop.f32.mrf.mxu0
    %v5801 = vadd.f32 %v5787, %v5800
    %v5802 = vpop.f32.mrf.mxu0
    %v5803 = vadd.f32 %v5789, %v5802
    %5804 = vdwg.mxu0
    %5805 = vmatpush.bf16.msra.mxu0 %v4805
    %5806 = vmatpush.bf16.msra.mxu0 %v4799
    %5807 = vmatpush.bf16.msra.mxu0 %v4793
    %5808 = vmatpush.bf16.msra.mxu0 %v4787
    %5809 = vmatpush.bf16.msra.mxu0 %v4781
    %5810 = vmatpush.bf16.msra.mxu0 %v4775
    %5811 = vmatpush.bf16.msra.mxu0 %v4769
    %5812 = vmatpush.bf16.msra.mxu0 %v4763
    %5813 = vmatmul.bf16.gmra.mxu0 %v3356
    %v5814 = vpop.f32.mrf.mxu0
    %v5815 = vadd.f32 %v5801, %v5814
    %v5816 = vpop.f32.mrf.mxu0
    %v5817 = vadd.f32 %v5803, %v5816
    %5818 = vdwg.mxu0
    %5819 = vmatpush.bf16.msra.mxu0 %v4853
    %5820 = vmatpush.bf16.msra.mxu0 %v4847
    %5821 = vmatpush.bf16.msra.mxu0 %v4841
    %5822 = vmatpush.bf16.msra.mxu0 %v4835
    %5823 = vmatpush.bf16.msra.mxu0 %v4829
    %5824 = vmatpush.bf16.msra.mxu0 %v4823
    %5825 = vmatpush.bf16.msra.mxu0 %v4817
    %5826 = vmatpush.bf16.msra.mxu0 %v4811
    %5827 = vmatmul.bf16.gmra.mxu0 %v3357
    %v5828 = vpop.f32.mrf.mxu0
    %v5829 = vadd.f32 %v5815, %v5828
    %v5830 = vpop.f32.mrf.mxu0
    %v5831 = vadd.f32 %v5817, %v5830
    %5832 = vdwg.mxu0
    %5833 = vmatpush.bf16.msra.mxu0 %v4901
    %5834 = vmatpush.bf16.msra.mxu0 %v4895
    %5835 = vmatpush.bf16.msra.mxu0 %v4889
    %5836 = vmatpush.bf16.msra.mxu0 %v4883
    %5837 = vmatpush.bf16.msra.mxu0 %v4877
    %5838 = vmatpush.bf16.msra.mxu0 %v4871
    %5839 = vmatpush.bf16.msra.mxu0 %v4865
    %5840 = vmatpush.bf16.msra.mxu0 %v4859
    %5841 = vmatmul.bf16.gmra.mxu0 %v3358
    %v5842 = vpop.f32.mrf.mxu0
    %v5843 = vadd.f32 %v5829, %v5842
    %v5844 = vpop.f32.mrf.mxu0
    %v5845 = vadd.f32 %v5831, %v5844
    %5846 = vdwg.mxu0
    %5847 = vmatpush.bf16.msra.mxu0 %v4566
    %5848 = vmatpush.bf16.msra.mxu0 %v4560
    %5849 = vmatpush.bf16.msra.mxu0 %v4554
    %5850 = vmatpush.bf16.msra.mxu0 %v4548
    %5851 = vmatpush.bf16.msra.mxu0 %v4542
    %5852 = vmatpush.bf16.msra.mxu0 %v4536
    %5853 = vmatpush.bf16.msra.mxu0 %v4530
    %5854 = vmatpush.bf16.msra.mxu0 %v4524
    %5855 = vmatmul.bf16.gmra.mxu0 %v3351
    %v5856 = vpop.f32.mrf.mxu0
    %v5857 = vadd.f32 %v3320, %v5856
    %v5858 = vpop.f32.mrf.mxu0
    %v5859 = vadd.f32 %v3320, %v5858
    %5860 = vdwg.mxu0
    %5861 = vmatpush.bf16.msra.mxu0 %v4614
    %5862 = vmatpush.bf16.msra.mxu0 %v4608
    %5863 = vmatpush.bf16.msra.mxu0 %v4602
    %5864 = vmatpush.bf16.msra.mxu0 %v4596
    %5865 = vmatpush.bf16.msra.mxu0 %v4590
    %5866 = vmatpush.bf16.msra.mxu0 %v4584
    %5867 = vmatpush.bf16.msra.mxu0 %v4578
    %5868 = vmatpush.bf16.msra.mxu0 %v4572
    %5869 = vmatmul.bf16.gmra.mxu0 %v3352
    %v5870 = vpop.f32.mrf.mxu0
    %v5871 = vadd.f32 %v5857, %v5870
    %v5872 = vpop.f32.mrf.mxu0
    %v5873 = vadd.f32 %v5859, %v5872
    %5874 = vdwg.mxu0
    %5875 = vmatpush.bf16.msra.mxu0 %v4662
    %5876 = vmatpush.bf16.msra.mxu0 %v4656
    %5877 = vmatpush.bf16.msra.mxu0 %v4650
    %5878 = vmatpush.bf16.msra.mxu0 %v4644
    %5879 = vmatpush.bf16.msra.mxu0 %v4638
    %5880 = vmatpush.bf16.msra.mxu0 %v4632
    %5881 = vmatpush.bf16.msra.mxu0 %v4626
    %5882 = vmatpush.bf16.msra.mxu0 %v4620
    %5883 = vmatmul.bf16.gmra.mxu0 %v3353
    %v5884 = vpop.f32.mrf.mxu0
    %v5885 = vadd.f32 %v5871, %v5884
    %v5886 = vpop.f32.mrf.mxu0
    %v5887 = vadd.f32 %v5873, %v5886
    %5888 = vdwg.mxu0
    %5889 = vmatpush.bf16.msra.mxu0 %v4710
    %5890 = vmatpush.bf16.msra.mxu0 %v4704
    %5891 = vmatpush.bf16.msra.mxu0 %v4698
    %5892 = vmatpush.bf16.msra.mxu0 %v4692
    %5893 = vmatpush.bf16.msra.mxu0 %v4686
    %5894 = vmatpush.bf16.msra.mxu0 %v4680
    %5895 = vmatpush.bf16.msra.mxu0 %v4674
    %5896 = vmatpush.bf16.msra.mxu0 %v4668
    %5897 = vmatmul.bf16.gmra.mxu0 %v3354
    %v5898 = vpop.f32.mrf.mxu0
    %v5899 = vadd.f32 %v5885, %v5898
    %v5900 = vpop.f32.mrf.mxu0
    %v5901 = vadd.f32 %v5887, %v5900
    %5902 = vdwg.mxu0
    %5903 = vmatpush.bf16.msra.mxu0 %v4758
    %5904 = vmatpush.bf16.msra.mxu0 %v4752
    %5905 = vmatpush.bf16.msra.mxu0 %v4746
    %5906 = vmatpush.bf16.msra.mxu0 %v4740
    %5907 = vmatpush.bf16.msra.mxu0 %v4734
    %5908 = vmatpush.bf16.msra.mxu0 %v4728
    %5909 = vmatpush.bf16.msra.mxu0 %v4722
    %5910 = vmatpush.bf16.msra.mxu0 %v4716
    %5911 = vmatmul.bf16.gmra.mxu0 %v3355
    %v5912 = vpop.f32.mrf.mxu0
    %v5913 = vadd.f32 %v5899, %v5912
    %v5914 = vpop.f32.mrf.mxu0
    %v5915 = vadd.f32 %v5901, %v5914
    %5916 = vdwg.mxu0
    %5917 = vmatpush.bf16.msra.mxu0 %v4806
    %5918 = vmatpush.bf16.msra.mxu0 %v4800
    %5919 = vmatpush.bf16.msra.mxu0 %v4794
    %5920 = vmatpush.bf16.msra.mxu0 %v4788
    %5921 = vmatpush.bf16.msra.mxu0 %v4782
    %5922 = vmatpush.bf16.msra.mxu0 %v4776
    %5923 = vmatpush.bf16.msra.mxu0 %v4770
    %5924 = vmatpush.bf16.msra.mxu0 %v4764
    %5925 = vmatmul.bf16.gmra.mxu0 %v3356
    %v5926 = vpop.f32.mrf.mxu0
    %v5927 = vadd.f32 %v5913, %v5926
    %v5928 = vpop.f32.mrf.mxu0
    %v5929 = vadd.f32 %v5915, %v5928
    %5930 = vdwg.mxu0
    %5931 = vmatpush.bf16.msra.mxu0 %v4854
    %5932 = vmatpush.bf16.msra.mxu0 %v4848
    %5933 = vmatpush.bf16.msra.mxu0 %v4842
    %5934 = vmatpush.bf16.msra.mxu0 %v4836
    %5935 = vmatpush.bf16.msra.mxu0 %v4830
    %5936 = vmatpush.bf16.msra.mxu0 %v4824
    %5937 = vmatpush.bf16.msra.mxu0 %v4818
    %5938 = vmatpush.bf16.msra.mxu0 %v4812
    %5939 = vmatmul.bf16.gmra.mxu0 %v3357
    %v5940 = vpop.f32.mrf.mxu0
    %v5941 = vadd.f32 %v5927, %v5940
    %v5942 = vpop.f32.mrf.mxu0
    %v5943 = vadd.f32 %v5929, %v5942
    %5944 = vdwg.mxu0
    %5945 = vmatpush.bf16.msra.mxu0 %v4902
    %5946 = vmatpush.bf16.msra.mxu0 %v4896
    %5947 = vmatpush.bf16.msra.mxu0 %v4890
    %5948 = vmatpush.bf16.msra.mxu0 %v4884
    %5949 = vmatpush.bf16.msra.mxu0 %v4878
    %5950 = vmatpush.bf16.msra.mxu0 %v4872
    %5951 = vmatpush.bf16.msra.mxu0 %v4866
    %5952 = vmatpush.bf16.msra.mxu0 %v4860
    %5953 = vmatmul.bf16.gmra.mxu0 %v3358
    %v5954 = vpop.f32.mrf.mxu0
    %v5955 = vadd.f32 %v5941, %v5954
    %v5956 = vpop.f32.mrf.mxu0
    %v5957 = vadd.f32 %v5943, %v5956
    %5958 = vdwg.mxu0
    %v5959 = vtanh.pop %v5395
    %v5960 = vtanh.pop %v5507
    %v5961 = vtanh.pop %v5619
    %v5962 = vtanh.pop %v5731
    %v5963 = vtanh.pop %v5843
    %v5964 = vtanh.pop %v5955
    %v5965 = vtanh.pop %v5397
    %v5966 = vtanh.pop %v5509
    %v5967 = vtanh.pop %v5621
    %v5968 = vtanh.pop %v5733
    %v5969 = vtanh.pop %v5845
    %v5970 = vtanh.pop %v5957
    %v5971 = vpack.c.bf16 %v5960, %v5959
    %v5972 = vpack.c.bf16 %v5962, %v5961
    %v5973 = vpack.c.bf16 %v5964, %v5963
    %v5974 = vpack.c.bf16 %v5966, %v5965
    %v5975 = vpack.c.bf16 %v5968, %v5967
    %v5976 = vpack.c.bf16 %v5970, %v5969
    %5977 = vst [vmem:[#allocation18] sm:$0xff] %v5971
    %5978 = vst [vmem:[#allocation18 + $0x8] sm:$0xff] %v5972
    %5979 = vst [vmem:[#allocation18 + $0x10] sm:$0xff] %v5973
    %5980 = vst [vmem:[#allocation18 + $0x18] sm:$0xff] %v5974
    %5981 = vst [vmem:[#allocation18 + $0x20] sm:$0xff] %v5975
    %5982 = vst [vmem:[#allocation18 + $0x28] sm:$0xff] %v5976
    // Predicated region
    $region78: #{tpu_custom_call.1} parent=1 // pred_check
      _
    $region79: #{tpu_custom_call.1} parent=1 // pred_check_branch
      %5984 = sbr.rel (0) target = $region81
    $region80: #{tpu_custom_call.1} parent=1 // pred_region
      %5986 = vsyncadd [#allocation5], 0
      %s5987 = sshll.u32 [#allocation18], 4
      %s5988 = int_to_ptr.vmem [resolvable:$true] %s5987
      %s5989 = sshll.u32 %s9, 4
      %s5990 = int_to_ptr.hbm [resolvable:$true] %s5989
      %5995 = dma.vmem_to_hbm [thread:$0]  %s5988, 768, %s5990, [#allocation5], 384, 384, 24
    $region81: #{tpu_custom_call.1} parent=1 // pred_fallthru
      _
    // Predicated region
    $region82: #{tpu_custom_call.1} parent=1 // pred_check
      _
    $region83: #{tpu_custom_call.1} parent=1 // pred_check_branch
      %5997 = sbr.rel (0) target = $region85
    $region84: #{tpu_custom_call.1} parent=1 // pred_region
      %5999 = dma.done [#allocation5], 768
    $region85: #{tpu_custom_call.1} parent=1 // pred_fallthru
      _
    %6000 = vsyncpa [#allocation4], 1
    %6001 = vsyncpa [#allocation7], 1
    %6002 = vsyncpa [#allocation10], 1
    %6003 = vsyncpa [#allocation13], 1
    %6004 = vsyncpa [#allocation16], 1
    %6005 = vsyncpa [#allocation5], 1

</llo_original>
